<compile_context>
chip_gen: v6e
topology: v6e:2x2x1
jax: 0.10.0
libtpu: 0.0.40
codegen_flags: <defaults>
</compile_context>

<pallas_src>
import functools
import math

import jax
import jax.numpy as jnp
from jax.experimental import pallas as pl
from jax.experimental.pallas import tpu as pltpu


# ---------------------------------------------------------------------------
# Small helpers
# ---------------------------------------------------------------------------

def _pick_tile(dim, target, align):
    """Largest `align`-multiple tile <= target that evenly divides dim, else dim (full)."""
    if dim <= target:
        return dim
    t = (min(target, dim) // align) * align
    while t >= align:
        if dim % t == 0:
            return t
        t -= align
    return dim


def _apply_act(y, act):
    if act == "relu":
        return jnp.maximum(y, 0.0)
    if act == "tanh":
        return jnp.tanh(y)
    if act == "gelu":
        return jax.nn.gelu(y, approximate=True)
    if act == "relu_tanh":          # Linear -> ReLU -> Dropout(id) -> Tanh
        return jnp.tanh(jnp.maximum(y, 0.0))
    return y


def _bf16_dot(a, b):
    """MXU matmul with bf16 operands and f32 accumulation."""
    return jnp.dot(a.astype(jnp.bfloat16), b.astype(jnp.bfloat16),
                   preferred_element_type=jnp.float32)


# ---------------------------------------------------------------------------
# Tiled linear (optionally with activation epilogue); bf16 in / bf16 out
# ---------------------------------------------------------------------------

def _linear_kernel(x_ref, w_ref, b_ref, o_ref, acc_ref, *, act, n_k):
    @pl.when(pl.program_id(2) == 0)
    def _init():
        acc_ref[...] = jnp.zeros_like(acc_ref)

    acc_ref[...] += _bf16_dot(x_ref[...], w_ref[...])

    @pl.when(pl.program_id(2) == n_k - 1)
    def _finalize():
        y = acc_ref[...] + b_ref[...]           # f32 epilogue
        o_ref[...] = _apply_act(y, act).astype(o_ref.dtype)


def pallas_linear(x, w, b, act="none", tm=256, tn=512, tk=512):
    """o = act(x @ w + b); x:[M,K] bf16, w:[K,N] bf16, b:[N] f32 -> bf16."""
    M, K = x.shape
    N = w.shape[1]
    tm = _pick_tile(M, tm, 8)
    tn = _pick_tile(N, tn, 128)
    tk = _pick_tile(K, tk, 128)
    n_k = K // tk
    return pl.pallas_call(
        functools.partial(_linear_kernel, act=act, n_k=n_k),
        out_shape=jax.ShapeDtypeStruct((M, N), jnp.bfloat16),
        grid=(M // tm, N // tn, n_k),
        in_specs=[
            pl.BlockSpec((tm, tk), lambda i, j, k: (i, k)),
            pl.BlockSpec((tk, tn), lambda i, j, k: (k, j)),
            pl.BlockSpec((1, tn), lambda i, j, k: (0, j)),
        ],
        out_specs=pl.BlockSpec((tm, tn), lambda i, j, k: (i, j)),
        scratch_shapes=[pltpu.VMEM((tm, tn), jnp.float32)],
        compiler_params=pltpu.CompilerParams(
            dimension_semantics=("parallel", "parallel", "arbitrary")),
    )(x, w, b.reshape(1, N))


# ---------------------------------------------------------------------------
# Fused: matmul + bias + residual + LayerNorm (f32 math, bf16 in/out)
# ---------------------------------------------------------------------------

def _linear_res_ln_kernel(x_ref, w_ref, b_ref, r_ref, g_ref, bb_ref,
                          o_ref, acc_ref, *, eps, n_k):
    @pl.when(pl.program_id(1) == 0)
    def _init():
        acc_ref[...] = jnp.zeros_like(acc_ref)

    acc_ref[...] += _bf16_dot(x_ref[...], w_ref[...])

    @pl.when(pl.program_id(1) == n_k - 1)
    def _finalize():
        y = acc_ref[...] + b_ref[...] + r_ref[...].astype(jnp.float32)
        mu = jnp.mean(y, axis=-1, keepdims=True)
        d = y - mu
        var = jnp.mean(d * d, axis=-1, keepdims=True)
        o_ref[...] = (d * jax.lax.rsqrt(var + eps) * g_ref[...]
                      + bb_ref[...]).astype(o_ref.dtype)


def pallas_linear_res_ln(x, w, b, res, gamma, beta, eps=1e-12, tm=256, tk=512):
    """o = LayerNorm(x @ w + b + res); LN over the full output row (N untiled)."""
    M, K = x.shape
    N = w.shape[1]
    tm = _pick_tile(M, tm, 8)
    tk = _pick_tile(K, tk, 128)
    n_k = K // tk
    return pl.pallas_call(
        functools.partial(_linear_res_ln_kernel, eps=eps, n_k=n_k),
        out_shape=jax.ShapeDtypeStruct((M, N), jnp.bfloat16),
        grid=(M // tm, n_k),
        in_specs=[
            pl.BlockSpec((tm, tk), lambda i, k: (i, k)),
            pl.BlockSpec((tk, N), lambda i, k: (k, 0)),
            pl.BlockSpec((1, N), lambda i, k: (0, 0)),
            pl.BlockSpec((tm, N), lambda i, k: (i, 0)),
            pl.BlockSpec((1, N), lambda i, k: (0, 0)),
            pl.BlockSpec((1, N), lambda i, k: (0, 0)),
        ],
        out_specs=pl.BlockSpec((tm, N), lambda i, k: (i, 0)),
        scratch_shapes=[pltpu.VMEM((tm, N), jnp.float32)],
        compiler_params=pltpu.CompilerParams(
            dimension_semantics=("parallel", "arbitrary")),
    )(x, w, b.reshape(1, N), res, gamma.reshape(1, N), beta.reshape(1, N))


# ---------------------------------------------------------------------------
# LayerNorm (no residual) — embedding LN; f32 stats, bf16 out
# ---------------------------------------------------------------------------

def _ln_kernel(x_ref, g_ref, b_ref, o_ref, *, eps):
    y = x_ref[...].astype(jnp.float32)
    mu = jnp.mean(y, axis=-1, keepdims=True)
    d = y - mu
    var = jnp.mean(d * d, axis=-1, keepdims=True)
    o_ref[...] = (d * jax.lax.rsqrt(var + eps) * g_ref[...]
                  + b_ref[...]).astype(o_ref.dtype)


def pallas_ln(x, gamma, beta, eps=1e-12, tm=256):
    M, H = x.shape
    tm = _pick_tile(M, tm, 8)
    return pl.pallas_call(
        functools.partial(_ln_kernel, eps=eps),
        out_shape=jax.ShapeDtypeStruct((M, H), jnp.bfloat16),
        grid=(M // tm,),
        in_specs=[
            pl.BlockSpec((tm, H), lambda i: (i, 0)),
            pl.BlockSpec((1, H), lambda i: (0, 0)),
            pl.BlockSpec((1, H), lambda i: (0, 0)),
        ],
        out_specs=pl.BlockSpec((tm, H), lambda i: (i, 0)),
        compiler_params=pltpu.CompilerParams(dimension_semantics=("parallel",)),
    )(x, gamma.reshape(1, H), beta.reshape(1, H))


# ---------------------------------------------------------------------------
# Multi-head self attention on the fused [B*S, 3H] bf16 QKV activations.
# Heads split inside the kernel; heads processed in 128-lane groups with a
# single lane-dense store per group; optional mask; optional mean-pool output.
# ---------------------------------------------------------------------------

def _mha_kernel(*refs, n_heads, d_head, scale, hpg, has_mask, pool, inv_s):
    if has_mask:
        qkv_ref, m_ref, o_ref = refs
        mask = m_ref[...].astype(jnp.float32)          # [1, S] additive mask
    else:
        qkv_ref, o_ref = refs
        mask = None

    qkv = qkv_ref[...]                                 # [S, 3H] bf16
    H = n_heads * d_head
    gw = hpg * d_head                                  # group lane width (<=128)
    # Fold 1/sqrt(d_head) into Q once for all heads ([S,H] VPU mul, not [S,S]).
    q_all = qkv[:, :H] * scale

    for g in range(n_heads // hpg):                    # static unroll over groups
        outs = []
        for hh in range(hpg):
            h = g * hpg + hh
            q = q_all[:, h * d_head:(h + 1) * d_head]
            k = qkv[:, H + h * d_head:H + (h + 1) * d_head]
            v = qkv[:, 2 * H + h * d_head:2 * H + (h + 1) * d_head]
            s = jax.lax.dot_general(
                q, k, (((1,), (1,)), ((), ())),
                preferred_element_type=jnp.float32)                    # [S, S] f32
            if mask is not None:
                s = s + mask
            s = s - jnp.max(s, axis=-1, keepdims=True)
            p = jnp.exp(s)
            p = p * pl.reciprocal(jnp.sum(p, axis=-1, keepdims=True), approx=True)
            outs.append(jnp.dot(p.astype(jnp.bfloat16), v,
                                preferred_element_type=jnp.float32))   # [S, dH] f32
        grp = outs[0] if hpg == 1 else jnp.concatenate(outs, axis=-1)  # [S, gw]
        if pool:
            # mean over tokens, stored lane-dense per group -> [1, gw]
            o_ref[:, g * gw:(g + 1) * gw] = (
                jnp.sum(grp, axis=0, keepdims=True) * inv_s).astype(o_ref.dtype)
        else:
            o_ref[:, g * gw:(g + 1) * gw] = grp.astype(o_ref.dtype)


def pallas_mha(qkv, n_heads, seq_len, mask_add=None, pool=False):
    """qkv: [B*S, 3H] bf16 (Q|K|V, head-major); mask_add: [B,1,S] f32 or None.

    pool=False -> context [B*S, H] bf16; pool=True -> mean-pooled [B, H] bf16.
    """
    BS, threeH = qkv.shape
    H = threeH // 3
    d_head = H // n_heads
    B = BS // seq_len
    scale = 1.0 / math.sqrt(d_head)
    hpg = min(n_heads, max(1, 128 // max(d_head, 1)))  # heads per 128-lane group
    while n_heads % hpg:
        hpg -= 1

    kern = functools.partial(
        _mha_kernel, n_heads=n_heads, d_head=d_head, scale=scale, hpg=hpg,
        has_mask=mask_add is not None, pool=pool, inv_s=1.0 / seq_len)

    in_specs = [pl.BlockSpec((seq_len, threeH), lambda b: (b, 0))]
    args = [qkv]
    if mask_add is not None:
        in_specs.append(pl.BlockSpec((None, 1, seq_len), lambda b: (b, 0, 0)))
        args.append(mask_add)

    if pool:
        out_shape = jax.ShapeDtypeStruct((B, 1, H), jnp.bfloat16)
        out_spec = pl.BlockSpec((None, 1, H), lambda b: (b, 0, 0))
    else:
        out_shape = jax.ShapeDtypeStruct((BS, H), jnp.bfloat16)
        out_spec = pl.BlockSpec((seq_len, H), lambda b: (b, 0))

    out = pl.pallas_call(
        kern, out_shape=out_shape, grid=(B,),
        in_specs=in_specs, out_specs=out_spec,
        compiler_params=pltpu.CompilerParams(dimension_semantics=("parallel",)),
    )(*args)
    return out.reshape(B, H) if pool else out


# ---------------------------------------------------------------------------
# Sentence-pair difference (SEP-token split), NaN-safe
# ---------------------------------------------------------------------------

def _sent_diff_kernel(ids_ref, h_ref, o_ref, *, sep_id, seq_len):
    ids = ids_ref[...]                                    # [1, S] int32
    h = h_ref[...].astype(jnp.float32)                    # [S, H]
    pos = jax.lax.broadcasted_iota(jnp.int32, (1, seq_len), 1)
    is_sep = (ids == sep_id)
    n_sep = jnp.sum(is_sep.astype(jnp.int32))
    sep1 = jnp.min(jnp.where(is_sep, pos, seq_len))
    sep2 = jnp.min(jnp.where(is_sep & (pos > sep1), pos, seq_len))
    mask1 = ((pos >= 1) & (pos < sep1)).astype(jnp.float32)
    mask2 = ((pos >= sep1 + 1) & (pos < sep2)).astype(jnp.float32)
    c1 = jnp.maximum(jnp.sum(mask1), 1.0)                 # clamp: no 0/0 NaN
    c2 = jnp.maximum(jnp.sum(mask2), 1.0)
    v1 = jnp.dot(mask1, h, preferred_element_type=jnp.float32) / c1   # [1, H]
    v2 = jnp.dot(mask2, h, preferred_element_type=jnp.float32) / c2
    diff = jnp.abs(v1 - v2)
    o_ref[...] = jnp.where(n_sep >= 2, diff, jnp.zeros_like(diff)).astype(o_ref.dtype)


def pallas_sentence_diff(input_ids, h2d, seq_len, sep_id=102):
    BS, H = h2d.shape
    B = BS // seq_len
    ids3 = input_ids.reshape(B, 1, seq_len).astype(jnp.int32)
    out = pl.pallas_call(
        functools.partial(_sent_diff_kernel, sep_id=sep_id, seq_len=seq_len),
        out_shape=jax.ShapeDtypeStruct((B, 1, H), jnp.bfloat16),
        grid=(B,),
        in_specs=[
            pl.BlockSpec((None, 1, seq_len), lambda b: (b, 0, 0)),
            pl.BlockSpec((seq_len, H), lambda b: (b, 0)),
        ],
        out_specs=pl.BlockSpec((None, 1, H), lambda b: (b, 0, 0)),
        compiler_params=pltpu.CompilerParams(dimension_semantics=("parallel",)),
    )(ids3, h2d)
    return out.reshape(B, H)


# ---------------------------------------------------------------------------
# Fused classifier head: fuse(4H->H, relu, tanh) -> 128 -> 64(pad128) -> C(pad128)
# (all weight padding is done once in init_params; output sliced outside)
# ---------------------------------------------------------------------------

def _classifier_kernel(x_ref, fw_ref, fb_ref, w1_ref, b1_ref, w2_ref, b2_ref,
                       w3_ref, b3_ref, o_ref):
    h = jnp.tanh(jnp.maximum(_bf16_dot(x_ref[...], fw_ref[...]) + fb_ref[...], 0.0))
    h = jnp.maximum(_bf16_dot(h, w1_ref[...]) + b1_ref[...], 0.0)
    h = jnp.maximum(_bf16_dot(h, w2_ref[...]) + b2_ref[...], 0.0)   # padded lanes stay 0
    o_ref[...] = (_bf16_dot(h, w3_ref[...]) + b3_ref[...]).astype(o_ref.dtype)


def pallas_classifier_head(x, fw, fb, w1, b1, w2p, b2p, w3p, b3p, num_classes):
    B, F = x.shape
    Hh = fw.shape[1]
    N1 = w1.shape[1]
    N2 = w2p.shape[1]
    Np = w3p.shape[1]
    out = pl.pallas_call(
        _classifier_kernel,
        out_shape=jax.ShapeDtypeStruct((B, Np), jnp.float32),
        grid=(1,),
        in_specs=[
            pl.BlockSpec((B, F), lambda i: (0, 0)),
            pl.BlockSpec(fw.shape, lambda i: (0, 0)),
            pl.BlockSpec((1, Hh), lambda i: (0, 0)),
            pl.BlockSpec(w1.shape, lambda i: (0, 0)),
            pl.BlockSpec((1, N1), lambda i: (0, 0)),
            pl.BlockSpec(w2p.shape, lambda i: (0, 0)),
            pl.BlockSpec((1, N2), lambda i: (0, 0)),
            pl.BlockSpec(w3p.shape, lambda i: (0, 0)),
            pl.BlockSpec((1, Np), lambda i: (0, 0)),
        ],
        out_specs=pl.BlockSpec((B, Np), lambda i: (0, 0)),
    )(x, fw, fb.reshape(1, Hh), w1, b1.reshape(1, N1), w2p, b2p.reshape(1, N2),
      w3p, b3p.reshape(1, Np))
    return out[:, :num_classes]


# ---------------------------------------------------------------------------
# Parameters (deterministic synthetic init, QKV pre-fused, bf16 weights)
# ---------------------------------------------------------------------------

def init_params(key, vocab, seq_len, H, n_layers, inter, num_classes):
    keys = iter(jax.random.split(key, 64))

    def w(shape):  # bf16 weights: halves HBM<->VMEM DMA, direct MXU operands
        return (0.02 * jax.random.normal(next(keys), shape, jnp.float32)
                ).astype(jnp.bfloat16)

    def zf(shape):
        return jnp.zeros(shape, jnp.float32)

    def onesf(shape):
        return jnp.ones(shape, jnp.float32)

    def mha_params():
        return dict(wqkv=w((H, 3 * H)), bqkv=zf((3 * H,)), wo=w((H, H)), bo=zf((H,)))

    layers = []
    for _ in range(n_layers):
        layers.append(dict(
            wqkv=w((H, 3 * H)), bqkv=zf((3 * H,)), wo=w((H, H)), bo=zf((H,)),
            ln1_g=onesf((H,)), ln1_b=zf((H,)),
            w1=w((H, inter)), b1=zf((inter,)),
            w2=w((inter, H)), b2=zf((H,)),
            ln2_g=onesf((H,)), ln2_b=zf((H,)),
        ))

    # Classifier tail: pad the narrow 64-wide intermediate and the C-wide output
    # to 128 lanes ONCE here (lane-dense chain; no per-forward re-padding).
    C = num_classes
    Cp = ((C + 127) // 128) * 128
    cls_w2 = w((128, 64))
    cls_w3 = w((64, C))
    cls_w2p = jnp.zeros((128, 128), jnp.bfloat16).at[:, :64].set(cls_w2)
    cls_b2p = jnp.zeros((128,), jnp.float32)
    cls_w3p = jnp.zeros((128, Cp), jnp.bfloat16).at[:64, :C].set(cls_w3)
    cls_b3p = jnp.zeros((Cp,), jnp.float32)

    return dict(
        word_emb=w((vocab, H)), pos_emb=w((seq_len, H)), type_emb=w((2, H)),
        emb_ln_g=onesf((H,)), emb_ln_b=zf((H,)),
        layers=layers,
        pool_w=w((H, H)), pool_b=zf((H,)),
        action_attn=mha_params(),
        negation_attn=mha_params(),
        fuse_w=w((4 * H, H)), fuse_b=zf((H,)),
        cls_w1=w((H, 128)), cls_b1=zf((128,)),
        cls_w2p=cls_w2p, cls_b2p=cls_b2p,
        cls_w3p=cls_w3p, cls_b3p=cls_b3p,
    )


# ---------------------------------------------------------------------------
# Forward pass
# ---------------------------------------------------------------------------

def bert_classifier_forward(p, input_ids, attention_mask, token_type_ids,
                            *, bert_heads=4, clf_heads=8, num_classes=3):
    B, S = input_ids.shape
    H = p["word_emb"].shape[1]

    # ---- synthetic BERT embeddings (gathers are XLA glue) + LN kernel ----
    emb = (p["word_emb"][input_ids]
           + p["pos_emb"][None, :S, :]
           + p["type_emb"][token_type_ids]).reshape(B * S, H)
    h = pallas_ln(emb, p["emb_ln_g"], p["emb_ln_b"])                 # bf16 [B*S, H]

    mask_add = ((1.0 - attention_mask.astype(jnp.float32)) * -1e9).reshape(B, 1, S)

    # ---- transformer layers: fused QKV -> MHA -> (proj+res+LN) -> FFN -> (proj+res+LN)
    for layer in p["layers"]:
        qkv = pallas_linear(h, layer["wqkv"], layer["bqkv"])             # [B*S, 3H]
        ctx = pallas_mha(qkv, bert_heads, S, mask_add=mask_add)          # [B*S, H]
        h = pallas_linear_res_ln(ctx, layer["wo"], layer["bo"], h,
                                 layer["ln1_g"], layer["ln1_b"])
        ff = pallas_linear(h, layer["w1"], layer["b1"], act="gelu")      # [B*S, inter]
        h = pallas_linear_res_ln(ff, layer["w2"], layer["b2"], h,
                                 layer["ln2_g"], layer["ln2_b"], tk=1024)

    # ---- BERT tanh pooler on the [CLS] token ----
    cls_tokens = h.reshape(B, S, H)[:, 0, :]                             # [B, H]
    pooled_features = pallas_linear(cls_tokens, p["pool_w"], p["pool_b"], act="tanh")

    # ---- sentence-pair difference (SEP-token split) ----
    sentence_diff = pallas_sentence_diff(input_ids, h, S, sep_id=102)

    # ---- action / negation self-attention + mean pooling (tokenizer=None path)
    #      mean commutes with the output projection => pool inside the MHA kernel
    #      (no full ctx HBM round trip) and apply one batched [B,H]@[H,H] proj.
    def attn_pool(att):
        qkv = pallas_linear(h, att["wqkv"], att["bqkv"])
        pooled = pallas_mha(qkv, clf_heads, S, mask_add=None, pool=True)  # [B, H]
        return pallas_linear(pooled, att["wo"], att["bo"])                # [B, H]

    action_features = attn_pool(p["action_attn"])
    negation_features = attn_pool(p["negation_attn"])

    # ---- fusion + classifier head (single fused kernel, lane-dense output) ----
    combined = jnp.concatenate(
        [pooled_features, sentence_diff, action_features, negation_features], axis=-1)
    logits = pallas_classifier_head(
        combined, p["fuse_w"], p["fuse_b"],
        p["cls_w1"], p["cls_b1"], p["cls_w2p"], p["cls_b2p"],
        p["cls_w3p"], p["cls_b3p"], num_classes)
    return logits


# ---------------------------------------------------------------------------
# Demo
# ---------------------------------------------------------------------------

if __name__ == "__main__":
    B, S, H = 2, 8, 32
    VOCAB, N_LAYERS, INTER, NUM_CLASSES = 130, 2, 64, 3

    key = jax.random.PRNGKey(0)
    params = init_params(key, VOCAB, S, H, N_LAYERS, INTER, NUM_CLASSES)

    # [CLS]=101, [SEP]=102, 0=pad
    input_ids = jnp.array([[101, 5, 6, 102, 7, 8, 102, 0],
                           [101, 9, 10, 11, 102, 12, 102, 0]], dtype=jnp.int32)
    attention_mask = jnp.array([[1, 1, 1, 1, 1, 1, 1, 0],
                                [1, 1, 1, 1, 1, 1, 1, 0]], dtype=jnp.int32)
    token_type_ids = jnp.array([[0, 0, 0, 0, 1, 1, 1, 1],
                                [0, 0, 0, 0, 0, 1, 1, 1]], dtype=jnp.int32)

    fwd = jax.jit(bert_classifier_forward)
    logits = jax.block_until_ready(fwd(params, input_ids, attention_mask, token_type_ids))
    assert logits.shape == (B, NUM_CLASSES)
    assert bool(jnp.all(jnp.isfinite(logits)))
    print("KERNEL_OK")
</pallas_src>

<mosaic_0001>
module attributes {stable_mosaic.version = 11 : i64} {
  func.func @_linear_kernel(%arg0: i32, %arg1: i32, %arg2: i32, %arg3: memref<16x32xbf16, #tpu.memory_space<vmem>>, %arg4: memref<32x96xbf16, #tpu.memory_space<vmem>>, %arg5: memref<1x96xf32, #tpu.memory_space<vmem>>, %arg6: memref<16x96xbf16, #tpu.memory_space<vmem>>, %arg7: memref<16x96xf32, #tpu.memory_space<vmem>>) attributes {dimension_semantics = [#tpu.dimension_semantics<parallel>, #tpu.dimension_semantics<parallel>, #tpu.dimension_semantics<arbitrary>], iteration_bounds = array<i64: 1, 1, 1>, scalar_prefetch = 0 : i64, scratch_operands = 1 : i64, tpu.core_type = #tpu.core_type<tc>, window_params = [{transform_indices = @transform_0, window_bounds = array<i64: 16, 32>}, {transform_indices = @transform_1, window_bounds = array<i64: 32, 96>}, {transform_indices = @transform_2, window_bounds = array<i64: 1, 96>}, {transform_indices = @transform_3, window_bounds = array<i64: 16, 96>}]} {
    %c0_i32 = arith.constant 0 : i32
    %0 = arith.cmpi eq, %arg2, %c0_i32 : i32
    %1 = arith.extui %0 : i1 to i32
    %c0_i32_0 = arith.constant 0 : i32
    %2 = arith.cmpi ne, %1, %c0_i32_0 : i32
    scf.if %2 {
      %cst_10 = arith.constant 0.000000e+00 : f32
      %12 = vector.broadcast %cst_10 : f32 to vector<16x96xf32>
      %c0_11 = arith.constant 0 : index
      %c0_12 = arith.constant 0 : index
      %13 = vector.load %arg7[%c0_11, %c0_12] : memref<16x96xf32, #tpu.memory_space<vmem>>, vector<16x96xf32>
      tpu.vector_store %arg7[%c0_11, %c0_12], %12 {strides = array<i32>} : memref<16x96xf32, #tpu.memory_space<vmem>>, vector<16x96xf32>,
    } else {
    }
    %c0 = arith.constant 0 : index
    %c0_1 = arith.constant 0 : index
    %3 = vector.load %arg7[%c0, %c0_1] : memref<16x96xf32, #tpu.memory_space<vmem>>, vector<16x96xf32>
    %c0_2 = arith.constant 0 : index
    %c0_3 = arith.constant 0 : index
    %4 = vector.load %arg3[%c0_2, %c0_3] : memref<16x32xbf16, #tpu.memory_space<vmem>>, vector<16x32xbf16>
    %c0_4 = arith.constant 0 : index
    %c0_5 = arith.constant 0 : index
    %5 = vector.load %arg4[%c0_4, %c0_5] : memref<32x96xbf16, #tpu.memory_space<vmem>>, vector<32x96xbf16>
    %cst = arith.constant dense<0.000000e+00> : vector<16x96xf32>
    %6 = tpu.matmul %4, %5, %cst {dimension_numbers = #tpu.dot_dimension_numbers<[1], [0], [0], [1], [0, 0, 1, 1], [], []>} : vector<16x32xbf16>, vector<32x96xbf16>, vector<16x96xf32> -> vector<16x96xf32>
    %7 = arith.addf %3, %6 : vector<16x96xf32>
    %c0_6 = arith.constant 0 : index
    %c0_7 = arith.constant 0 : index
    %8 = vector.load %arg7[%c0_6, %c0_7] : memref<16x96xf32, #tpu.memory_space<vmem>>, vector<16x96xf32>
    tpu.vector_store %arg7[%c0_6, %c0_7], %7 {strides = array<i32>} : memref<16x96xf32, #tpu.memory_space<vmem>>, vector<16x96xf32>,
    %c0_i32_8 = arith.constant 0 : i32
    %9 = arith.cmpi eq, %arg2, %c0_i32_8 : i32
    %10 = arith.extui %9 : i1 to i32
    %c0_i32_9 = arith.constant 0 : i32
    %11 = arith.cmpi ne, %10, %c0_i32_9 : i32
    scf.if %11 {
      %c0_10 = arith.constant 0 : index
      %c0_11 = arith.constant 0 : index
      %12 = vector.load %arg7[%c0_10, %c0_11] : memref<16x96xf32, #tpu.memory_space<vmem>>, vector<16x96xf32>
      %c0_12 = arith.constant 0 : index
      %c0_13 = arith.constant 0 : index
      %13 = vector.load %arg5[%c0_12, %c0_13] : memref<1x96xf32, #tpu.memory_space<vmem>>, vector<1x96xf32>
      %14 = vector.broadcast %13 : vector<1x96xf32> to vector<16x96xf32>
      %15 = arith.addf %12, %14 : vector<16x96xf32>
      %16 = arith.truncf %15 : vector<16x96xf32> to vector<16x96xbf16>
      %c0_14 = arith.constant 0 : index
      %c0_15 = arith.constant 0 : index
      %17 = vector.load %arg6[%c0_14, %c0_15] : memref<16x96xbf16, #tpu.memory_space<vmem>>, vector<16x96xbf16>
      tpu.vector_store %arg6[%c0_14, %c0_15], %16 {strides = array<i32>} : memref<16x96xbf16, #tpu.memory_space<vmem>>, vector<16x96xbf16>,
    } else {
    }
    return
  }
  func.func @transform_0(%arg0: i32, %arg1: i32, %arg2: i32) -> (i32, i32) {
    %c0_i32 = arith.constant 0 : i32
    return %arg0, %arg2 : i32, i32
  }
  func.func @transform_1(%arg0: i32, %arg1: i32, %arg2: i32) -> (i32, i32) {
    %c0_i32 = arith.constant 0 : i32
    return %arg2, %arg1 : i32, i32
  }
  func.func @transform_2(%arg0: i32, %arg1: i32, %arg2: i32) -> (i32, i32) {
    %c0_i32 = arith.constant 0 : i32
    %c0_i32_0 = arith.constant 0 : i32
    return %c0_i32, %arg1 : i32, i32
  }
  func.func @transform_3(%arg0: i32, %arg1: i32, %arg2: i32) -> (i32, i32) {
    %c0_i32 = arith.constant 0 : i32
    return %arg0, %arg1 : i32, i32
  }
}

module attributes {stable_mosaic.version = 11 : i64} {
  func.func @_linear_res_ln_kernel(%arg0: i32, %arg1: i32, %arg2: memref<16x32xbf16, #tpu.memory_space<vmem>>, %arg3: memref<32x32xbf16, #tpu.memory_space<vmem>>, %arg4: memref<1x32xf32, #tpu.memory_space<vmem>>, %arg5: memref<16x32xbf16, #tpu.memory_space<vmem>>, %arg6: memref<1x32xf32, #tpu.memory_space<vmem>>, %arg7: memref<1x32xf32, #tpu.memory_space<vmem>>, %arg8: memref<16x32xbf16, #tpu.memory_space<vmem>>, %arg9: memref<16x32xf32, #tpu.memory_space<vmem>>) attributes {dimension_semantics = [#tpu.dimension_semantics<parallel>, #tpu.dimension_semantics<arbitrary>], iteration_bounds = array<i64: 1, 1>, scalar_prefetch = 0 : i64, scratch_operands = 1 : i64, tpu.core_type = #tpu.core_type<tc>, window_params = [{transform_indices = @transform_0, window_bounds = array<i64: 16, 32>}, {transform_indices = @transform_1, window_bounds = array<i64: 32, 32>}, {pipeline_mode = #tpu.pipeline_mode<synchronous>, transform_indices = @transform_2, window_bounds = array<i64: 1, 32>}, {transform_indices = @transform_3, window_bounds = array<i64: 16, 32>}, {pipeline_mode = #tpu.pipeline_mode<synchronous>, transform_indices = @transform_4, window_bounds = array<i64: 1, 32>}, {pipeline_mode = #tpu.pipeline_mode<synchronous>, transform_indices = @transform_5, window_bounds = array<i64: 1, 32>}, {transform_indices = @transform_6, window_bounds = array<i64: 16, 32>}]} {
    %c0_i32 = arith.constant 0 : i32
    %0 = arith.cmpi eq, %arg1, %c0_i32 : i32
    %1 = arith.extui %0 : i1 to i32
    %c0_i32_0 = arith.constant 0 : i32
    %2 = arith.cmpi ne, %1, %c0_i32_0 : i32
    scf.if %2 {
      %cst_10 = arith.constant 0.000000e+00 : f32
      %12 = vector.broadcast %cst_10 : f32 to vector<16x32xf32>
      %c0_11 = arith.constant 0 : index
      %c0_12 = arith.constant 0 : index
      %13 = vector.load %arg9[%c0_11, %c0_12] : memref<16x32xf32, #tpu.memory_space<vmem>>, vector<16x32xf32>
      tpu.vector_store %arg9[%c0_11, %c0_12], %12 {strides = array<i32>} : memref<16x32xf32, #tpu.memory_space<vmem>>, vector<16x32xf32>,
    } else {
    }
    %c0 = arith.constant 0 : index
    %c0_1 = arith.constant 0 : index
    %3 = vector.load %arg9[%c0, %c0_1] : memref<16x32xf32, #tpu.memory_space<vmem>>, vector<16x32xf32>
    %c0_2 = arith.constant 0 : index
    %c0_3 = arith.constant 0 : index
    %4 = vector.load %arg2[%c0_2, %c0_3] : memref<16x32xbf16, #tpu.memory_space<vmem>>, vector<16x32xbf16>
    %c0_4 = arith.constant 0 : index
    %c0_5 = arith.constant 0 : index
    %5 = vector.load %arg3[%c0_4, %c0_5] : memref<32x32xbf16, #tpu.memory_space<vmem>>, vector<32x32xbf16>
    %cst = arith.constant dense<0.000000e+00> : vector<16x32xf32>
    %6 = tpu.matmul %4, %5, %cst {dimension_numbers = #tpu.dot_dimension_numbers<[1], [0], [0], [1], [0, 0, 1, 1], [], []>} : vector<16x32xbf16>, vector<32x32xbf16>, vector<16x32xf32> -> vector<16x32xf32>
    %7 = arith.addf %3, %6 : vector<16x32xf32>
    %c0_6 = arith.constant 0 : index
    %c0_7 = arith.constant 0 : index
    %8 = vector.load %arg9[%c0_6, %c0_7] : memref<16x32xf32, #tpu.memory_space<vmem>>, vector<16x32xf32>
    tpu.vector_store %arg9[%c0_6, %c0_7], %7 {strides = array<i32>} : memref<16x32xf32, #tpu.memory_space<vmem>>, vector<16x32xf32>,
    %c0_i32_8 = arith.constant 0 : i32
    %9 = arith.cmpi eq, %arg1, %c0_i32_8 : i32
    %10 = arith.extui %9 : i1 to i32
    %c0_i32_9 = arith.constant 0 : i32
    %11 = arith.cmpi ne, %10, %c0_i32_9 : i32
    scf.if %11 {
      %c0_10 = arith.constant 0 : index
      %c0_11 = arith.constant 0 : index
      %12 = vector.load %arg9[%c0_10, %c0_11] : memref<16x32xf32, #tpu.memory_space<vmem>>, vector<16x32xf32>
      %c0_12 = arith.constant 0 : index
      %c0_13 = arith.constant 0 : index
      %13 = vector.load %arg4[%c0_12, %c0_13] : memref<1x32xf32, #tpu.memory_space<vmem>>, vector<1x32xf32>
      %14 = vector.broadcast %13 : vector<1x32xf32> to vector<16x32xf32>
      %15 = arith.addf %12, %14 : vector<16x32xf32>
      %c0_14 = arith.constant 0 : index
      %c0_15 = arith.constant 0 : index
      %16 = vector.load %arg5[%c0_14, %c0_15] : memref<16x32xbf16, #tpu.memory_space<vmem>>, vector<16x32xbf16>
      %17 = arith.extf %16 : vector<16x32xbf16> to vector<16x32xf32>
      %18 = arith.addf %15, %17 : vector<16x32xf32>
      %cst_16 = arith.constant dense<0.000000e+00> : vector<16xf32>
      %19 = vector.multi_reduction <add>, %18, %cst_16 [1] : vector<16x32xf32> to vector<16xf32>
      %20 = vector.shape_cast %19 : vector<16xf32> to vector<16x1xf32>
      %cst_17 = arith.constant 3.200000e+01 : f32
      %21 = vector.broadcast %cst_17 : f32 to vector<16x1xf32>
      %22 = arith.divf %20, %21 : vector<16x1xf32>
      %23 = vector.broadcast %22 : vector<16x1xf32> to vector<16x32xf32>
      %24 = arith.subf %18, %23 : vector<16x32xf32>
      %25 = arith.mulf %24, %24 : vector<16x32xf32>
      %cst_18 = arith.constant dense<0.000000e+00> : vector<16xf32>
      %26 = vector.multi_reduction <add>, %25, %cst_18 [1] : vector<16x32xf32> to vector<16xf32>
      %27 = vector.shape_cast %26 : vector<16xf32> to vector<16x1xf32>
      %cst_19 = arith.constant 3.200000e+01 : f32
      %28 = vector.broadcast %cst_19 : f32 to vector<16x1xf32>
      %29 = arith.divf %27, %28 : vector<16x1xf32>
      %cst_20 = arith.constant 9.99999996E-13 : f32
      %30 = vector.broadcast %cst_20 : f32 to vector<16x1xf32>
      %31 = arith.addf %29, %30 : vector<16x1xf32>
      %32 = math.rsqrt %31 : vector<16x1xf32>
      %33 = vector.broadcast %32 : vector<16x1xf32> to vector<16x32xf32>
      %34 = arith.mulf %24, %33 : vector<16x32xf32>
      %c0_21 = arith.constant 0 : index
      %c0_22 = arith.constant 0 : index
      %35 = vector.load %arg6[%c0_21, %c0_22] : memref<1x32xf32, #tpu.memory_space<vmem>>, vector<1x32xf32>
      %36 = vector.broadcast %35 : vector<1x32xf32> to vector<16x32xf32>
      %37 = arith.mulf %34, %36 : vector<16x32xf32>
      %c0_23 = arith.constant 0 : index
      %c0_24 = arith.constant 0 : index
      %38 = vector.load %arg7[%c0_23, %c0_24] : memref<1x32xf32, #tpu.memory_space<vmem>>, vector<1x32xf32>
      %39 = vector.broadcast %38 : vector<1x32xf32> to vector<16x32xf32>
      %40 = arith.addf %37, %39 : vector<16x32xf32>
      %41 = arith.truncf %40 : vector<16x32xf32> to vector<16x32xbf16>
      %c0_25 = arith.constant 0 : index
      %c0_26 = arith.constant 0 : index
      %42 = vector.load %arg8[%c0_25, %c0_26] : memref<16x32xbf16, #tpu.memory_space<vmem>>, vector<16x32xbf16>
      tpu.vector_store %arg8[%c0_25, %c0_26], %41 {strides = array<i32>} : memref<16x32xbf16, #tpu.memory_space<vmem>>, vector<16x32xbf16>,
    } else {
    }
    return
  }
  func.func @transform_0(%arg0: i32, %arg1: i32) -> (i32, i32) {
    %c0_i32 = arith.constant 0 : i32
    return %arg0, %arg1 : i32, i32
  }
  func.func @transform_1(%arg0: i32, %arg1: i32) -> (i32, i32) {
    %c0_i32 = arith.constant 0 : i32
    %c0_i32_0 = arith.constant 0 : i32
    return %arg1, %c0_i32 : i32, i32
  }
  func.func @transform_2(%arg0: i32, %arg1: i32) -> (i32, i32) {
    %c0_i32 = arith.constant 0 : i32
    %c0_i32_0 = arith.constant 0 : i32
    %c0_i32_1 = arith.constant 0 : i32
    return %c0_i32, %c0_i32_0 : i32, i32
  }
  func.func @transform_3(%arg0: i32, %arg1: i32) -> (i32, i32) {
    %c0_i32 = arith.constant 0 : i32
    %c0_i32_0 = arith.constant 0 : i32
    return %arg0, %c0_i32 : i32, i32
  }
  func.func @transform_4(%arg0: i32, %arg1: i32) -> (i32, i32) {
    %c0_i32 = arith.constant 0 : i32
    %c0_i32_0 = arith.constant 0 : i32
    %c0_i32_1 = arith.constant 0 : i32
    return %c0_i32, %c0_i32_0 : i32, i32
  }
  func.func @transform_5(%arg0: i32, %arg1: i32) -> (i32, i32) {
    %c0_i32 = arith.constant 0 : i32
    %c0_i32_0 = arith.constant 0 : i32
    %c0_i32_1 = arith.constant 0 : i32
    return %c0_i32, %c0_i32_0 : i32, i32
  }
  func.func @transform_6(%arg0: i32, %arg1: i32) -> (i32, i32) {
    %c0_i32 = arith.constant 0 : i32
    %c0_i32_0 = arith.constant 0 : i32
    return %arg0, %c0_i32 : i32, i32
  }
}

module attributes {stable_mosaic.version = 11 : i64} {
  func.func @_ln_kernel(%arg0: i32, %arg1: memref<16x32xbf16, #tpu.memory_space<vmem>>, %arg2: memref<1x32xf32, #tpu.memory_space<vmem>>, %arg3: memref<1x32xf32, #tpu.memory_space<vmem>>, %arg4: memref<16x32xbf16, #tpu.memory_space<vmem>>) attributes {dimension_semantics = [#tpu.dimension_semantics<parallel>], iteration_bounds = array<i64: 1>, scalar_prefetch = 0 : i64, scratch_operands = 0 : i64, tpu.core_type = #tpu.core_type<tc>, window_params = [{transform_indices = @transform_0, window_bounds = array<i64: 16, 32>}, {pipeline_mode = #tpu.pipeline_mode<synchronous>, transform_indices = @transform_1, window_bounds = array<i64: 1, 32>}, {pipeline_mode = #tpu.pipeline_mode<synchronous>, transform_indices = @transform_2, window_bounds = array<i64: 1, 32>}, {transform_indices = @transform_3, window_bounds = array<i64: 16, 32>}]} {
    %c0 = arith.constant 0 : index
    %c0_0 = arith.constant 0 : index
    %0 = vector.load %arg1[%c0, %c0_0] : memref<16x32xbf16, #tpu.memory_space<vmem>>, vector<16x32xbf16>
    %1 = arith.extf %0 : vector<16x32xbf16> to vector<16x32xf32>
    %cst = arith.constant dense<0.000000e+00> : vector<16xf32>
    %2 = vector.multi_reduction <add>, %1, %cst [1] : vector<16x32xf32> to vector<16xf32>
    %3 = vector.shape_cast %2 : vector<16xf32> to vector<16x1xf32>
    %cst_1 = arith.constant 3.200000e+01 : f32
    %4 = vector.broadcast %cst_1 : f32 to vector<16x1xf32>
    %5 = arith.divf %3, %4 : vector<16x1xf32>
    %6 = vector.broadcast %5 : vector<16x1xf32> to vector<16x32xf32>
    %7 = arith.subf %1, %6 : vector<16x32xf32>
    %8 = arith.mulf %7, %7 : vector<16x32xf32>
    %cst_2 = arith.constant dense<0.000000e+00> : vector<16xf32>
    %9 = vector.multi_reduction <add>, %8, %cst_2 [1] : vector<16x32xf32> to vector<16xf32>
    %10 = vector.shape_cast %9 : vector<16xf32> to vector<16x1xf32>
    %cst_3 = arith.constant 3.200000e+01 : f32
    %11 = vector.broadcast %cst_3 : f32 to vector<16x1xf32>
    %12 = arith.divf %10, %11 : vector<16x1xf32>
    %cst_4 = arith.constant 9.99999996E-13 : f32
    %13 = vector.broadcast %cst_4 : f32 to vector<16x1xf32>
    %14 = arith.addf %12, %13 : vector<16x1xf32>
    %15 = math.rsqrt %14 : vector<16x1xf32>
    %16 = vector.broadcast %15 : vector<16x1xf32> to vector<16x32xf32>
    %17 = arith.mulf %7, %16 : vector<16x32xf32>
    %c0_5 = arith.constant 0 : index
    %c0_6 = arith.constant 0 : index
    %18 = vector.load %arg2[%c0_5, %c0_6] : memref<1x32xf32, #tpu.memory_space<vmem>>, vector<1x32xf32>
    %19 = vector.broadcast %18 : vector<1x32xf32> to vector<16x32xf32>
    %20 = arith.mulf %17, %19 : vector<16x32xf32>
    %c0_7 = arith.constant 0 : index
    %c0_8 = arith.constant 0 : index
    %21 = vector.load %arg3[%c0_7, %c0_8] : memref<1x32xf32, #tpu.memory_space<vmem>>, vector<1x32xf32>
    %22 = vector.broadcast %21 : vector<1x32xf32> to vector<16x32xf32>
    %23 = arith.addf %20, %22 : vector<16x32xf32>
    %24 = arith.truncf %23 : vector<16x32xf32> to vector<16x32xbf16>
    %c0_9 = arith.constant 0 : index
    %c0_10 = arith.constant 0 : index
    %25 = vector.load %arg4[%c0_9, %c0_10] : memref<16x32xbf16, #tpu.memory_space<vmem>>, vector<16x32xbf16>
    tpu.vector_store %arg4[%c0_9, %c0_10], %24 {strides = array<i32>} : memref<16x32xbf16, #tpu.memory_space<vmem>>, vector<16x32xbf16>,
    return
  }
  func.func @transform_0(%arg0: i32) -> (i32, i32) {
    %c0_i32 = arith.constant 0 : i32
    %c0_i32_0 = arith.constant 0 : i32
    return %arg0, %c0_i32 : i32, i32
  }
  func.func @transform_1(%arg0: i32) -> (i32, i32) {
    %c0_i32 = arith.constant 0 : i32
    %c0_i32_0 = arith.constant 0 : i32
    %c0_i32_1 = arith.constant 0 : i32
    return %c0_i32, %c0_i32_0 : i32, i32
  }
  func.func @transform_2(%arg0: i32) -> (i32, i32) {
    %c0_i32 = arith.constant 0 : i32
    %c0_i32_0 = arith.constant 0 : i32
    %c0_i32_1 = arith.constant 0 : i32
    return %c0_i32, %c0_i32_0 : i32, i32
  }
  func.func @transform_3(%arg0: i32) -> (i32, i32) {
    %c0_i32 = arith.constant 0 : i32
    %c0_i32_0 = arith.constant 0 : i32
    return %arg0, %c0_i32 : i32, i32
  }
}

module attributes {stable_mosaic.version = 11 : i64} {
  func.func @_mha_kernel(%arg0: i32, %arg1: memref<8x96xbf16, #tpu.memory_space<vmem>>, %arg2: memref<1x1x8xf32, #tpu.memory_space<vmem>>, %arg3: memref<8x32xbf16, #tpu.memory_space<vmem>>) attributes {dimension_semantics = [#tpu.dimension_semantics<parallel>], iteration_bounds = array<i64: 2>, scalar_prefetch = 0 : i64, scratch_operands = 0 : i64, tpu.core_type = #tpu.core_type<tc>, window_params = [{transform_indices = @transform_0, window_bounds = array<i64: 8, 96>}, {transform_indices = @transform_1, window_bounds = array<i64: 1, 1, 8>}, {transform_indices = @transform_2, window_bounds = array<i64: 8, 32>}]} {
    %c0 = arith.constant 0 : index
    %c0_0 = arith.constant 0 : index
    %c0_1 = arith.constant 0 : index
    %0 = vector.load %arg2[%c0, %c0_0, %c0_1] : memref<1x1x8xf32, #tpu.memory_space<vmem>>, vector<1x1x8xf32>
    %1 = vector.shape_cast %0 : vector<1x1x8xf32> to vector<1x8xf32>
    %c0_2 = arith.constant 0 : index
    %c0_3 = arith.constant 0 : index
    %2 = vector.load %arg1[%c0_2, %c0_3] : memref<8x96xbf16, #tpu.memory_space<vmem>>, vector<8x96xbf16>
    %3 = vector.extract_strided_slice %2 {offsets = [0, 0], sizes = [8, 32], strides = [1, 1]} : vector<8x96xbf16> to vector<8x32xbf16>
    %cst = arith.constant 3.535160e-01 : bf16
    %4 = vector.broadcast %cst : bf16 to vector<8x32xbf16>
    %5 = arith.mulf %3, %4 : vector<8x32xbf16>
    %6 = vector.extract_strided_slice %5 {offsets = [0, 0], sizes = [8, 8], strides = [1, 1]} : vector<8x32xbf16> to vector<8x8xbf16>
    %7 = vector.extract_strided_slice %2 {offsets = [0, 32], sizes = [8, 8], strides = [1, 1]} : vector<8x96xbf16> to vector<8x8xbf16>
    %8 = vector.extract_strided_slice %2 {offsets = [0, 64], sizes = [8, 8], strides = [1, 1]} : vector<8x96xbf16> to vector<8x8xbf16>
    %cst_4 = arith.constant dense<0.000000e+00> : vector<8x8xf32>
    %9 = tpu.matmul %6, %7, %cst_4 {dimension_numbers = #tpu.dot_dimension_numbers<[1], [1], [0], [0], [0, 0, 1, 0], [], []>} : vector<8x8xbf16>, vector<8x8xbf16>, vector<8x8xf32> -> vector<8x8xf32>
    %10 = vector.broadcast %1 : vector<1x8xf32> to vector<8x8xf32>
    %11 = arith.addf %9, %10 : vector<8x8xf32>
    %cst_5 = arith.constant dense<0xFF800000> : vector<8xf32>
    %12 = vector.multi_reduction <maximumf>, %11, %cst_5 [1] : vector<8x8xf32> to vector<8xf32>
    %13 = vector.shape_cast %12 : vector<8xf32> to vector<8x1xf32>
    %14 = vector.broadcast %13 : vector<8x1xf32> to vector<8x8xf32>
    %15 = arith.subf %11, %14 : vector<8x8xf32>
    %16 = math.exp %15 : vector<8x8xf32>
    %cst_6 = arith.constant dense<0.000000e+00> : vector<8xf32>
    %17 = vector.multi_reduction <add>, %16, %cst_6 [1] : vector<8x8xf32> to vector<8xf32>
    %18 = vector.shape_cast %17 : vector<8xf32> to vector<8x1xf32>
    %19 = tpu.reciprocal %18 {approx = true} : vector<8x1xf32> -> vector<8x1xf32>
    %20 = vector.broadcast %19 : vector<8x1xf32> to vector<8x8xf32>
    %21 = arith.mulf %16, %20 : vector<8x8xf32>
    %22 = arith.truncf %21 : vector<8x8xf32> to vector<8x8xbf16>
    %cst_7 = arith.constant dense<0.000000e+00> : vector<8x8xf32>
    %23 = tpu.matmul %22, %8, %cst_7 {dimension_numbers = #tpu.dot_dimension_numbers<[1], [0], [0], [1], [0, 0, 1, 1], [], []>} : vector<8x8xbf16>, vector<8x8xbf16>, vector<8x8xf32> -> vector<8x8xf32>
    %24 = vector.extract_strided_slice %5 {offsets = [0, 8], sizes = [8, 8], strides = [1, 1]} : vector<8x32xbf16> to vector<8x8xbf16>
    %25 = vector.extract_strided_slice %2 {offsets = [0, 40], sizes = [8, 8], strides = [1, 1]} : vector<8x96xbf16> to vector<8x8xbf16>
    %26 = vector.extract_strided_slice %2 {offsets = [0, 72], sizes = [8, 8], strides = [1, 1]} : vector<8x96xbf16> to vector<8x8xbf16>
    %cst_8 = arith.constant dense<0.000000e+00> : vector<8x8xf32>
    %27 = tpu.matmul %24, %25, %cst_8 {dimension_numbers = #tpu.dot_dimension_numbers<[1], [1], [0], [0], [0, 0, 1, 0], [], []>} : vector<8x8xbf16>, vector<8x8xbf16>, vector<8x8xf32> -> vector<8x8xf32>
    %28 = vector.broadcast %1 : vector<1x8xf32> to vector<8x8xf32>
    %29 = arith.addf %27, %28 : vector<8x8xf32>
    %cst_9 = arith.constant dense<0xFF800000> : vector<8xf32>
    %30 = vector.multi_reduction <maximumf>, %29, %cst_9 [1] : vector<8x8xf32> to vector<8xf32>
    %31 = vector.shape_cast %30 : vector<8xf32> to vector<8x1xf32>
    %32 = vector.broadcast %31 : vector<8x1xf32> to vector<8x8xf32>
    %33 = arith.subf %29, %32 : vector<8x8xf32>
    %34 = math.exp %33 : vector<8x8xf32>
    %cst_10 = arith.constant dense<0.000000e+00> : vector<8xf32>
    %35 = vector.multi_reduction <add>, %34, %cst_10 [1] : vector<8x8xf32> to vector<8xf32>
    %36 = vector.shape_cast %35 : vector<8xf32> to vector<8x1xf32>
    %37 = tpu.reciprocal %36 {approx = true} : vector<8x1xf32> -> vector<8x1xf32>
    %38 = vector.broadcast %37 : vector<8x1xf32> to vector<8x8xf32>
    %39 = arith.mulf %34, %38 : vector<8x8xf32>
    %40 = arith.truncf %39 : vector<8x8xf32> to vector<8x8xbf16>
    %cst_11 = arith.constant dense<0.000000e+00> : vector<8x8xf32>
    %41 = tpu.matmul %40, %26, %cst_11 {dimension_numbers = #tpu.dot_dimension_numbers<[1], [0], [0], [1], [0, 0, 1, 1], [], []>} : vector<8x8xbf16>, vector<8x8xbf16>, vector<8x8xf32> -> vector<8x8xf32>
    %42 = vector.extract_strided_slice %5 {offsets = [0, 16], sizes = [8, 8], strides = [1, 1]} : vector<8x32xbf16> to vector<8x8xbf16>
    %43 = vector.extract_strided_slice %2 {offsets = [0, 48], sizes = [8, 8], strides = [1, 1]} : vector<8x96xbf16> to vector<8x8xbf16>
    %44 = vector.extract_strided_slice %2 {offsets = [0, 80], sizes = [8, 8], strides = [1, 1]} : vector<8x96xbf16> to vector<8x8xbf16>
    %cst_12 = arith.constant dense<0.000000e+00> : vector<8x8xf32>
    %45 = tpu.matmul %42, %43, %cst_12 {dimension_numbers = #tpu.dot_dimension_numbers<[1], [1], [0], [0], [0, 0, 1, 0], [], []>} : vector<8x8xbf16>, vector<8x8xbf16>, vector<8x8xf32> -> vector<8x8xf32>
    %46 = vector.broadcast %1 : vector<1x8xf32> to vector<8x8xf32>
    %47 = arith.addf %45, %46 : vector<8x8xf32>
    %cst_13 = arith.constant dense<0xFF800000> : vector<8xf32>
    %48 = vector.multi_reduction <maximumf>, %47, %cst_13 [1] : vector<8x8xf32> to vector<8xf32>
    %49 = vector.shape_cast %48 : vector<8xf32> to vector<8x1xf32>
    %50 = vector.broadcast %49 : vector<8x1xf32> to vector<8x8xf32>
    %51 = arith.subf %47, %50 : vector<8x8xf32>
    %52 = math.exp %51 : vector<8x8xf32>
    %cst_14 = arith.constant dense<0.000000e+00> : vector<8xf32>
    %53 = vector.multi_reduction <add>, %52, %cst_14 [1] : vector<8x8xf32> to vector<8xf32>
    %54 = vector.shape_cast %53 : vector<8xf32> to vector<8x1xf32>
    %55 = tpu.reciprocal %54 {approx = true} : vector<8x1xf32> -> vector<8x1xf32>
    %56 = vector.broadcast %55 : vector<8x1xf32> to vector<8x8xf32>
    %57 = arith.mulf %52, %56 : vector<8x8xf32>
    %58 = arith.truncf %57 : vector<8x8xf32> to vector<8x8xbf16>
    %cst_15 = arith.constant dense<0.000000e+00> : vector<8x8xf32>
    %59 = tpu.matmul %58, %44, %cst_15 {dimension_numbers = #tpu.dot_dimension_numbers<[1], [0], [0], [1], [0, 0, 1, 1], [], []>} : vector<8x8xbf16>, vector<8x8xbf16>, vector<8x8xf32> -> vector<8x8xf32>
    %60 = vector.extract_strided_slice %5 {offsets = [0, 24], sizes = [8, 8], strides = [1, 1]} : vector<8x32xbf16> to vector<8x8xbf16>
    %61 = vector.extract_strided_slice %2 {offsets = [0, 56], sizes = [8, 8], strides = [1, 1]} : vector<8x96xbf16> to vector<8x8xbf16>
    %62 = vector.extract_strided_slice %2 {offsets = [0, 88], sizes = [8, 8], strides = [1, 1]} : vector<8x96xbf16> to vector<8x8xbf16>
    %cst_16 = arith.constant dense<0.000000e+00> : vector<8x8xf32>
    %63 = tpu.matmul %60, %61, %cst_16 {dimension_numbers = #tpu.dot_dimension_numbers<[1], [1], [0], [0], [0, 0, 1, 0], [], []>} : vector<8x8xbf16>, vector<8x8xbf16>, vector<8x8xf32> -> vector<8x8xf32>
    %64 = vector.broadcast %1 : vector<1x8xf32> to vector<8x8xf32>
    %65 = arith.addf %63, %64 : vector<8x8xf32>
    %cst_17 = arith.constant dense<0xFF800000> : vector<8xf32>
    %66 = vector.multi_reduction <maximumf>, %65, %cst_17 [1] : vector<8x8xf32> to vector<8xf32>
    %67 = vector.shape_cast %66 : vector<8xf32> to vector<8x1xf32>
    %68 = vector.broadcast %67 : vector<8x1xf32> to vector<8x8xf32>
    %69 = arith.subf %65, %68 : vector<8x8xf32>
    %70 = math.exp %69 : vector<8x8xf32>
    %cst_18 = arith.constant dense<0.000000e+00> : vector<8xf32>
    %71 = vector.multi_reduction <add>, %70, %cst_18 [1] : vector<8x8xf32> to vector<8xf32>
    %72 = vector.shape_cast %71 : vector<8xf32> to vector<8x1xf32>
    %73 = tpu.reciprocal %72 {approx = true} : vector<8x1xf32> -> vector<8x1xf32>
    %74 = vector.broadcast %73 : vector<8x1xf32> to vector<8x8xf32>
    %75 = arith.mulf %70, %74 : vector<8x8xf32>
    %76 = arith.truncf %75 : vector<8x8xf32> to vector<8x8xbf16>
    %cst_19 = arith.constant dense<0.000000e+00> : vector<8x8xf32>
    %77 = tpu.matmul %76, %62, %cst_19 {dimension_numbers = #tpu.dot_dimension_numbers<[1], [0], [0], [1], [0, 0, 1, 1], [], []>} : vector<8x8xbf16>, vector<8x8xbf16>, vector<8x8xf32> -> vector<8x8xf32>
    %78 = tpu.concatenate %23, %41, %59, %77 in 1 : vector<8x8xf32>, vector<8x8xf32>, vector<8x8xf32>, vector<8x8xf32> -> vector<8x32xf32>
    %79 = arith.truncf %78 : vector<8x32xf32> to vector<8x32xbf16>
    %c0_20 = arith.constant 0 : index
    %c0_21 = arith.constant 0 : index
    %80 = vector.load %arg3[%c0_20, %c0_21] : memref<8x32xbf16, #tpu.memory_space<vmem>>, vector<8x32xbf16>
    tpu.vector_store %arg3[%c0_20, %c0_21], %79 {strides = array<i32>} : memref<8x32xbf16, #tpu.memory_space<vmem>>, vector<8x32xbf16>,
    return
  }
  func.func @transform_0(%arg0: i32) -> (i32, i32) {
    %c0_i32 = arith.constant 0 : i32
    %c0_i32_0 = arith.constant 0 : i32
    return %arg0, %c0_i32 : i32, i32
  }
  func.func @transform_1(%arg0: i32) -> (i32, i32, i32) {
    %c0_i32 = arith.constant 0 : i32
    %c0_i32_0 = arith.constant 0 : i32
    %c0_i32_1 = arith.constant 0 : i32
    return %arg0, %c0_i32, %c0_i32_0 : i32, i32, i32
  }
  func.func @transform_2(%arg0: i32) -> (i32, i32) {
    %c0_i32 = arith.constant 0 : i32
    %c0_i32_0 = arith.constant 0 : i32
    return %arg0, %c0_i32 : i32, i32
  }
}

module attributes {stable_mosaic.version = 11 : i64} {
  func.func @_linear_kernel(%arg0: i32, %arg1: i32, %arg2: i32, %arg3: memref<16x32xbf16, #tpu.memory_space<vmem>>, %arg4: memref<32x64xbf16, #tpu.memory_space<vmem>>, %arg5: memref<1x64xf32, #tpu.memory_space<vmem>>, %arg6: memref<16x64xbf16, #tpu.memory_space<vmem>>, %arg7: memref<16x64xf32, #tpu.memory_space<vmem>>) attributes {dimension_semantics = [#tpu.dimension_semantics<parallel>, #tpu.dimension_semantics<parallel>, #tpu.dimension_semantics<arbitrary>], iteration_bounds = array<i64: 1, 1, 1>, scalar_prefetch = 0 : i64, scratch_operands = 1 : i64, tpu.core_type = #tpu.core_type<tc>, window_params = [{transform_indices = @transform_0, window_bounds = array<i64: 16, 32>}, {transform_indices = @transform_1, window_bounds = array<i64: 32, 64>}, {transform_indices = @transform_2, window_bounds = array<i64: 1, 64>}, {transform_indices = @transform_3, window_bounds = array<i64: 16, 64>}]} {
    %c0_i32 = arith.constant 0 : i32
    %0 = arith.cmpi eq, %arg2, %c0_i32 : i32
    %1 = arith.extui %0 : i1 to i32
    %c0_i32_0 = arith.constant 0 : i32
    %2 = arith.cmpi ne, %1, %c0_i32_0 : i32
    scf.if %2 {
      %cst_10 = arith.constant 0.000000e+00 : f32
      %12 = vector.broadcast %cst_10 : f32 to vector<16x64xf32>
      %c0_11 = arith.constant 0 : index
      %c0_12 = arith.constant 0 : index
      %13 = vector.load %arg7[%c0_11, %c0_12] : memref<16x64xf32, #tpu.memory_space<vmem>>, vector<16x64xf32>
      tpu.vector_store %arg7[%c0_11, %c0_12], %12 {strides = array<i32>} : memref<16x64xf32, #tpu.memory_space<vmem>>, vector<16x64xf32>,
    } else {
    }
    %c0 = arith.constant 0 : index
    %c0_1 = arith.constant 0 : index
    %3 = vector.load %arg7[%c0, %c0_1] : memref<16x64xf32, #tpu.memory_space<vmem>>, vector<16x64xf32>
    %c0_2 = arith.constant 0 : index
    %c0_3 = arith.constant 0 : index
    %4 = vector.load %arg3[%c0_2, %c0_3] : memref<16x32xbf16, #tpu.memory_space<vmem>>, vector<16x32xbf16>
    %c0_4 = arith.constant 0 : index
    %c0_5 = arith.constant 0 : index
    %5 = vector.load %arg4[%c0_4, %c0_5] : memref<32x64xbf16, #tpu.memory_space<vmem>>, vector<32x64xbf16>
    %cst = arith.constant dense<0.000000e+00> : vector<16x64xf32>
    %6 = tpu.matmul %4, %5, %cst {dimension_numbers = #tpu.dot_dimension_numbers<[1], [0], [0], [1], [0, 0, 1, 1], [], []>} : vector<16x32xbf16>, vector<32x64xbf16>, vector<16x64xf32> -> vector<16x64xf32>
    %7 = arith.addf %3, %6 : vector<16x64xf32>
    %c0_6 = arith.constant 0 : index
    %c0_7 = arith.constant 0 : index
    %8 = vector.load %arg7[%c0_6, %c0_7] : memref<16x64xf32, #tpu.memory_space<vmem>>, vector<16x64xf32>
    tpu.vector_store %arg7[%c0_6, %c0_7], %7 {strides = array<i32>} : memref<16x64xf32, #tpu.memory_space<vmem>>, vector<16x64xf32>,
    %c0_i32_8 = arith.constant 0 : i32
    %9 = arith.cmpi eq, %arg2, %c0_i32_8 : i32
    %10 = arith.extui %9 : i1 to i32
    %c0_i32_9 = arith.constant 0 : i32
    %11 = arith.cmpi ne, %10, %c0_i32_9 : i32
    scf.if %11 {
      %c0_10 = arith.constant 0 : index
      %c0_11 = arith.constant 0 : index
      %12 = vector.load %arg7[%c0_10, %c0_11] : memref<16x64xf32, #tpu.memory_space<vmem>>, vector<16x64xf32>
      %c0_12 = arith.constant 0 : index
      %c0_13 = arith.constant 0 : index
      %13 = vector.load %arg5[%c0_12, %c0_13] : memref<1x64xf32, #tpu.memory_space<vmem>>, vector<1x64xf32>
      %14 = vector.broadcast %13 : vector<1x64xf32> to vector<16x64xf32>
      %15 = arith.addf %12, %14 : vector<16x64xf32>
      %16 = arith.mulf %15, %15 : vector<16x64xf32>
      %17 = arith.mulf %15, %16 : vector<16x64xf32>
      %cst_14 = arith.constant 4.471500e-02 : f32
      %18 = vector.broadcast %cst_14 : f32 to vector<16x64xf32>
      %19 = arith.mulf %18, %17 : vector<16x64xf32>
      %20 = arith.addf %15, %19 : vector<16x64xf32>
      %cst_15 = arith.constant 0.797884583 : f32
      %21 = vector.broadcast %cst_15 : f32 to vector<16x64xf32>
      %22 = arith.mulf %21, %20 : vector<16x64xf32>
      %23 = math.tanh %22 : vector<16x64xf32>
      %cst_16 = arith.constant 1.000000e+00 : f32
      %24 = vector.broadcast %cst_16 : f32 to vector<16x64xf32>
      %25 = arith.addf %24, %23 : vector<16x64xf32>
      %cst_17 = arith.constant 5.000000e-01 : f32
      %26 = vector.broadcast %cst_17 : f32 to vector<16x64xf32>
      %27 = arith.mulf %26, %25 : vector<16x64xf32>
      %28 = arith.mulf %15, %27 : vector<16x64xf32>
      %29 = arith.truncf %28 : vector<16x64xf32> to vector<16x64xbf16>
      %c0_18 = arith.constant 0 : index
      %c0_19 = arith.constant 0 : index
      %30 = vector.load %arg6[%c0_18, %c0_19] : memref<16x64xbf16, #tpu.memory_space<vmem>>, vector<16x64xbf16>
      tpu.vector_store %arg6[%c0_18, %c0_19], %29 {strides = array<i32>} : memref<16x64xbf16, #tpu.memory_space<vmem>>, vector<16x64xbf16>,
    } else {
    }
    return
  }
  func.func @transform_0(%arg0: i32, %arg1: i32, %arg2: i32) -> (i32, i32) {
    %c0_i32 = arith.constant 0 : i32
    return %arg0, %arg2 : i32, i32
  }
  func.func @transform_1(%arg0: i32, %arg1: i32, %arg2: i32) -> (i32, i32) {
    %c0_i32 = arith.constant 0 : i32
    return %arg2, %arg1 : i32, i32
  }
  func.func @transform_2(%arg0: i32, %arg1: i32, %arg2: i32) -> (i32, i32) {
    %c0_i32 = arith.constant 0 : i32
    %c0_i32_0 = arith.constant 0 : i32
    return %c0_i32, %arg1 : i32, i32
  }
  func.func @transform_3(%arg0: i32, %arg1: i32, %arg2: i32) -> (i32, i32) {
    %c0_i32 = arith.constant 0 : i32
    return %arg0, %arg1 : i32, i32
  }
}

module attributes {stable_mosaic.version = 11 : i64} {
  func.func @_linear_res_ln_kernel(%arg0: i32, %arg1: i32, %arg2: memref<16x64xbf16, #tpu.memory_space<vmem>>, %arg3: memref<64x32xbf16, #tpu.memory_space<vmem>>, %arg4: memref<1x32xf32, #tpu.memory_space<vmem>>, %arg5: memref<16x32xbf16, #tpu.memory_space<vmem>>, %arg6: memref<1x32xf32, #tpu.memory_space<vmem>>, %arg7: memref<1x32xf32, #tpu.memory_space<vmem>>, %arg8: memref<16x32xbf16, #tpu.memory_space<vmem>>, %arg9: memref<16x32xf32, #tpu.memory_space<vmem>>) attributes {dimension_semantics = [#tpu.dimension_semantics<parallel>, #tpu.dimension_semantics<arbitrary>], iteration_bounds = array<i64: 1, 1>, scalar_prefetch = 0 : i64, scratch_operands = 1 : i64, tpu.core_type = #tpu.core_type<tc>, window_params = [{transform_indices = @transform_0, window_bounds = array<i64: 16, 64>}, {transform_indices = @transform_1, window_bounds = array<i64: 64, 32>}, {pipeline_mode = #tpu.pipeline_mode<synchronous>, transform_indices = @transform_2, window_bounds = array<i64: 1, 32>}, {transform_indices = @transform_3, window_bounds = array<i64: 16, 32>}, {pipeline_mode = #tpu.pipeline_mode<synchronous>, transform_indices = @transform_4, window_bounds = array<i64: 1, 32>}, {pipeline_mode = #tpu.pipeline_mode<synchronous>, transform_indices = @transform_5, window_bounds = array<i64: 1, 32>}, {transform_indices = @transform_6, window_bounds = array<i64: 16, 32>}]} {
    %c0_i32 = arith.constant 0 : i32
    %0 = arith.cmpi eq, %arg1, %c0_i32 : i32
    %1 = arith.extui %0 : i1 to i32
    %c0_i32_0 = arith.constant 0 : i32
    %2 = arith.cmpi ne, %1, %c0_i32_0 : i32
    scf.if %2 {
      %cst_10 = arith.constant 0.000000e+00 : f32
      %12 = vector.broadcast %cst_10 : f32 to vector<16x32xf32>
      %c0_11 = arith.constant 0 : index
      %c0_12 = arith.constant 0 : index
      %13 = vector.load %arg9[%c0_11, %c0_12] : memref<16x32xf32, #tpu.memory_space<vmem>>, vector<16x32xf32>
      tpu.vector_store %arg9[%c0_11, %c0_12], %12 {strides = array<i32>} : memref<16x32xf32, #tpu.memory_space<vmem>>, vector<16x32xf32>,
    } else {
    }
    %c0 = arith.constant 0 : index
    %c0_1 = arith.constant 0 : index
    %3 = vector.load %arg9[%c0, %c0_1] : memref<16x32xf32, #tpu.memory_space<vmem>>, vector<16x32xf32>
    %c0_2 = arith.constant 0 : index
    %c0_3 = arith.constant 0 : index
    %4 = vector.load %arg2[%c0_2, %c0_3] : memref<16x64xbf16, #tpu.memory_space<vmem>>, vector<16x64xbf16>
    %c0_4 = arith.constant 0 : index
    %c0_5 = arith.constant 0 : index
    %5 = vector.load %arg3[%c0_4, %c0_5] : memref<64x32xbf16, #tpu.memory_space<vmem>>, vector<64x32xbf16>
    %cst = arith.constant dense<0.000000e+00> : vector<16x32xf32>
    %6 = tpu.matmul %4, %5, %cst {dimension_numbers = #tpu.dot_dimension_numbers<[1], [0], [0], [1], [0, 0, 1, 1], [], []>} : vector<16x64xbf16>, vector<64x32xbf16>, vector<16x32xf32> -> vector<16x32xf32>
    %7 = arith.addf %3, %6 : vector<16x32xf32>
    %c0_6 = arith.constant 0 : index
    %c0_7 = arith.constant 0 : index
    %8 = vector.load %arg9[%c0_6, %c0_7] : memref<16x32xf32, #tpu.memory_space<vmem>>, vector<16x32xf32>
    tpu.vector_store %arg9[%c0_6, %c0_7], %7 {strides = array<i32>} : memref<16x32xf32, #tpu.memory_space<vmem>>, vector<16x32xf32>,
    %c0_i32_8 = arith.constant 0 : i32
    %9 = arith.cmpi eq, %arg1, %c0_i32_8 : i32
    %10 = arith.extui %9 : i1 to i32
    %c0_i32_9 = arith.constant 0 : i32
    %11 = arith.cmpi ne, %10, %c0_i32_9 : i32
    scf.if %11 {
      %c0_10 = arith.constant 0 : index
      %c0_11 = arith.constant 0 : index
      %12 = vector.load %arg9[%c0_10, %c0_11] : memref<16x32xf32, #tpu.memory_space<vmem>>, vector<16x32xf32>
      %c0_12 = arith.constant 0 : index
      %c0_13 = arith.constant 0 : index
      %13 = vector.load %arg4[%c0_12, %c0_13] : memref<1x32xf32, #tpu.memory_space<vmem>>, vector<1x32xf32>
      %14 = vector.broadcast %13 : vector<1x32xf32> to vector<16x32xf32>
      %15 = arith.addf %12, %14 : vector<16x32xf32>
      %c0_14 = arith.constant 0 : index
      %c0_15 = arith.constant 0 : index
      %16 = vector.load %arg5[%c0_14, %c0_15] : memref<16x32xbf16, #tpu.memory_space<vmem>>, vector<16x32xbf16>
      %17 = arith.extf %16 : vector<16x32xbf16> to vector<16x32xf32>
      %18 = arith.addf %15, %17 : vector<16x32xf32>
      %cst_16 = arith.constant dense<0.000000e+00> : vector<16xf32>
      %19 = vector.multi_reduction <add>, %18, %cst_16 [1] : vector<16x32xf32> to vector<16xf32>
      %20 = vector.shape_cast %19 : vector<16xf32> to vector<16x1xf32>
      %cst_17 = arith.constant 3.200000e+01 : f32
      %21 = vector.broadcast %cst_17 : f32 to vector<16x1xf32>
      %22 = arith.divf %20, %21 : vector<16x1xf32>
      %23 = vector.broadcast %22 : vector<16x1xf32> to vector<16x32xf32>
      %24 = arith.subf %18, %23 : vector<16x32xf32>
      %25 = arith.mulf %24, %24 : vector<16x32xf32>
      %cst_18 = arith.constant dense<0.000000e+00> : vector<16xf32>
      %26 = vector.multi_reduction <add>, %25, %cst_18 [1] : vector<16x32xf32> to vector<16xf32>
      %27 = vector.shape_cast %26 : vector<16xf32> to vector<16x1xf32>
      %cst_19 = arith.constant 3.200000e+01 : f32
      %28 = vector.broadcast %cst_19 : f32 to vector<16x1xf32>
      %29 = arith.divf %27, %28 : vector<16x1xf32>
      %cst_20 = arith.constant 9.99999996E-13 : f32
      %30 = vector.broadcast %cst_20 : f32 to vector<16x1xf32>
      %31 = arith.addf %29, %30 : vector<16x1xf32>
      %32 = math.rsqrt %31 : vector<16x1xf32>
      %33 = vector.broadcast %32 : vector<16x1xf32> to vector<16x32xf32>
      %34 = arith.mulf %24, %33 : vector<16x32xf32>
      %c0_21 = arith.constant 0 : index
      %c0_22 = arith.constant 0 : index
      %35 = vector.load %arg6[%c0_21, %c0_22] : memref<1x32xf32, #tpu.memory_space<vmem>>, vector<1x32xf32>
      %36 = vector.broadcast %35 : vector<1x32xf32> to vector<16x32xf32>
      %37 = arith.mulf %34, %36 : vector<16x32xf32>
      %c0_23 = arith.constant 0 : index
      %c0_24 = arith.constant 0 : index
      %38 = vector.load %arg7[%c0_23, %c0_24] : memref<1x32xf32, #tpu.memory_space<vmem>>, vector<1x32xf32>
      %39 = vector.broadcast %38 : vector<1x32xf32> to vector<16x32xf32>
      %40 = arith.addf %37, %39 : vector<16x32xf32>
      %41 = arith.truncf %40 : vector<16x32xf32> to vector<16x32xbf16>
      %c0_25 = arith.constant 0 : index
      %c0_26 = arith.constant 0 : index
      %42 = vector.load %arg8[%c0_25, %c0_26] : memref<16x32xbf16, #tpu.memory_space<vmem>>, vector<16x32xbf16>
      tpu.vector_store %arg8[%c0_25, %c0_26], %41 {strides = array<i32>} : memref<16x32xbf16, #tpu.memory_space<vmem>>, vector<16x32xbf16>,
    } else {
    }
    return
  }
  func.func @transform_0(%arg0: i32, %arg1: i32) -> (i32, i32) {
    %c0_i32 = arith.constant 0 : i32
    return %arg0, %arg1 : i32, i32
  }
  func.func @transform_1(%arg0: i32, %arg1: i32) -> (i32, i32) {
    %c0_i32 = arith.constant 0 : i32
    %c0_i32_0 = arith.constant 0 : i32
    return %arg1, %c0_i32 : i32, i32
  }
  func.func @transform_2(%arg0: i32, %arg1: i32) -> (i32, i32) {
    %c0_i32 = arith.constant 0 : i32
    %c0_i32_0 = arith.constant 0 : i32
    %c0_i32_1 = arith.constant 0 : i32
    return %c0_i32, %c0_i32_0 : i32, i32
  }
  func.func @transform_3(%arg0: i32, %arg1: i32) -> (i32, i32) {
    %c0_i32 = arith.constant 0 : i32
    %c0_i32_0 = arith.constant 0 : i32
    return %arg0, %c0_i32 : i32, i32
  }
  func.func @transform_4(%arg0: i32, %arg1: i32) -> (i32, i32) {
    %c0_i32 = arith.constant 0 : i32
    %c0_i32_0 = arith.constant 0 : i32
    %c0_i32_1 = arith.constant 0 : i32
    return %c0_i32, %c0_i32_0 : i32, i32
  }
  func.func @transform_5(%arg0: i32, %arg1: i32) -> (i32, i32) {
    %c0_i32 = arith.constant 0 : i32
    %c0_i32_0 = arith.constant 0 : i32
    %c0_i32_1 = arith.constant 0 : i32
    return %c0_i32, %c0_i32_0 : i32, i32
  }
  func.func @transform_6(%arg0: i32, %arg1: i32) -> (i32, i32) {
    %c0_i32 = arith.constant 0 : i32
    %c0_i32_0 = arith.constant 0 : i32
    return %arg0, %c0_i32 : i32, i32
  }
}

module attributes {stable_mosaic.version = 11 : i64} {
  func.func @_mha_kernel(%arg0: i32, %arg1: memref<8x96xbf16, #tpu.memory_space<vmem>>, %arg2: memref<1x1x32xbf16, #tpu.memory_space<vmem>>) attributes {dimension_semantics = [#tpu.dimension_semantics<parallel>], iteration_bounds = array<i64: 2>, scalar_prefetch = 0 : i64, scratch_operands = 0 : i64, tpu.core_type = #tpu.core_type<tc>, window_params = [{transform_indices = @transform_0, window_bounds = array<i64: 8, 96>}, {transform_indices = @transform_1, window_bounds = array<i64: 1, 1, 32>}]} {
    %c0 = arith.constant 0 : index
    %c0_0 = arith.constant 0 : index
    %0 = vector.load %arg1[%c0, %c0_0] : memref<8x96xbf16, #tpu.memory_space<vmem>>, vector<8x96xbf16>
    %1 = vector.extract_strided_slice %0 {offsets = [0, 0], sizes = [8, 32], strides = [1, 1]} : vector<8x96xbf16> to vector<8x32xbf16>
    %cst = arith.constant 5.000000e-01 : bf16
    %2 = vector.broadcast %cst : bf16 to vector<8x32xbf16>
    %3 = arith.mulf %1, %2 : vector<8x32xbf16>
    %4 = vector.extract_strided_slice %3 {offsets = [0, 0], sizes = [8, 4], strides = [1, 1]} : vector<8x32xbf16> to vector<8x4xbf16>
    %5 = vector.extract_strided_slice %0 {offsets = [0, 32], sizes = [8, 4], strides = [1, 1]} : vector<8x96xbf16> to vector<8x4xbf16>
    %6 = vector.extract_strided_slice %0 {offsets = [0, 64], sizes = [8, 4], strides = [1, 1]} : vector<8x96xbf16> to vector<8x4xbf16>
    %cst_1 = arith.constant dense<0.000000e+00> : vector<8x8xf32>
    %7 = tpu.matmul %4, %5, %cst_1 {dimension_numbers = #tpu.dot_dimension_numbers<[1], [1], [0], [0], [0, 0, 1, 0], [], []>} : vector<8x4xbf16>, vector<8x4xbf16>, vector<8x8xf32> -> vector<8x8xf32>
    %cst_2 = arith.constant dense<0xFF800000> : vector<8xf32>
    %8 = vector.multi_reduction <maximumf>, %7, %cst_2 [1] : vector<8x8xf32> to vector<8xf32>
    %9 = vector.shape_cast %8 : vector<8xf32> to vector<8x1xf32>
    %10 = vector.broadcast %9 : vector<8x1xf32> to vector<8x8xf32>
    %11 = arith.subf %7, %10 : vector<8x8xf32>
    %12 = math.exp %11 : vector<8x8xf32>
    %cst_3 = arith.constant dense<0.000000e+00> : vector<8xf32>
    %13 = vector.multi_reduction <add>, %12, %cst_3 [1] : vector<8x8xf32> to vector<8xf32>
    %14 = vector.shape_cast %13 : vector<8xf32> to vector<8x1xf32>
    %15 = tpu.reciprocal %14 {approx = true} : vector<8x1xf32> -> vector<8x1xf32>
    %16 = vector.broadcast %15 : vector<8x1xf32> to vector<8x8xf32>
    %17 = arith.mulf %12, %16 : vector<8x8xf32>
    %18 = arith.truncf %17 : vector<8x8xf32> to vector<8x8xbf16>
    %cst_4 = arith.constant dense<0.000000e+00> : vector<8x4xf32>
    %19 = tpu.matmul %18, %6, %cst_4 {dimension_numbers = #tpu.dot_dimension_numbers<[1], [0], [0], [1], [0, 0, 1, 1], [], []>} : vector<8x8xbf16>, vector<8x4xbf16>, vector<8x4xf32> -> vector<8x4xf32>
    %20 = vector.extract_strided_slice %3 {offsets = [0, 4], sizes = [8, 4], strides = [1, 1]} : vector<8x32xbf16> to vector<8x4xbf16>
    %21 = vector.extract_strided_slice %0 {offsets = [0, 36], sizes = [8, 4], strides = [1, 1]} : vector<8x96xbf16> to vector<8x4xbf16>
    %22 = vector.extract_strided_slice %0 {offsets = [0, 68], sizes = [8, 4], strides = [1, 1]} : vector<8x96xbf16> to vector<8x4xbf16>
    %cst_5 = arith.constant dense<0.000000e+00> : vector<8x8xf32>
    %23 = tpu.matmul %20, %21, %cst_5 {dimension_numbers = #tpu.dot_dimension_numbers<[1], [1], [0], [0], [0, 0, 1, 0], [], []>} : vector<8x4xbf16>, vector<8x4xbf16>, vector<8x8xf32> -> vector<8x8xf32>
    %cst_6 = arith.constant dense<0xFF800000> : vector<8xf32>
    %24 = vector.multi_reduction <maximumf>, %23, %cst_6 [1] : vector<8x8xf32> to vector<8xf32>
    %25 = vector.shape_cast %24 : vector<8xf32> to vector<8x1xf32>
    %26 = vector.broadcast %25 : vector<8x1xf32> to vector<8x8xf32>
    %27 = arith.subf %23, %26 : vector<8x8xf32>
    %28 = math.exp %27 : vector<8x8xf32>
    %cst_7 = arith.constant dense<0.000000e+00> : vector<8xf32>
    %29 = vector.multi_reduction <add>, %28, %cst_7 [1] : vector<8x8xf32> to vector<8xf32>
    %30 = vector.shape_cast %29 : vector<8xf32> to vector<8x1xf32>
    %31 = tpu.reciprocal %30 {approx = true} : vector<8x1xf32> -> vector<8x1xf32>
    %32 = vector.broadcast %31 : vector<8x1xf32> to vector<8x8xf32>
    %33 = arith.mulf %28, %32 : vector<8x8xf32>
    %34 = arith.truncf %33 : vector<8x8xf32> to vector<8x8xbf16>
    %cst_8 = arith.constant dense<0.000000e+00> : vector<8x4xf32>
    %35 = tpu.matmul %34, %22, %cst_8 {dimension_numbers = #tpu.dot_dimension_numbers<[1], [0], [0], [1], [0, 0, 1, 1], [], []>} : vector<8x8xbf16>, vector<8x4xbf16>, vector<8x4xf32> -> vector<8x4xf32>
    %36 = vector.extract_strided_slice %3 {offsets = [0, 8], sizes = [8, 4], strides = [1, 1]} : vector<8x32xbf16> to vector<8x4xbf16>
    %37 = vector.extract_strided_slice %0 {offsets = [0, 40], sizes = [8, 4], strides = [1, 1]} : vector<8x96xbf16> to vector<8x4xbf16>
    %38 = vector.extract_strided_slice %0 {offsets = [0, 72], sizes = [8, 4], strides = [1, 1]} : vector<8x96xbf16> to vector<8x4xbf16>
    %cst_9 = arith.constant dense<0.000000e+00> : vector<8x8xf32>
    %39 = tpu.matmul %36, %37, %cst_9 {dimension_numbers = #tpu.dot_dimension_numbers<[1], [1], [0], [0], [0, 0, 1, 0], [], []>} : vector<8x4xbf16>, vector<8x4xbf16>, vector<8x8xf32> -> vector<8x8xf32>
    %cst_10 = arith.constant dense<0xFF800000> : vector<8xf32>
    %40 = vector.multi_reduction <maximumf>, %39, %cst_10 [1] : vector<8x8xf32> to vector<8xf32>
    %41 = vector.shape_cast %40 : vector<8xf32> to vector<8x1xf32>
    %42 = vector.broadcast %41 : vector<8x1xf32> to vector<8x8xf32>
    %43 = arith.subf %39, %42 : vector<8x8xf32>
    %44 = math.exp %43 : vector<8x8xf32>
    %cst_11 = arith.constant dense<0.000000e+00> : vector<8xf32>
    %45 = vector.multi_reduction <add>, %44, %cst_11 [1] : vector<8x8xf32> to vector<8xf32>
    %46 = vector.shape_cast %45 : vector<8xf32> to vector<8x1xf32>
    %47 = tpu.reciprocal %46 {approx = true} : vector<8x1xf32> -> vector<8x1xf32>
    %48 = vector.broadcast %47 : vector<8x1xf32> to vector<8x8xf32>
    %49 = arith.mulf %44, %48 : vector<8x8xf32>
    %50 = arith.truncf %49 : vector<8x8xf32> to vector<8x8xbf16>
    %cst_12 = arith.constant dense<0.000000e+00> : vector<8x4xf32>
    %51 = tpu.matmul %50, %38, %cst_12 {dimension_numbers = #tpu.dot_dimension_numbers<[1], [0], [0], [1], [0, 0, 1, 1], [], []>} : vector<8x8xbf16>, vector<8x4xbf16>, vector<8x4xf32> -> vector<8x4xf32>
    %52 = vector.extract_strided_slice %3 {offsets = [0, 12], sizes = [8, 4], strides = [1, 1]} : vector<8x32xbf16> to vector<8x4xbf16>
    %53 = vector.extract_strided_slice %0 {offsets = [0, 44], sizes = [8, 4], strides = [1, 1]} : vector<8x96xbf16> to vector<8x4xbf16>
    %54 = vector.extract_strided_slice %0 {offsets = [0, 76], sizes = [8, 4], strides = [1, 1]} : vector<8x96xbf16> to vector<8x4xbf16>
    %cst_13 = arith.constant dense<0.000000e+00> : vector<8x8xf32>
    %55 = tpu.matmul %52, %53, %cst_13 {dimension_numbers = #tpu.dot_dimension_numbers<[1], [1], [0], [0], [0, 0, 1, 0], [], []>} : vector<8x4xbf16>, vector<8x4xbf16>, vector<8x8xf32> -> vector<8x8xf32>
    %cst_14 = arith.constant dense<0xFF800000> : vector<8xf32>
    %56 = vector.multi_reduction <maximumf>, %55, %cst_14 [1] : vector<8x8xf32> to vector<8xf32>
    %57 = vector.shape_cast %56 : vector<8xf32> to vector<8x1xf32>
    %58 = vector.broadcast %57 : vector<8x1xf32> to vector<8x8xf32>
    %59 = arith.subf %55, %58 : vector<8x8xf32>
    %60 = math.exp %59 : vector<8x8xf32>
    %cst_15 = arith.constant dense<0.000000e+00> : vector<8xf32>
    %61 = vector.multi_reduction <add>, %60, %cst_15 [1] : vector<8x8xf32> to vector<8xf32>
    %62 = vector.shape_cast %61 : vector<8xf32> to vector<8x1xf32>
    %63 = tpu.reciprocal %62 {approx = true} : vector<8x1xf32> -> vector<8x1xf32>
    %64 = vector.broadcast %63 : vector<8x1xf32> to vector<8x8xf32>
    %65 = arith.mulf %60, %64 : vector<8x8xf32>
    %66 = arith.truncf %65 : vector<8x8xf32> to vector<8x8xbf16>
    %cst_16 = arith.constant dense<0.000000e+00> : vector<8x4xf32>
    %67 = tpu.matmul %66, %54, %cst_16 {dimension_numbers = #tpu.dot_dimension_numbers<[1], [0], [0], [1], [0, 0, 1, 1], [], []>} : vector<8x8xbf16>, vector<8x4xbf16>, vector<8x4xf32> -> vector<8x4xf32>
    %68 = vector.extract_strided_slice %3 {offsets = [0, 16], sizes = [8, 4], strides = [1, 1]} : vector<8x32xbf16> to vector<8x4xbf16>
    %69 = vector.extract_strided_slice %0 {offsets = [0, 48], sizes = [8, 4], strides = [1, 1]} : vector<8x96xbf16> to vector<8x4xbf16>
    %70 = vector.extract_strided_slice %0 {offsets = [0, 80], sizes = [8, 4], strides = [1, 1]} : vector<8x96xbf16> to vector<8x4xbf16>
    %cst_17 = arith.constant dense<0.000000e+00> : vector<8x8xf32>
    %71 = tpu.matmul %68, %69, %cst_17 {dimension_numbers = #tpu.dot_dimension_numbers<[1], [1], [0], [0], [0, 0, 1, 0], [], []>} : vector<8x4xbf16>, vector<8x4xbf16>, vector<8x8xf32> -> vector<8x8xf32>
    %cst_18 = arith.constant dense<0xFF800000> : vector<8xf32>
    %72 = vector.multi_reduction <maximumf>, %71, %cst_18 [1] : vector<8x8xf32> to vector<8xf32>
    %73 = vector.shape_cast %72 : vector<8xf32> to vector<8x1xf32>
    %74 = vector.broadcast %73 : vector<8x1xf32> to vector<8x8xf32>
    %75 = arith.subf %71, %74 : vector<8x8xf32>
    %76 = math.exp %75 : vector<8x8xf32>
    %cst_19 = arith.constant dense<0.000000e+00> : vector<8xf32>
    %77 = vector.multi_reduction <add>, %76, %cst_19 [1] : vector<8x8xf32> to vector<8xf32>
    %78 = vector.shape_cast %77 : vector<8xf32> to vector<8x1xf32>
    %79 = tpu.reciprocal %78 {approx = true} : vector<8x1xf32> -> vector<8x1xf32>
    %80 = vector.broadcast %79 : vector<8x1xf32> to vector<8x8xf32>
    %81 = arith.mulf %76, %80 : vector<8x8xf32>
    %82 = arith.truncf %81 : vector<8x8xf32> to vector<8x8xbf16>
    %cst_20 = arith.constant dense<0.000000e+00> : vector<8x4xf32>
    %83 = tpu.matmul %82, %70, %cst_20 {dimension_numbers = #tpu.dot_dimension_numbers<[1], [0], [0], [1], [0, 0, 1, 1], [], []>} : vector<8x8xbf16>, vector<8x4xbf16>, vector<8x4xf32> -> vector<8x4xf32>
    %84 = vector.extract_strided_slice %3 {offsets = [0, 20], sizes = [8, 4], strides = [1, 1]} : vector<8x32xbf16> to vector<8x4xbf16>
    %85 = vector.extract_strided_slice %0 {offsets = [0, 52], sizes = [8, 4], strides = [1, 1]} : vector<8x96xbf16> to vector<8x4xbf16>
    %86 = vector.extract_strided_slice %0 {offsets = [0, 84], sizes = [8, 4], strides = [1, 1]} : vector<8x96xbf16> to vector<8x4xbf16>
    %cst_21 = arith.constant dense<0.000000e+00> : vector<8x8xf32>
    %87 = tpu.matmul %84, %85, %cst_21 {dimension_numbers = #tpu.dot_dimension_numbers<[1], [1], [0], [0], [0, 0, 1, 0], [], []>} : vector<8x4xbf16>, vector<8x4xbf16>, vector<8x8xf32> -> vector<8x8xf32>
    %cst_22 = arith.constant dense<0xFF800000> : vector<8xf32>
    %88 = vector.multi_reduction <maximumf>, %87, %cst_22 [1] : vector<8x8xf32> to vector<8xf32>
    %89 = vector.shape_cast %88 : vector<8xf32> to vector<8x1xf32>
    %90 = vector.broadcast %89 : vector<8x1xf32> to vector<8x8xf32>
    %91 = arith.subf %87, %90 : vector<8x8xf32>
    %92 = math.exp %91 : vector<8x8xf32>
    %cst_23 = arith.constant dense<0.000000e+00> : vector<8xf32>
    %93 = vector.multi_reduction <add>, %92, %cst_23 [1] : vector<8x8xf32> to vector<8xf32>
    %94 = vector.shape_cast %93 : vector<8xf32> to vector<8x1xf32>
    %95 = tpu.reciprocal %94 {approx = true} : vector<8x1xf32> -> vector<8x1xf32>
    %96 = vector.broadcast %95 : vector<8x1xf32> to vector<8x8xf32>
    %97 = arith.mulf %92, %96 : vector<8x8xf32>
    %98 = arith.truncf %97 : vector<8x8xf32> to vector<8x8xbf16>
    %cst_24 = arith.constant dense<0.000000e+00> : vector<8x4xf32>
    %99 = tpu.matmul %98, %86, %cst_24 {dimension_numbers = #tpu.dot_dimension_numbers<[1], [0], [0], [1], [0, 0, 1, 1], [], []>} : vector<8x8xbf16>, vector<8x4xbf16>, vector<8x4xf32> -> vector<8x4xf32>
    %100 = vector.extract_strided_slice %3 {offsets = [0, 24], sizes = [8, 4], strides = [1, 1]} : vector<8x32xbf16> to vector<8x4xbf16>
    %101 = vector.extract_strided_slice %0 {offsets = [0, 56], sizes = [8, 4], strides = [1, 1]} : vector<8x96xbf16> to vector<8x4xbf16>
    %102 = vector.extract_strided_slice %0 {offsets = [0, 88], sizes = [8, 4], strides = [1, 1]} : vector<8x96xbf16> to vector<8x4xbf16>
    %cst_25 = arith.constant dense<0.000000e+00> : vector<8x8xf32>
    %103 = tpu.matmul %100, %101, %cst_25 {dimension_numbers = #tpu.dot_dimension_numbers<[1], [1], [0], [0], [0, 0, 1, 0], [], []>} : vector<8x4xbf16>, vector<8x4xbf16>, vector<8x8xf32> -> vector<8x8xf32>
    %cst_26 = arith.constant dense<0xFF800000> : vector<8xf32>
    %104 = vector.multi_reduction <maximumf>, %103, %cst_26 [1] : vector<8x8xf32> to vector<8xf32>
    %105 = vector.shape_cast %104 : vector<8xf32> to vector<8x1xf32>
    %106 = vector.broadcast %105 : vector<8x1xf32> to vector<8x8xf32>
    %107 = arith.subf %103, %106 : vector<8x8xf32>
    %108 = math.exp %107 : vector<8x8xf32>
    %cst_27 = arith.constant dense<0.000000e+00> : vector<8xf32>
    %109 = vector.multi_reduction <add>, %108, %cst_27 [1] : vector<8x8xf32> to vector<8xf32>
    %110 = vector.shape_cast %109 : vector<8xf32> to vector<8x1xf32>
    %111 = tpu.reciprocal %110 {approx = true} : vector<8x1xf32> -> vector<8x1xf32>
    %112 = vector.broadcast %111 : vector<8x1xf32> to vector<8x8xf32>
    %113 = arith.mulf %108, %112 : vector<8x8xf32>
    %114 = arith.truncf %113 : vector<8x8xf32> to vector<8x8xbf16>
    %cst_28 = arith.constant dense<0.000000e+00> : vector<8x4xf32>
    %115 = tpu.matmul %114, %102, %cst_28 {dimension_numbers = #tpu.dot_dimension_numbers<[1], [0], [0], [1], [0, 0, 1, 1], [], []>} : vector<8x8xbf16>, vector<8x4xbf16>, vector<8x4xf32> -> vector<8x4xf32>
    %116 = vector.extract_strided_slice %3 {offsets = [0, 28], sizes = [8, 4], strides = [1, 1]} : vector<8x32xbf16> to vector<8x4xbf16>
    %117 = vector.extract_strided_slice %0 {offsets = [0, 60], sizes = [8, 4], strides = [1, 1]} : vector<8x96xbf16> to vector<8x4xbf16>
    %118 = vector.extract_strided_slice %0 {offsets = [0, 92], sizes = [8, 4], strides = [1, 1]} : vector<8x96xbf16> to vector<8x4xbf16>
    %cst_29 = arith.constant dense<0.000000e+00> : vector<8x8xf32>
    %119 = tpu.matmul %116, %117, %cst_29 {dimension_numbers = #tpu.dot_dimension_numbers<[1], [1], [0], [0], [0, 0, 1, 0], [], []>} : vector<8x4xbf16>, vector<8x4xbf16>, vector<8x8xf32> -> vector<8x8xf32>
    %cst_30 = arith.constant dense<0xFF800000> : vector<8xf32>
    %120 = vector.multi_reduction <maximumf>, %119, %cst_30 [1] : vector<8x8xf32> to vector<8xf32>
    %121 = vector.shape_cast %120 : vector<8xf32> to vector<8x1xf32>
    %122 = vector.broadcast %121 : vector<8x1xf32> to vector<8x8xf32>
    %123 = arith.subf %119, %122 : vector<8x8xf32>
    %124 = math.exp %123 : vector<8x8xf32>
    %cst_31 = arith.constant dense<0.000000e+00> : vector<8xf32>
    %125 = vector.multi_reduction <add>, %124, %cst_31 [1] : vector<8x8xf32> to vector<8xf32>
    %126 = vector.shape_cast %125 : vector<8xf32> to vector<8x1xf32>
    %127 = tpu.reciprocal %126 {approx = true} : vector<8x1xf32> -> vector<8x1xf32>
    %128 = vector.broadcast %127 : vector<8x1xf32> to vector<8x8xf32>
    %129 = arith.mulf %124, %128 : vector<8x8xf32>
    %130 = arith.truncf %129 : vector<8x8xf32> to vector<8x8xbf16>
    %cst_32 = arith.constant dense<0.000000e+00> : vector<8x4xf32>
    %131 = tpu.matmul %130, %118, %cst_32 {dimension_numbers = #tpu.dot_dimension_numbers<[1], [0], [0], [1], [0, 0, 1, 1], [], []>} : vector<8x8xbf16>, vector<8x4xbf16>, vector<8x4xf32> -> vector<8x4xf32>
    %132 = tpu.concatenate %19, %35, %51, %67, %83, %99, %115, %131 in 1 : vector<8x4xf32>, vector<8x4xf32>, vector<8x4xf32>, vector<8x4xf32>, vector<8x4xf32>, vector<8x4xf32>, vector<8x4xf32>, vector<8x4xf32> -> vector<8x32xf32>
    %cst_33 = arith.constant dense<0.000000e+00> : vector<32xf32>
    %133 = vector.multi_reduction <add>, %132, %cst_33 [0] : vector<8x32xf32> to vector<32xf32>
    %134 = vector.shape_cast %133 : vector<32xf32> to vector<1x32xf32>
    %cst_34 = arith.constant 1.250000e-01 : f32
    %135 = vector.broadcast %cst_34 : f32 to vector<1x32xf32>
    %136 = arith.mulf %134, %135 : vector<1x32xf32>
    %137 = arith.truncf %136 : vector<1x32xf32> to vector<1x32xbf16>
    %c0_35 = arith.constant 0 : index
    %c0_36 = arith.constant 0 : index
    %c0_37 = arith.constant 0 : index
    %138 = vector.load %arg2[%c0_35, %c0_36, %c0_37] : memref<1x1x32xbf16, #tpu.memory_space<vmem>>, vector<1x1x32xbf16>
    %139 = vector.shape_cast %138 : vector<1x1x32xbf16> to vector<1x32xbf16>
    %140 = vector.shape_cast %137 : vector<1x32xbf16> to vector<1x1x32xbf16>
    tpu.vector_store %arg2[%c0_35, %c0_36, %c0_37], %140 {strides = array<i32>} : memref<1x1x32xbf16, #tpu.memory_space<vmem>>, vector<1x1x32xbf16>,
    return
  }
  func.func @transform_0(%arg0: i32) -> (i32, i32) {
    %c0_i32 = arith.constant 0 : i32
    %c0_i32_0 = arith.constant 0 : i32
    return %arg0, %c0_i32 : i32, i32
  }
  func.func @transform_1(%arg0: i32) -> (i32, i32, i32) {
    %c0_i32 = arith.constant 0 : i32
    %c0_i32_0 = arith.constant 0 : i32
    %c0_i32_1 = arith.constant 0 : i32
    return %arg0, %c0_i32, %c0_i32_0 : i32, i32, i32
  }
}

module attributes {stable_mosaic.version = 11 : i64} {
  func.func @_linear_kernel(%arg0: i32, %arg1: i32, %arg2: i32, %arg3: memref<2x32xbf16, #tpu.memory_space<vmem>>, %arg4: memref<32x32xbf16, #tpu.memory_space<vmem>>, %arg5: memref<1x32xf32, #tpu.memory_space<vmem>>, %arg6: memref<2x32xbf16, #tpu.memory_space<vmem>>, %arg7: memref<2x32xf32, #tpu.memory_space<vmem>>) attributes {dimension_semantics = [#tpu.dimension_semantics<parallel>, #tpu.dimension_semantics<parallel>, #tpu.dimension_semantics<arbitrary>], iteration_bounds = array<i64: 1, 1, 1>, scalar_prefetch = 0 : i64, scratch_operands = 1 : i64, tpu.core_type = #tpu.core_type<tc>, window_params = [{transform_indices = @transform_0, window_bounds = array<i64: 2, 32>}, {transform_indices = @transform_1, window_bounds = array<i64: 32, 32>}, {transform_indices = @transform_2, window_bounds = array<i64: 1, 32>}, {transform_indices = @transform_3, window_bounds = array<i64: 2, 32>}]} {
    %c0_i32 = arith.constant 0 : i32
    %0 = arith.cmpi eq, %arg2, %c0_i32 : i32
    %1 = arith.extui %0 : i1 to i32
    %c0_i32_0 = arith.constant 0 : i32
    %2 = arith.cmpi ne, %1, %c0_i32_0 : i32
    scf.if %2 {
      %cst_10 = arith.constant 0.000000e+00 : f32
      %12 = vector.broadcast %cst_10 : f32 to vector<2x32xf32>
      %c0_11 = arith.constant 0 : index
      %c0_12 = arith.constant 0 : index
      %13 = vector.load %arg7[%c0_11, %c0_12] : memref<2x32xf32, #tpu.memory_space<vmem>>, vector<2x32xf32>
      tpu.vector_store %arg7[%c0_11, %c0_12], %12 {strides = array<i32>} : memref<2x32xf32, #tpu.memory_space<vmem>>, vector<2x32xf32>,
    } else {
    }
    %c0 = arith.constant 0 : index
    %c0_1 = arith.constant 0 : index
    %3 = vector.load %arg7[%c0, %c0_1] : memref<2x32xf32, #tpu.memory_space<vmem>>, vector<2x32xf32>
    %c0_2 = arith.constant 0 : index
    %c0_3 = arith.constant 0 : index
    %4 = vector.load %arg3[%c0_2, %c0_3] : memref<2x32xbf16, #tpu.memory_space<vmem>>, vector<2x32xbf16>
    %c0_4 = arith.constant 0 : index
    %c0_5 = arith.constant 0 : index
    %5 = vector.load %arg4[%c0_4, %c0_5] : memref<32x32xbf16, #tpu.memory_space<vmem>>, vector<32x32xbf16>
    %cst = arith.constant dense<0.000000e+00> : vector<2x32xf32>
    %6 = tpu.matmul %4, %5, %cst {dimension_numbers = #tpu.dot_dimension_numbers<[1], [0], [0], [1], [0, 0, 1, 1], [], []>} : vector<2x32xbf16>, vector<32x32xbf16>, vector<2x32xf32> -> vector<2x32xf32>
    %7 = arith.addf %3, %6 : vector<2x32xf32>
    %c0_6 = arith.constant 0 : index
    %c0_7 = arith.constant 0 : index
    %8 = vector.load %arg7[%c0_6, %c0_7] : memref<2x32xf32, #tpu.memory_space<vmem>>, vector<2x32xf32>
    tpu.vector_store %arg7[%c0_6, %c0_7], %7 {strides = array<i32>} : memref<2x32xf32, #tpu.memory_space<vmem>>, vector<2x32xf32>,
    %c0_i32_8 = arith.constant 0 : i32
    %9 = arith.cmpi eq, %arg2, %c0_i32_8 : i32
    %10 = arith.extui %9 : i1 to i32
    %c0_i32_9 = arith.constant 0 : i32
    %11 = arith.cmpi ne, %10, %c0_i32_9 : i32
    scf.if %11 {
      %c0_10 = arith.constant 0 : index
      %c0_11 = arith.constant 0 : index
      %12 = vector.load %arg7[%c0_10, %c0_11] : memref<2x32xf32, #tpu.memory_space<vmem>>, vector<2x32xf32>
      %c0_12 = arith.constant 0 : index
      %c0_13 = arith.constant 0 : index
      %13 = vector.load %arg5[%c0_12, %c0_13] : memref<1x32xf32, #tpu.memory_space<vmem>>, vector<1x32xf32>
      %14 = vector.broadcast %13 : vector<1x32xf32> to vector<2x32xf32>
      %15 = arith.addf %12, %14 : vector<2x32xf32>
      %16 = arith.truncf %15 : vector<2x32xf32> to vector<2x32xbf16>
      %c0_14 = arith.constant 0 : index
      %c0_15 = arith.constant 0 : index
      %17 = vector.load %arg6[%c0_14, %c0_15] : memref<2x32xbf16, #tpu.memory_space<vmem>>, vector<2x32xbf16>
      tpu.vector_store %arg6[%c0_14, %c0_15], %16 {strides = array<i32>} : memref<2x32xbf16, #tpu.memory_space<vmem>>, vector<2x32xbf16>,
    } else {
    }
    return
  }
  func.func @transform_0(%arg0: i32, %arg1: i32, %arg2: i32) -> (i32, i32) {
    %c0_i32 = arith.constant 0 : i32
    return %arg0, %arg2 : i32, i32
  }
  func.func @transform_1(%arg0: i32, %arg1: i32, %arg2: i32) -> (i32, i32) {
    %c0_i32 = arith.constant 0 : i32
    return %arg2, %arg1 : i32, i32
  }
  func.func @transform_2(%arg0: i32, %arg1: i32, %arg2: i32) -> (i32, i32) {
    %c0_i32 = arith.constant 0 : i32
    %c0_i32_0 = arith.constant 0 : i32
    return %c0_i32, %arg1 : i32, i32
  }
  func.func @transform_3(%arg0: i32, %arg1: i32, %arg2: i32) -> (i32, i32) {
    %c0_i32 = arith.constant 0 : i32
    return %arg0, %arg1 : i32, i32
  }
}

module attributes {stable_mosaic.version = 11 : i64} {
  func.func @_linear_kernel(%arg0: i32, %arg1: i32, %arg2: i32, %arg3: memref<2x32xbf16, #tpu.memory_space<vmem>>, %arg4: memref<32x32xbf16, #tpu.memory_space<vmem>>, %arg5: memref<1x32xf32, #tpu.memory_space<vmem>>, %arg6: memref<2x32xbf16, #tpu.memory_space<vmem>>, %arg7: memref<2x32xf32, #tpu.memory_space<vmem>>) attributes {dimension_semantics = [#tpu.dimension_semantics<parallel>, #tpu.dimension_semantics<parallel>, #tpu.dimension_semantics<arbitrary>], iteration_bounds = array<i64: 1, 1, 1>, scalar_prefetch = 0 : i64, scratch_operands = 1 : i64, tpu.core_type = #tpu.core_type<tc>, window_params = [{transform_indices = @transform_0, window_bounds = array<i64: 2, 32>}, {transform_indices = @transform_1, window_bounds = array<i64: 32, 32>}, {transform_indices = @transform_2, window_bounds = array<i64: 1, 32>}, {transform_indices = @transform_3, window_bounds = array<i64: 2, 32>}]} {
    %c0_i32 = arith.constant 0 : i32
    %0 = arith.cmpi eq, %arg2, %c0_i32 : i32
    %1 = arith.extui %0 : i1 to i32
    %c0_i32_0 = arith.constant 0 : i32
    %2 = arith.cmpi ne, %1, %c0_i32_0 : i32
    scf.if %2 {
      %cst_10 = arith.constant 0.000000e+00 : f32
      %12 = vector.broadcast %cst_10 : f32 to vector<2x32xf32>
      %c0_11 = arith.constant 0 : index
      %c0_12 = arith.constant 0 : index
      %13 = vector.load %arg7[%c0_11, %c0_12] : memref<2x32xf32, #tpu.memory_space<vmem>>, vector<2x32xf32>
      tpu.vector_store %arg7[%c0_11, %c0_12], %12 {strides = array<i32>} : memref<2x32xf32, #tpu.memory_space<vmem>>, vector<2x32xf32>,
    } else {
    }
    %c0 = arith.constant 0 : index
    %c0_1 = arith.constant 0 : index
    %3 = vector.load %arg7[%c0, %c0_1] : memref<2x32xf32, #tpu.memory_space<vmem>>, vector<2x32xf32>
    %c0_2 = arith.constant 0 : index
    %c0_3 = arith.constant 0 : index
    %4 = vector.load %arg3[%c0_2, %c0_3] : memref<2x32xbf16, #tpu.memory_space<vmem>>, vector<2x32xbf16>
    %c0_4 = arith.constant 0 : index
    %c0_5 = arith.constant 0 : index
    %5 = vector.load %arg4[%c0_4, %c0_5] : memref<32x32xbf16, #tpu.memory_space<vmem>>, vector<32x32xbf16>
    %cst = arith.constant dense<0.000000e+00> : vector<2x32xf32>
    %6 = tpu.matmul %4, %5, %cst {dimension_numbers = #tpu.dot_dimension_numbers<[1], [0], [0], [1], [0, 0, 1, 1], [], []>} : vector<2x32xbf16>, vector<32x32xbf16>, vector<2x32xf32> -> vector<2x32xf32>
    %7 = arith.addf %3, %6 : vector<2x32xf32>
    %c0_6 = arith.constant 0 : index
    %c0_7 = arith.constant 0 : index
    %8 = vector.load %arg7[%c0_6, %c0_7] : memref<2x32xf32, #tpu.memory_space<vmem>>, vector<2x32xf32>
    tpu.vector_store %arg7[%c0_6, %c0_7], %7 {strides = array<i32>} : memref<2x32xf32, #tpu.memory_space<vmem>>, vector<2x32xf32>,
    %c0_i32_8 = arith.constant 0 : i32
    %9 = arith.cmpi eq, %arg2, %c0_i32_8 : i32
    %10 = arith.extui %9 : i1 to i32
    %c0_i32_9 = arith.constant 0 : i32
    %11 = arith.cmpi ne, %10, %c0_i32_9 : i32
    scf.if %11 {
      %c0_10 = arith.constant 0 : index
      %c0_11 = arith.constant 0 : index
      %12 = vector.load %arg7[%c0_10, %c0_11] : memref<2x32xf32, #tpu.memory_space<vmem>>, vector<2x32xf32>
      %c0_12 = arith.constant 0 : index
      %c0_13 = arith.constant 0 : index
      %13 = vector.load %arg5[%c0_12, %c0_13] : memref<1x32xf32, #tpu.memory_space<vmem>>, vector<1x32xf32>
      %14 = vector.broadcast %13 : vector<1x32xf32> to vector<2x32xf32>
      %15 = arith.addf %12, %14 : vector<2x32xf32>
      %16 = math.tanh %15 : vector<2x32xf32>
      %17 = arith.truncf %16 : vector<2x32xf32> to vector<2x32xbf16>
      %c0_14 = arith.constant 0 : index
      %c0_15 = arith.constant 0 : index
      %18 = vector.load %arg6[%c0_14, %c0_15] : memref<2x32xbf16, #tpu.memory_space<vmem>>, vector<2x32xbf16>
      tpu.vector_store %arg6[%c0_14, %c0_15], %17 {strides = array<i32>} : memref<2x32xbf16, #tpu.memory_space<vmem>>, vector<2x32xbf16>,
    } else {
    }
    return
  }
  func.func @transform_0(%arg0: i32, %arg1: i32, %arg2: i32) -> (i32, i32) {
    %c0_i32 = arith.constant 0 : i32
    return %arg0, %arg2 : i32, i32
  }
  func.func @transform_1(%arg0: i32, %arg1: i32, %arg2: i32) -> (i32, i32) {
    %c0_i32 = arith.constant 0 : i32
    return %arg2, %arg1 : i32, i32
  }
  func.func @transform_2(%arg0: i32, %arg1: i32, %arg2: i32) -> (i32, i32) {
    %c0_i32 = arith.constant 0 : i32
    %c0_i32_0 = arith.constant 0 : i32
    return %c0_i32, %arg1 : i32, i32
  }
  func.func @transform_3(%arg0: i32, %arg1: i32, %arg2: i32) -> (i32, i32) {
    %c0_i32 = arith.constant 0 : i32
    return %arg0, %arg1 : i32, i32
  }
}

module attributes {stable_mosaic.version = 11 : i64} {
  func.func @_sent_diff_kernel(%arg0: i32, %arg1: memref<1x1x8xi32, #tpu.memory_space<vmem>>, %arg2: memref<8x32xbf16, #tpu.memory_space<vmem>>, %arg3: memref<1x1x32xbf16, #tpu.memory_space<vmem>>) attributes {dimension_semantics = [#tpu.dimension_semantics<parallel>], iteration_bounds = array<i64: 2>, scalar_prefetch = 0 : i64, scratch_operands = 0 : i64, tpu.core_type = #tpu.core_type<tc>, window_params = [{transform_indices = @transform_0, window_bounds = array<i64: 1, 1, 8>}, {transform_indices = @transform_1, window_bounds = array<i64: 8, 32>}, {transform_indices = @transform_2, window_bounds = array<i64: 1, 1, 32>}]} {
    %c0 = arith.constant 0 : index
    %c0_0 = arith.constant 0 : index
    %c0_1 = arith.constant 0 : index
    %0 = vector.load %arg1[%c0, %c0_0, %c0_1] : memref<1x1x8xi32, #tpu.memory_space<vmem>>, vector<1x1x8xi32>
    %1 = vector.shape_cast %0 : vector<1x1x8xi32> to vector<1x8xi32>
    %c0_2 = arith.constant 0 : index
    %c0_3 = arith.constant 0 : index
    %2 = vector.load %arg2[%c0_2, %c0_3] : memref<8x32xbf16, #tpu.memory_space<vmem>>, vector<8x32xbf16>
    %3 = arith.extf %2 : vector<8x32xbf16> to vector<8x32xf32>
    %4 = tpu.iota {dimensions = array<i32: 1>} : vector<1x8xi32>
    %c102_i32 = arith.constant 102 : i32
    %5 = vector.broadcast %c102_i32 : i32 to vector<1x8xi32>
    %6 = arith.cmpi eq, %1, %5 : vector<1x8xi32>
    %7 = arith.extui %6 : vector<1x8xi1> to vector<1x8xi32>
    %8 = vector.shape_cast %7 : vector<1x8xi32> to vector<1x1x8xi32>
    %cst = arith.constant dense<0> : vector<1xi32>
    %9 = vector.multi_reduction <add>, %8, %cst [1, 2] : vector<1x1x8xi32> to vector<1xi32>
    %10 = vector.shape_cast %9 : vector<1xi32> to vector<1x1x1xi32>
    %11 = vector.extract %10[0, 0, 0] : i32 from vector<1x1x1xi32>
    %c8_i32 = arith.constant 8 : i32
    %12 = vector.broadcast %c8_i32 : i32 to vector<1x8xi32>
    %13 = arith.select %6, %4, %12 : vector<1x8xi1>, vector<1x8xi32>
    %14 = vector.shape_cast %13 : vector<1x8xi32> to vector<1x1x8xi32>
    %cst_4 = arith.constant dense<2147483647> : vector<1xi32>
    %15 = vector.multi_reduction <minsi>, %14, %cst_4 [1, 2] : vector<1x1x8xi32> to vector<1xi32>
    %16 = vector.shape_cast %15 : vector<1xi32> to vector<1x1x1xi32>
    %17 = vector.extract %16[0, 0, 0] : i32 from vector<1x1x1xi32>
    %18 = vector.broadcast %17 : i32 to vector<1x8xi32>
    %19 = arith.cmpi sgt, %4, %18 : vector<1x8xi32>
    %20 = arith.andi %6, %19 : vector<1x8xi1>
    %c8_i32_5 = arith.constant 8 : i32
    %21 = vector.broadcast %c8_i32_5 : i32 to vector<1x8xi32>
    %22 = arith.select %20, %4, %21 : vector<1x8xi1>, vector<1x8xi32>
    %23 = vector.shape_cast %22 : vector<1x8xi32> to vector<1x1x8xi32>
    %cst_6 = arith.constant dense<2147483647> : vector<1xi32>
    %24 = vector.multi_reduction <minsi>, %23, %cst_6 [1, 2] : vector<1x1x8xi32> to vector<1xi32>
    %25 = vector.shape_cast %24 : vector<1xi32> to vector<1x1x1xi32>
    %26 = vector.extract %25[0, 0, 0] : i32 from vector<1x1x1xi32>
    %c1_i32 = arith.constant 1 : i32
    %27 = vector.broadcast %c1_i32 : i32 to vector<1x8xi32>
    %28 = arith.cmpi sge, %4, %27 : vector<1x8xi32>
    %29 = vector.broadcast %17 : i32 to vector<1x8xi32>
    %30 = arith.cmpi slt, %4, %29 : vector<1x8xi32>
    %31 = arith.andi %28, %30 : vector<1x8xi1>
    %32 = arith.extui %31 : vector<1x8xi1> to vector<1x8xi32>
    %33 = arith.sitofp %32 : vector<1x8xi32> to vector<1x8xf32>
    %c1_i32_7 = arith.constant 1 : i32
    %34 = arith.addi %17, %c1_i32_7 : i32
    %35 = vector.broadcast %34 : i32 to vector<1x8xi32>
    %36 = arith.cmpi sge, %4, %35 : vector<1x8xi32>
    %37 = vector.broadcast %26 : i32 to vector<1x8xi32>
    %38 = arith.cmpi slt, %4, %37 : vector<1x8xi32>
    %39 = arith.andi %36, %38 : vector<1x8xi1>
    %40 = arith.extui %39 : vector<1x8xi1> to vector<1x8xi32>
    %41 = arith.sitofp %40 : vector<1x8xi32> to vector<1x8xf32>
    %42 = vector.shape_cast %33 : vector<1x8xf32> to vector<1x1x8xf32>
    %cst_8 = arith.constant dense<0.000000e+00> : vector<1xf32>
    %43 = vector.multi_reduction <add>, %42, %cst_8 [1, 2] : vector<1x1x8xf32> to vector<1xf32>
    %44 = vector.shape_cast %43 : vector<1xf32> to vector<1x1x1xf32>
    %45 = vector.extract %44[0, 0, 0] : f32 from vector<1x1x1xf32>
    %cst_9 = arith.constant 1.000000e+00 : f32
    %46 = arith.maximumf %45, %cst_9 : f32
    %47 = vector.shape_cast %41 : vector<1x8xf32> to vector<1x1x8xf32>
    %cst_10 = arith.constant dense<0.000000e+00> : vector<1xf32>
    %48 = vector.multi_reduction <add>, %47, %cst_10 [1, 2] : vector<1x1x8xf32> to vector<1xf32>
    %49 = vector.shape_cast %48 : vector<1xf32> to vector<1x1x1xf32>
    %50 = vector.extract %49[0, 0, 0] : f32 from vector<1x1x1xf32>
    %cst_11 = arith.constant 1.000000e+00 : f32
    %51 = arith.maximumf %50, %cst_11 : f32
    %cst_12 = arith.constant dense<0.000000e+00> : vector<1x32xf32>
    %52 = tpu.matmul %33, %3, %cst_12 {dimension_numbers = #tpu.dot_dimension_numbers<[1], [0], [0], [1], [0, 0, 1, 1], [], []>} : vector<1x8xf32>, vector<8x32xf32>, vector<1x32xf32> -> vector<1x32xf32>
    %53 = vector.broadcast %46 : f32 to vector<1x32xf32>
    %54 = arith.divf %52, %53 : vector<1x32xf32>
    %cst_13 = arith.constant dense<0.000000e+00> : vector<1x32xf32>
    %55 = tpu.matmul %41, %3, %cst_13 {dimension_numbers = #tpu.dot_dimension_numbers<[1], [0], [0], [1], [0, 0, 1, 1], [], []>} : vector<1x8xf32>, vector<8x32xf32>, vector<1x32xf32> -> vector<1x32xf32>
    %56 = vector.broadcast %51 : f32 to vector<1x32xf32>
    %57 = arith.divf %55, %56 : vector<1x32xf32>
    %58 = arith.subf %54, %57 : vector<1x32xf32>
    %59 = math.absf %58 : vector<1x32xf32>
    %c2_i32 = arith.constant 2 : i32
    %60 = arith.cmpi sge, %11, %c2_i32 : i32
    %cst_14 = arith.constant 0.000000e+00 : f32
    %61 = vector.broadcast %cst_14 : f32 to vector<1x32xf32>
    %62 = arith.select %60, %59, %61 : vector<1x32xf32>
    %63 = arith.truncf %62 : vector<1x32xf32> to vector<1x32xbf16>
    %c0_15 = arith.constant 0 : index
    %c0_16 = arith.constant 0 : index
    %c0_17 = arith.constant 0 : index
    %64 = vector.load %arg3[%c0_15, %c0_16, %c0_17] : memref<1x1x32xbf16, #tpu.memory_space<vmem>>, vector<1x1x32xbf16>
    %65 = vector.shape_cast %64 : vector<1x1x32xbf16> to vector<1x32xbf16>
    %66 = vector.shape_cast %63 : vector<1x32xbf16> to vector<1x1x32xbf16>
    tpu.vector_store %arg3[%c0_15, %c0_16, %c0_17], %66 {strides = array<i32>} : memref<1x1x32xbf16, #tpu.memory_space<vmem>>, vector<1x1x32xbf16>,
    return
  }
  func.func @transform_0(%arg0: i32) -> (i32, i32, i32) {
    %c0_i32 = arith.constant 0 : i32
    %c0_i32_0 = arith.constant 0 : i32
    %c0_i32_1 = arith.constant 0 : i32
    return %arg0, %c0_i32, %c0_i32_0 : i32, i32, i32
  }
  func.func @transform_1(%arg0: i32) -> (i32, i32) {
    %c0_i32 = arith.constant 0 : i32
    %c0_i32_0 = arith.constant 0 : i32
    return %arg0, %c0_i32 : i32, i32
  }
  func.func @transform_2(%arg0: i32) -> (i32, i32, i32) {
    %c0_i32 = arith.constant 0 : i32
    %c0_i32_0 = arith.constant 0 : i32
    %c0_i32_1 = arith.constant 0 : i32
    return %arg0, %c0_i32, %c0_i32_0 : i32, i32, i32
  }
}

module attributes {stable_mosaic.version = 11 : i64} {
  func.func @_classifier_kernel(%arg0: i32, %arg1: memref<2x128xbf16, #tpu.memory_space<vmem>>, %arg2: memref<128x32xbf16, #tpu.memory_space<vmem>>, %arg3: memref<1x32xf32, #tpu.memory_space<vmem>>, %arg4: memref<32x128xbf16, #tpu.memory_space<vmem>>, %arg5: memref<1x128xf32, #tpu.memory_space<vmem>>, %arg6: memref<128x128xbf16, #tpu.memory_space<vmem>>, %arg7: memref<1x128xf32, #tpu.memory_space<vmem>>, %arg8: memref<128x128xbf16, #tpu.memory_space<vmem>>, %arg9: memref<1x128xf32, #tpu.memory_space<vmem>>, %arg10: memref<2x128xf32, #tpu.memory_space<vmem>>) attributes {dimension_semantics = [#tpu.dimension_semantics<arbitrary>], iteration_bounds = array<i64: 1>, scalar_prefetch = 0 : i64, scratch_operands = 0 : i64, tpu.core_type = #tpu.core_type<tc>, window_params = [{pipeline_mode = #tpu.pipeline_mode<synchronous>, transform_indices = @transform_0, window_bounds = array<i64: 2, 128>}, {pipeline_mode = #tpu.pipeline_mode<synchronous>, transform_indices = @transform_1, window_bounds = array<i64: 128, 32>}, {pipeline_mode = #tpu.pipeline_mode<synchronous>, transform_indices = @transform_2, window_bounds = array<i64: 1, 32>}, {pipeline_mode = #tpu.pipeline_mode<synchronous>, transform_indices = @transform_3, window_bounds = array<i64: 32, 128>}, {pipeline_mode = #tpu.pipeline_mode<synchronous>, transform_indices = @transform_4, window_bounds = array<i64: 1, 128>}, {pipeline_mode = #tpu.pipeline_mode<synchronous>, transform_indices = @transform_5, window_bounds = array<i64: 128, 128>}, {pipeline_mode = #tpu.pipeline_mode<synchronous>, transform_indices = @transform_6, window_bounds = array<i64: 1, 128>}, {pipeline_mode = #tpu.pipeline_mode<synchronous>, transform_indices = @transform_7, window_bounds = array<i64: 128, 128>}, {pipeline_mode = #tpu.pipeline_mode<synchronous>, transform_indices = @transform_8, window_bounds = array<i64: 1, 128>}, {pipeline_mode = #tpu.pipeline_mode<synchronous>, transform_indices = @transform_9, window_bounds = array<i64: 2, 128>}]} {
    %c0 = arith.constant 0 : index
    %c0_0 = arith.constant 0 : index
    %0 = vector.load %arg1[%c0, %c0_0] : memref<2x128xbf16, #tpu.memory_space<vmem>>, vector<2x128xbf16>
    %c0_1 = arith.constant 0 : index
    %c0_2 = arith.constant 0 : index
    %1 = vector.load %arg2[%c0_1, %c0_2] : memref<128x32xbf16, #tpu.memory_space<vmem>>, vector<128x32xbf16>
    %cst = arith.constant dense<0.000000e+00> : vector<2x32xf32>
    %2 = tpu.matmul %0, %1, %cst {dimension_numbers = #tpu.dot_dimension_numbers<[1], [0], [0], [1], [0, 0, 1, 1], [], []>} : vector<2x128xbf16>, vector<128x32xbf16>, vector<2x32xf32> -> vector<2x32xf32>
    %c0_3 = arith.constant 0 : index
    %c0_4 = arith.constant 0 : index
    %3 = vector.load %arg3[%c0_3, %c0_4] : memref<1x32xf32, #tpu.memory_space<vmem>>, vector<1x32xf32>
    %4 = vector.broadcast %3 : vector<1x32xf32> to vector<2x32xf32>
    %5 = arith.addf %2, %4 : vector<2x32xf32>
    %cst_5 = arith.constant 0.000000e+00 : f32
    %6 = vector.broadcast %cst_5 : f32 to vector<2x32xf32>
    %7 = arith.maximumf %5, %6 : vector<2x32xf32>
    %8 = math.tanh %7 : vector<2x32xf32>
    %c0_6 = arith.constant 0 : index
    %c0_7 = arith.constant 0 : index
    %9 = vector.load %arg4[%c0_6, %c0_7] : memref<32x128xbf16, #tpu.memory_space<vmem>>, vector<32x128xbf16>
    %10 = arith.truncf %8 : vector<2x32xf32> to vector<2x32xbf16>
    %cst_8 = arith.constant dense<0.000000e+00> : vector<2x128xf32>
    %11 = tpu.matmul %10, %9, %cst_8 {dimension_numbers = #tpu.dot_dimension_numbers<[1], [0], [0], [1], [0, 0, 1, 1], [], []>} : vector<2x32xbf16>, vector<32x128xbf16>, vector<2x128xf32> -> vector<2x128xf32>
    %c0_9 = arith.constant 0 : index
    %c0_10 = arith.constant 0 : index
    %12 = vector.load %arg5[%c0_9, %c0_10] : memref<1x128xf32, #tpu.memory_space<vmem>>, vector<1x128xf32>
    %13 = vector.broadcast %12 : vector<1x128xf32> to vector<2x128xf32>
    %14 = arith.addf %11, %13 : vector<2x128xf32>
    %cst_11 = arith.constant 0.000000e+00 : f32
    %15 = vector.broadcast %cst_11 : f32 to vector<2x128xf32>
    %16 = arith.maximumf %14, %15 : vector<2x128xf32>
    %c0_12 = arith.constant 0 : index
    %c0_13 = arith.constant 0 : index
    %17 = vector.load %arg6[%c0_12, %c0_13] : memref<128x128xbf16, #tpu.memory_space<vmem>>, vector<128x128xbf16>
    %18 = arith.truncf %16 : vector<2x128xf32> to vector<2x128xbf16>
    %cst_14 = arith.constant dense<0.000000e+00> : vector<2x128xf32>
    %19 = tpu.matmul %18, %17, %cst_14 {dimension_numbers = #tpu.dot_dimension_numbers<[1], [0], [0], [1], [0, 0, 1, 1], [], []>} : vector<2x128xbf16>, vector<128x128xbf16>, vector<2x128xf32> -> vector<2x128xf32>
    %c0_15 = arith.constant 0 : index
    %c0_16 = arith.constant 0 : index
    %20 = vector.load %arg7[%c0_15, %c0_16] : memref<1x128xf32, #tpu.memory_space<vmem>>, vector<1x128xf32>
    %21 = vector.broadcast %20 : vector<1x128xf32> to vector<2x128xf32>
    %22 = arith.addf %19, %21 : vector<2x128xf32>
    %cst_17 = arith.constant 0.000000e+00 : f32
    %23 = vector.broadcast %cst_17 : f32 to vector<2x128xf32>
    %24 = arith.maximumf %22, %23 : vector<2x128xf32>
    %c0_18 = arith.constant 0 : index
    %c0_19 = arith.constant 0 : index
    %25 = vector.load %arg8[%c0_18, %c0_19] : memref<128x128xbf16, #tpu.memory_space<vmem>>, vector<128x128xbf16>
    %26 = arith.truncf %24 : vector<2x128xf32> to vector<2x128xbf16>
    %cst_20 = arith.constant dense<0.000000e+00> : vector<2x128xf32>
    %27 = tpu.matmul %26, %25, %cst_20 {dimension_numbers = #tpu.dot_dimension_numbers<[1], [0], [0], [1], [0, 0, 1, 1], [], []>} : vector<2x128xbf16>, vector<128x128xbf16>, vector<2x128xf32> -> vector<2x128xf32>
    %c0_21 = arith.constant 0 : index
    %c0_22 = arith.constant 0 : index
    %28 = vector.load %arg9[%c0_21, %c0_22] : memref<1x128xf32, #tpu.memory_space<vmem>>, vector<1x128xf32>
    %29 = vector.broadcast %28 : vector<1x128xf32> to vector<2x128xf32>
    %30 = arith.addf %27, %29 : vector<2x128xf32>
    %c0_23 = arith.constant 0 : index
    %c0_24 = arith.constant 0 : index
    %31 = vector.load %arg10[%c0_23, %c0_24] : memref<2x128xf32, #tpu.memory_space<vmem>>, vector<2x128xf32>
    tpu.vector_store %arg10[%c0_23, %c0_24], %30 {strides = array<i32>} : memref<2x128xf32, #tpu.memory_space<vmem>>, vector<2x128xf32>,
    return
  }
  func.func @transform_0(%arg0: i32) -> (i32, i32) {
    %c0_i32 = arith.constant 0 : i32
    %c0_i32_0 = arith.constant 0 : i32
    %c0_i32_1 = arith.constant 0 : i32
    return %c0_i32, %c0_i32_0 : i32, i32
  }
  func.func @transform_1(%arg0: i32) -> (i32, i32) {
    %c0_i32 = arith.constant 0 : i32
    %c0_i32_0 = arith.constant 0 : i32
    %c0_i32_1 = arith.constant 0 : i32
    return %c0_i32, %c0_i32_0 : i32, i32
  }
  func.func @transform_2(%arg0: i32) -> (i32, i32) {
    %c0_i32 = arith.constant 0 : i32
    %c0_i32_0 = arith.constant 0 : i32
    %c0_i32_1 = arith.constant 0 : i32
    return %c0_i32, %c0_i32_0 : i32, i32
  }
  func.func @transform_3(%arg0: i32) -> (i32, i32) {
    %c0_i32 = arith.constant 0 : i32
    %c0_i32_0 = arith.constant 0 : i32
    %c0_i32_1 = arith.constant 0 : i32
    return %c0_i32, %c0_i32_0 : i32, i32
  }
  func.func @transform_4(%arg0: i32) -> (i32, i32) {
    %c0_i32 = arith.constant 0 : i32
    %c0_i32_0 = arith.constant 0 : i32
    %c0_i32_1 = arith.constant 0 : i32
    return %c0_i32, %c0_i32_0 : i32, i32
  }
  func.func @transform_5(%arg0: i32) -> (i32, i32) {
    %c0_i32 = arith.constant 0 : i32
    %c0_i32_0 = arith.constant 0 : i32
    %c0_i32_1 = arith.constant 0 : i32
    return %c0_i32, %c0_i32_0 : i32, i32
  }
  func.func @transform_6(%arg0: i32) -> (i32, i32) {
    %c0_i32 = arith.constant 0 : i32
    %c0_i32_0 = arith.constant 0 : i32
    %c0_i32_1 = arith.constant 0 : i32
    return %c0_i32, %c0_i32_0 : i32, i32
  }
  func.func @transform_7(%arg0: i32) -> (i32, i32) {
    %c0_i32 = arith.constant 0 : i32
    %c0_i32_0 = arith.constant 0 : i32
    %c0_i32_1 = arith.constant 0 : i32
    return %c0_i32, %c0_i32_0 : i32, i32
  }
  func.func @transform_8(%arg0: i32) -> (i32, i32) {
    %c0_i32 = arith.constant 0 : i32
    %c0_i32_0 = arith.constant 0 : i32
    %c0_i32_1 = arith.constant 0 : i32
    return %c0_i32, %c0_i32_0 : i32, i32
  }
  func.func @transform_9(%arg0: i32) -> (i32, i32) {
    %c0_i32 = arith.constant 0 : i32
    %c0_i32_0 = arith.constant 0 : i32
    %c0_i32_1 = arith.constant 0 : i32
    return %c0_i32, %c0_i32_0 : i32, i32
  }
}

</mosaic_0001>

<llo_original>
// kernel: bert_classifier_forward.21
$region0: #{bert_classifier_forward.21}
  #allocation0 [shape = 'u32[]', space=smem, size = 0x4, offset = 0x4, fixed_abs, tag = 'smem constant byte address 0x4 - core index']
  #allocation1 [shape = 'u32[144,128]{1,0:T(1,128)}', space=vmem, size = 0x12000, scoped, tag = 'internal scratch']
  #allocation2 [shape = 'f32[16,96]{1,0:T(8,128)}', space=vmem, size = 0x2000, scoped, tag = 'scratch operand']
  %s0 = inlined_call_operand.vmem [shape: bf16[16,32], index: 0, kind: input, shape index: {}]
  %s1 = inlined_call_operand.vmem [shape: bf16[32,96], index: 1, kind: input, shape index: {}]
  %s2 = inlined_call_operand.vmem [shape: f32[1,96], index: 2, kind: input, shape index: {}]
  %s3 = inlined_call_operand.vmem [shape: bf16[16,96], index: 3, kind: output, shape index: {}]
  %s4 = sld [smem:[#allocation0]]
  $region30: #{bert_classifier_forward.21} parent=0
    _
  %s6 = ssub.s32 1, %s4
  %s7 = scalar_select 0, %s6, %s4
  // Predicated region
  $region2: #{bert_classifier_forward.21} parent=0 // pred_check
    _
  $region3: #{bert_classifier_forward.21} parent=0 // pred_check_branch
    %9 = sbr.rel (0) target = $region5
  $region4: #{bert_classifier_forward.21} parent=0 // pred_region
    _
  $region5: #{bert_classifier_forward.21} parent=0 // pred_fallthru
    _
  // Predicated region
  $region6: #{bert_classifier_forward.21} parent=0 // pred_check
    _
  $region7: #{bert_classifier_forward.21} parent=0 // pred_check_branch
    %11 = sbr.rel (0) target = $region9
  $region8: #{bert_classifier_forward.21} parent=0 // pred_region
    _
  $region9: #{bert_classifier_forward.21} parent=0 // pred_fallthru
    _
  // Predicated region
  $region10: #{bert_classifier_forward.21} parent=0 // pred_check
    _
  $region11: #{bert_classifier_forward.21} parent=0 // pred_check_branch
    %13 = sbr.rel (0) target = $region13
  $region12: #{bert_classifier_forward.21} parent=0 // pred_region
    _
  $region13: #{bert_classifier_forward.21} parent=0 // pred_fallthru
    _
  %p15 = scmp.eq.s32.totalorder 0, 0
  // Predicated region
  $region14: #{bert_classifier_forward.21} parent=0 // pred_check
    %p16 = pneg %p15
  $region15: #{bert_classifier_forward.21} parent=0 // pred_check_branch
    %18 = sbr.rel (%p16) target = $region17
  $region16: #{bert_classifier_forward.21} parent=0 // pred_region
    %vm19 = vcmask 785408
    %20 = vst.msk [vmem:[#allocation2] sm:$0xff] %vm19, 0.0
    %21 = vst.msk [vmem:[#allocation2 + $0x8] sm:$0xff] %vm19, 0.0
  $region17: #{bert_classifier_forward.21} parent=0 // pred_fallthru
    _
  %v22 = vld [vmem:[#allocation2] sm:$0xff]
  %v23 = vld [vmem:[#allocation2 + $0x8] sm:$0xff]
  %v24 = vld [vmem:[%s0] sm:$0xf]
  %v25 = vld [vmem:[%s0 + $0x4] sm:$0xf]
  %v26 = vld [vmem:[%s1] sm:$0xf]
  %v27 = vld [vmem:[%s1 + $0x4] sm:$0xf]
  %v28 = vld [vmem:[%s1 + $0x8] sm:$0xf]
  %v29 = vld [vmem:[%s1 + $0xc] sm:$0xf]
  %v32 = vunpack.c.l.b16 %v24
  %v33 = vunpack.c.l.b16 %v25
  %v34 = vpack.c.b16 %v33, %v32
  %v39 = vunpack.c.l.b16 %v26
  %v40 = vunpack.c.l.b16 %v27
  %v41 = vunpack.c.l.b16 %v28
  %v42 = vunpack.c.l.b16 %v29
  %v43 = vpack.c.b16 %v40, %v39
  %v44 = vpack.c.b16 %v42, %v41
  %vm47 = vcmask 261120
  %v49 = vsel %vm47, %v34, 0
  %51 = vmatprep.subr.bf16.mxu0 0
  %52 = vmatpush1.bf16.msra.mxu0 0
  %53 = vmatprep.subr.bf16.mxu0 0
  %54 = vmatpush1.bf16.msra.mxu0 0
  %55 = vmatprep.subr.bf16.mxu0 0
  %56 = vmatpush1.bf16.msra.mxu0 0
  %57 = vmatprep.subr.bf16.mxu0 0
  %58 = vmatpush1.bf16.msra.mxu0 0
  %59 = vmatprep.subr.bf16.mxu0 0
  %60 = vmatpush1.bf16.msra.mxu0 0
  %61 = vmatprep.subr.bf16.mxu0 0
  %62 = vmatpush1.bf16.msra.mxu0 0
  %63 = vmatprep.subr.bf16.mxu0 0
  %64 = vmatpush1.bf16.msra.mxu0 %v44
  %65 = vmatprep.subr.bf16.mxu0 0
  %66 = vmatpush1.bf16.msra.mxu0 %v43
  %67 = vmatprep.subr.bf16.mxu0 0
  %68 = vmatpush2.bf16.msra.mxu0 0
  %69 = vmatprep.subr.bf16.mxu0 0
  %70 = vmatpush2.bf16.msra.mxu0 0
  %71 = vmatprep.subr.bf16.mxu0 0
  %72 = vmatpush2.bf16.msra.mxu0 0
  %73 = vmatprep.subr.bf16.mxu0 0
  %74 = vmatpush2.bf16.msra.mxu0 0
  %75 = vmatprep.subr.bf16.mxu0 0
  %76 = vmatpush2.bf16.msra.mxu0 0
  %77 = vmatprep.subr.bf16.mxu0 0
  %78 = vmatpush2.bf16.msra.mxu0 0
  %79 = vmatprep.subr.bf16.mxu0 0
  %80 = vmatpush2.bf16.msra.mxu0 0
  %81 = vmatprep.subr.bf16.mxu0 0
  %82 = vmatpush2.bf16.msra.mxu0 0
  %83 = vmatprep.mubr.bf16.mxu0 0
  %84 = vmatmul.mubr.bf16.gmra.mxu0 %v49
  %v85 = vpop.f32.mrf.mxu0
  %v86 = vadd.f32 0.0, %v85
  %v87 = vpop.f32.mrf.mxu0
  %v88 = vpop.f32.mrf.mxu0
  %v89 = vadd.f32 0.0, %v88
  %v90 = vpop.f32.mrf.mxu0
  %91 = vdwg.mxu0
  %v92 = vadd.f32 %v22, %v86
  %v93 = vadd.f32 %v23, %v89
  %vm94 = vcmask 785408
  %95 = vst.msk [vmem:[#allocation2] sm:$0xff] %vm94, %v92
  %96 = vst.msk [vmem:[#allocation2 + $0x8] sm:$0xff] %vm94, %v93
  // Predicated region
  $region18: #{bert_classifier_forward.21} parent=0 // pred_check
    %p97 = pneg %p15
  $region19: #{bert_classifier_forward.21} parent=0 // pred_check_branch
    %99 = sbr.rel (%p97) target = $region21
  $region20: #{bert_classifier_forward.21} parent=0 // pred_region
    %v100 = vld [vmem:[#allocation2] sm:$0xff]
    %v101 = vld [vmem:[#allocation2 + $0x8] sm:$0xff]
    %v102 = vld [vmem:[%s2] sm:$0x1]
    %v104 = vlaneseq
    %v105 = vshrl.u32 %v104, 7
    %v106 = vsub.s32 0, %v105
    %v107 = vrot.slane %v102, %v106
    %v109 = vadd.f32 %v100, %v107
    %v110 = vadd.f32 %v101, %v107
    %v111 = vpack.c.bf16 %v110, %v109
    %v113 = vunpack.c.l.b16 %v111
    %v114 = vunpack.c.h.b16 %v111
    %v115 = vpack.c.b16 %v113, %v113
    %v116 = vpack.c.b16 %v114, %v114
    %vm119 = vcmask 781312
    %120 = vst.msk [vmem:[%s3] sm:$0xf] %vm119, %v115
    %121 = vst.msk [vmem:[%s3 + $0x4] sm:$0xf] %vm119, %v116
  $region21: #{bert_classifier_forward.21} parent=0 // pred_fallthru
    _
  // Predicated region
  $region22: #{bert_classifier_forward.21} parent=0 // pred_check
    _
  $region23: #{bert_classifier_forward.21} parent=0 // pred_check_branch
    %123 = sbr.rel (0) target = $region25
  $region24: #{bert_classifier_forward.21} parent=0 // pred_region
    _
  $region25: #{bert_classifier_forward.21} parent=0 // pred_fallthru
    _
  // Predicated region
  $region26: #{bert_classifier_forward.21} parent=0 // pred_check
    _
  $region27: #{bert_classifier_forward.21} parent=0 // pred_check_branch
    %125 = sbr.rel (0) target = $region29
  $region28: #{bert_classifier_forward.21} parent=0 // pred_region
    _
  $region29: #{bert_classifier_forward.21} parent=0 // pred_fallthru
    _

// kernel: bert_classifier_forward.23
$region0: #{bert_classifier_forward.23}
  #allocation0 [shape = 'u32[]', space=smem, size = 0x4, offset = 0x4, fixed_abs, tag = 'smem constant byte address 0x4 - core index']
  #allocation1 [shape = 'u32[144,128]{1,0:T(1,128)}', space=vmem, size = 0x12000, scoped, tag = 'internal scratch']
  #allocation2 [shape = 'f32[16,32]{1,0:T(8,128)}', space=vmem, size = 0x2000, scoped, tag = 'scratch operand']
  %s0 = inlined_call_operand.vmem [shape: bf16[16,32], index: 0, kind: input, shape index: {}]
  %s1 = inlined_call_operand.vmem [shape: bf16[32,32], index: 1, kind: input, shape index: {}]
  %s2 = inlined_call_operand.vmem [shape: f32[1,32], index: 2, kind: input, shape index: {}]
  %s3 = inlined_call_operand.vmem [shape: bf16[16,32], index: 3, kind: input, shape index: {}]
  %s4 = inlined_call_operand.vmem [shape: f32[1,32], index: 4, kind: input, shape index: {}]
  %s5 = inlined_call_operand.vmem [shape: f32[1,32], index: 5, kind: input, shape index: {}]
  %s6 = inlined_call_operand.vmem [shape: bf16[16,32], index: 6, kind: output, shape index: {}]
  %s7 = sld [smem:[#allocation0]]
  $region42: #{bert_classifier_forward.23} parent=0
    _
  %s9 = ssub.s32 1, %s7
  %s10 = scalar_select 0, %s9, %s7
  // Predicated region
  $region2: #{bert_classifier_forward.23} parent=0 // pred_check
    _
  $region3: #{bert_classifier_forward.23} parent=0 // pred_check_branch
    %12 = sbr.rel (0) target = $region5
  $region4: #{bert_classifier_forward.23} parent=0 // pred_region
    _
  $region5: #{bert_classifier_forward.23} parent=0 // pred_fallthru
    _
  // Predicated region
  $region6: #{bert_classifier_forward.23} parent=0 // pred_check
    _
  $region7: #{bert_classifier_forward.23} parent=0 // pred_check_branch
    %14 = sbr.rel (0) target = $region9
  $region8: #{bert_classifier_forward.23} parent=0 // pred_region
    _
  $region9: #{bert_classifier_forward.23} parent=0 // pred_fallthru
    _
  // Predicated region
  $region10: #{bert_classifier_forward.23} parent=0 // pred_check
    _
  $region11: #{bert_classifier_forward.23} parent=0 // pred_check_branch
    %16 = sbr.rel (0) target = $region13
  $region12: #{bert_classifier_forward.23} parent=0 // pred_region
    _
  $region13: #{bert_classifier_forward.23} parent=0 // pred_fallthru
    _
  // Predicated region
  $region14: #{bert_classifier_forward.23} parent=0 // pred_check
    _
  $region15: #{bert_classifier_forward.23} parent=0 // pred_check_branch
    %18 = sbr.rel (0) target = $region17
  $region16: #{bert_classifier_forward.23} parent=0 // pred_region
    _
  $region17: #{bert_classifier_forward.23} parent=0 // pred_fallthru
    _
  // Predicated region
  $region18: #{bert_classifier_forward.23} parent=0 // pred_check
    _
  $region19: #{bert_classifier_forward.23} parent=0 // pred_check_branch
    %20 = sbr.rel (0) target = $region21
  $region20: #{bert_classifier_forward.23} parent=0 // pred_region
    _
  $region21: #{bert_classifier_forward.23} parent=0 // pred_fallthru
    _
  // Predicated region
  $region22: #{bert_classifier_forward.23} parent=0 // pred_check
    _
  $region23: #{bert_classifier_forward.23} parent=0 // pred_check_branch
    %22 = sbr.rel (0) target = $region25
  $region24: #{bert_classifier_forward.23} parent=0 // pred_region
    _
  $region25: #{bert_classifier_forward.23} parent=0 // pred_fallthru
    _
  %p24 = scmp.eq.s32.totalorder 0, 0
  // Predicated region
  $region26: #{bert_classifier_forward.23} parent=0 // pred_check
    %p25 = pneg %p24
  $region27: #{bert_classifier_forward.23} parent=0 // pred_check_branch
    %27 = sbr.rel (%p25) target = $region29
  $region28: #{bert_classifier_forward.23} parent=0 // pred_region
    %vm28 = vcmask 261120
    %29 = vst.msk [vmem:[#allocation2] sm:$0xff] %vm28, 0.0
    %30 = vst.msk [vmem:[#allocation2 + $0x8] sm:$0xff] %vm28, 0.0
  $region29: #{bert_classifier_forward.23} parent=0 // pred_fallthru
    _
  %v31 = vld [vmem:[#allocation2] sm:$0xff]
  %v32 = vld [vmem:[#allocation2 + $0x8] sm:$0xff]
  %v33 = vld [vmem:[%s0] sm:$0xf]
  %v34 = vld [vmem:[%s0 + $0x4] sm:$0xf]
  %v35 = vld [vmem:[%s1] sm:$0xf]
  %v36 = vld [vmem:[%s1 + $0x4] sm:$0xf]
  %v37 = vld [vmem:[%s1 + $0x8] sm:$0xf]
  %v38 = vld [vmem:[%s1 + $0xc] sm:$0xf]
  %v41 = vunpack.c.l.b16 %v33
  %v42 = vunpack.c.l.b16 %v34
  %v43 = vpack.c.b16 %v42, %v41
  %v48 = vunpack.c.l.b16 %v35
  %v49 = vunpack.c.l.b16 %v36
  %v50 = vunpack.c.l.b16 %v37
  %v51 = vunpack.c.l.b16 %v38
  %v52 = vpack.c.b16 %v49, %v48
  %v53 = vpack.c.b16 %v51, %v50
  %vm56 = vcmask 261120
  %v58 = vsel %vm56, %v43, 0
  %60 = vmatprep.subr.bf16.mxu0 0
  %61 = vmatpush1.bf16.msra.mxu0 0
  %62 = vmatprep.subr.bf16.mxu0 0
  %63 = vmatpush1.bf16.msra.mxu0 0
  %64 = vmatprep.subr.bf16.mxu0 0
  %65 = vmatpush1.bf16.msra.mxu0 0
  %66 = vmatprep.subr.bf16.mxu0 0
  %67 = vmatpush1.bf16.msra.mxu0 0
  %68 = vmatprep.subr.bf16.mxu0 0
  %69 = vmatpush1.bf16.msra.mxu0 0
  %70 = vmatprep.subr.bf16.mxu0 0
  %71 = vmatpush1.bf16.msra.mxu0 0
  %72 = vmatprep.subr.bf16.mxu0 0
  %73 = vmatpush1.bf16.msra.mxu0 %v53
  %74 = vmatprep.subr.bf16.mxu0 0
  %75 = vmatpush1.bf16.msra.mxu0 %v52
  %76 = vmatprep.subr.bf16.mxu0 0
  %77 = vmatpush2.bf16.msra.mxu0 0
  %78 = vmatprep.subr.bf16.mxu0 0
  %79 = vmatpush2.bf16.msra.mxu0 0
  %80 = vmatprep.subr.bf16.mxu0 0
  %81 = vmatpush2.bf16.msra.mxu0 0
  %82 = vmatprep.subr.bf16.mxu0 0
  %83 = vmatpush2.bf16.msra.mxu0 0
  %84 = vmatprep.subr.bf16.mxu0 0
  %85 = vmatpush2.bf16.msra.mxu0 0
  %86 = vmatprep.subr.bf16.mxu0 0
  %87 = vmatpush2.bf16.msra.mxu0 0
  %88 = vmatprep.subr.bf16.mxu0 0
  %89 = vmatpush2.bf16.msra.mxu0 0
  %90 = vmatprep.subr.bf16.mxu0 0
  %91 = vmatpush2.bf16.msra.mxu0 0
  %92 = vmatprep.mubr.bf16.mxu0 0
  %93 = vmatmul.mubr.bf16.gmra.mxu0 %v58
  %v94 = vpop.f32.mrf.mxu0
  %v95 = vadd.f32 0.0, %v94
  %v96 = vpop.f32.mrf.mxu0
  %v97 = vpop.f32.mrf.mxu0
  %v98 = vadd.f32 0.0, %v97
  %v99 = vpop.f32.mrf.mxu0
  %100 = vdwg.mxu0
  %v101 = vadd.f32 %v31, %v95
  %v102 = vadd.f32 %v32, %v98
  %103 = vst.msk [vmem:[#allocation2] sm:$0xff] %vm56, %v101
  %104 = vst.msk [vmem:[#allocation2 + $0x8] sm:$0xff] %vm56, %v102
  // Predicated region
  $region30: #{bert_classifier_forward.23} parent=0 // pred_check
    %p105 = pneg %p24
  $region31: #{bert_classifier_forward.23} parent=0 // pred_check_branch
    %107 = sbr.rel (%p105) target = $region33
  $region32: #{bert_classifier_forward.23} parent=0 // pred_region
    %v108 = vld [vmem:[#allocation2] sm:$0xff]
    %v109 = vld [vmem:[#allocation2 + $0x8] sm:$0xff]
    %v110 = vld [vmem:[%s2] sm:$0x1]
    %v112 = vlaneseq
    %v113 = vshrl.u32 %v112, 7
    %v114 = vsub.s32 0, %v113
    %v115 = vrot.slane %v110, %v114
    %v117 = vadd.f32 %v108, %v115
    %v118 = vadd.f32 %v109, %v115
    %v119 = vld [vmem:[%s3] sm:$0xf]
    %v120 = vld [vmem:[%s3 + $0x4] sm:$0xf]
    %v121 = vunpack.c.l.bf16 %v119
    %v122 = vunpack.c.l.bf16 %v120
    %v123 = vadd.f32 %v117, %v121
    %v124 = vadd.f32 %v118, %v122
    %v125 = vsel %vm56, %v123, 0.0
    %126 = vadd.xlane.f32.xlu0 %v125
    %v127 = vpop.xlane.xlu0 %126
    %v128 = vsel %vm56, %v124, 0.0
    %129 = vadd.xlane.f32.xlu0 %v128
    %v130 = vpop.xlane.xlu0 %129
    %v131 = vrcp.pop 32.0
    %v132 = vmul.f32 %v127, %v131
    %v133 = vmul.f32 %v130, %v131
    %v134 = vsub.f32 %v123, %v132
    %v135 = vsub.f32 %v124, %v133
    %v136 = vmul.f32 %v134, %v134
    %v137 = vmul.f32 %v135, %v135
    %v138 = vsel %vm56, %v136, 0.0
    %139 = vadd.xlane.f32.xlu0 %v138
    %v140 = vpop.xlane.xlu0 %139
    %v141 = vsel %vm56, %v137, 0.0
    %142 = vadd.xlane.f32.xlu0 %v141
    %v143 = vpop.xlane.xlu0 %142
    %v144 = vmul.f32 %v140, %v131
    %v145 = vmul.f32 %v143, %v131
    %v146 = vadd.f32 %v144, 1e-12
    %v147 = vadd.f32 %v145, 1e-12
    %v148 = vrsqrt.pop %v146
    %v149 = vrsqrt.pop %v147
    %v150 = vmul.f32 %v134, %v148
    %v151 = vmul.f32 %v135, %v149
    %v152 = vld [vmem:[%s4] sm:$0x1]
    %v154 = vlaneseq
    %v155 = vshrl.u32 %v154, 7
    %v156 = vsub.s32 0, %v155
    %v157 = vrot.slane %v152, %v156
    %v159 = vmul.f32 %v150, %v157
    %v160 = vmul.f32 %v151, %v157
    %v161 = vld [vmem:[%s5] sm:$0x1]
    %v163 = vlaneseq
    %v164 = vshrl.u32 %v163, 7
    %v165 = vsub.s32 0, %v164
    %v166 = vrot.slane %v161, %v165
    %v168 = vadd.f32 %v159, %v166
    %v169 = vadd.f32 %v160, %v166
    %v170 = vpack.c.bf16 %v169, %v168
    %v172 = vunpack.c.l.b16 %v170
    %v173 = vunpack.c.h.b16 %v170
    %v174 = vpack.c.b16 %v172, %v172
    %v175 = vpack.c.b16 %v173, %v173
    %vm178 = vcmask 257024
    %179 = vst.msk [vmem:[%s6] sm:$0xf] %vm178, %v174
    %180 = vst.msk [vmem:[%s6 + $0x4] sm:$0xf] %vm178, %v175
  $region33: #{bert_classifier_forward.23} parent=0 // pred_fallthru
    _
  // Predicated region
  $region34: #{bert_classifier_forward.23} parent=0 // pred_check
    _
  $region35: #{bert_classifier_forward.23} parent=0 // pred_check_branch
    %182 = sbr.rel (0) target = $region37
  $region36: #{bert_classifier_forward.23} parent=0 // pred_region
    _
  $region37: #{bert_classifier_forward.23} parent=0 // pred_fallthru
    _
  // Predicated region
  $region38: #{bert_classifier_forward.23} parent=0 // pred_check
    _
  $region39: #{bert_classifier_forward.23} parent=0 // pred_check_branch
    %184 = sbr.rel (0) target = $region41
  $region40: #{bert_classifier_forward.23} parent=0 // pred_region
    _
  $region41: #{bert_classifier_forward.23} parent=0 // pred_fallthru
    _

// kernel: bert_classifier_forward.20
$region0: #{bert_classifier_forward.20}
  #allocation0 [shape = 'u32[]', space=smem, size = 0x4, offset = 0x4, fixed_abs, tag = 'smem constant byte address 0x4 - core index']
  #allocation1 [shape = 'u32[144,128]{1,0:T(1,128)}', space=vmem, size = 0x12000, scoped, tag = 'internal scratch']
  %s0 = inlined_call_operand.vmem [shape: bf16[16,32], index: 0, kind: input, shape index: {}]
  %s1 = inlined_call_operand.vmem [shape: f32[1,32], index: 1, kind: input, shape index: {}]
  %s2 = inlined_call_operand.vmem [shape: f32[1,32], index: 2, kind: input, shape index: {}]
  %s3 = inlined_call_operand.vmem [shape: bf16[16,32], index: 3, kind: output, shape index: {}]
  %s4 = sld [smem:[#allocation0]]
  $region22: #{bert_classifier_forward.20} parent=0
    _
  %s6 = ssub.s32 1, %s4
  %s7 = scalar_select 0, %s6, %s4
  // Predicated region
  $region2: #{bert_classifier_forward.20} parent=0 // pred_check
    _
  $region3: #{bert_classifier_forward.20} parent=0 // pred_check_branch
    %9 = sbr.rel (0) target = $region5
  $region4: #{bert_classifier_forward.20} parent=0 // pred_region
    _
  $region5: #{bert_classifier_forward.20} parent=0 // pred_fallthru
    _
  // Predicated region
  $region6: #{bert_classifier_forward.20} parent=0 // pred_check
    _
  $region7: #{bert_classifier_forward.20} parent=0 // pred_check_branch
    %11 = sbr.rel (0) target = $region9
  $region8: #{bert_classifier_forward.20} parent=0 // pred_region
    _
  $region9: #{bert_classifier_forward.20} parent=0 // pred_fallthru
    _
  // Predicated region
  $region10: #{bert_classifier_forward.20} parent=0 // pred_check
    _
  $region11: #{bert_classifier_forward.20} parent=0 // pred_check_branch
    %13 = sbr.rel (0) target = $region13
  $region12: #{bert_classifier_forward.20} parent=0 // pred_region
    _
  $region13: #{bert_classifier_forward.20} parent=0 // pred_fallthru
    _
  %v14 = vld [vmem:[%s0] sm:$0xf]
  %v15 = vld [vmem:[%s0 + $0x4] sm:$0xf]
  %v16 = vunpack.c.l.bf16 %v14
  %v17 = vunpack.c.l.bf16 %v15
  %vm18 = vcmask 261120
  %v19 = vsel %vm18, %v16, 0.0
  %20 = vadd.xlane.f32.xlu0 %v19
  %v21 = vpop.xlane.xlu0 %20
  %v22 = vsel %vm18, %v17, 0.0
  %23 = vadd.xlane.f32.xlu0 %v22
  %v24 = vpop.xlane.xlu0 %23
  %v25 = vrcp.pop 32.0
  %v26 = vmul.f32 %v21, %v25
  %v27 = vmul.f32 %v24, %v25
  %v28 = vsub.f32 %v16, %v26
  %v29 = vsub.f32 %v17, %v27
  %v30 = vmul.f32 %v28, %v28
  %v31 = vmul.f32 %v29, %v29
  %v32 = vsel %vm18, %v30, 0.0
  %33 = vadd.xlane.f32.xlu0 %v32
  %v34 = vpop.xlane.xlu0 %33
  %v35 = vsel %vm18, %v31, 0.0
  %36 = vadd.xlane.f32.xlu0 %v35
  %v37 = vpop.xlane.xlu0 %36
  %v38 = vmul.f32 %v34, %v25
  %v39 = vmul.f32 %v37, %v25
  %v40 = vadd.f32 %v38, 1e-12
  %v41 = vadd.f32 %v39, 1e-12
  %v42 = vrsqrt.pop %v40
  %v43 = vrsqrt.pop %v41
  %v44 = vmul.f32 %v28, %v42
  %v45 = vmul.f32 %v29, %v43
  %v46 = vld [vmem:[%s1] sm:$0x1]
  %v48 = vlaneseq
  %v49 = vshrl.u32 %v48, 7
  %v50 = vsub.s32 0, %v49
  %v51 = vrot.slane %v46, %v50
  %v53 = vmul.f32 %v44, %v51
  %v54 = vmul.f32 %v45, %v51
  %v55 = vld [vmem:[%s2] sm:$0x1]
  %v57 = vlaneseq
  %v58 = vshrl.u32 %v57, 7
  %v59 = vsub.s32 0, %v58
  %v60 = vrot.slane %v55, %v59
  %v62 = vadd.f32 %v53, %v60
  %v63 = vadd.f32 %v54, %v60
  %v64 = vpack.c.bf16 %v63, %v62
  %v66 = vunpack.c.l.b16 %v64
  %v67 = vunpack.c.h.b16 %v64
  %v68 = vpack.c.b16 %v66, %v66
  %v69 = vpack.c.b16 %v67, %v67
  %vm72 = vcmask 257024
  %73 = vst.msk [vmem:[%s3] sm:$0xf] %vm72, %v68
  %74 = vst.msk [vmem:[%s3 + $0x4] sm:$0xf] %vm72, %v69
  // Predicated region
  $region14: #{bert_classifier_forward.20} parent=0 // pred_check
    _
  $region15: #{bert_classifier_forward.20} parent=0 // pred_check_branch
    %76 = sbr.rel (0) target = $region17
  $region16: #{bert_classifier_forward.20} parent=0 // pred_region
    _
  $region17: #{bert_classifier_forward.20} parent=0 // pred_fallthru
    _
  // Predicated region
  $region18: #{bert_classifier_forward.20} parent=0 // pred_check
    _
  $region19: #{bert_classifier_forward.20} parent=0 // pred_check_branch
    %78 = sbr.rel (0) target = $region21
  $region20: #{bert_classifier_forward.20} parent=0 // pred_region
    _
  $region21: #{bert_classifier_forward.20} parent=0 // pred_fallthru
    _

// kernel: bert_classifier_forward.22
$region0: #{bert_classifier_forward.22}
  #allocation0 [shape = 'u32[]', space=smem, size = 0x4, offset = 0x4, fixed_abs, tag = 'smem constant byte address 0x4 - core index']
  #allocation1 [shape = 'u32[144,128]{1,0:T(1,128)}', space=vmem, size = 0x12000, scoped, tag = 'internal scratch']
  %s0 = inlined_call_operand.vmem [shape: bf16[16,96], index: 0, kind: input, shape index: {}]
  %s1 = inlined_call_operand.vmem [shape: f32[2,1,8], index: 1, kind: input, shape index: {}]
  %s2 = inlined_call_operand.vmem [shape: bf16[16,32], index: 2, kind: output, shape index: {}]
  %s3 = sld [smem:[#allocation0]]
  $region41: #{bert_classifier_forward.22} parent=0
    _
  %s5 = ssub.s32 1, %s3
  %s6 = scalar_select 0, %s5, %s3
  loop: start=0, step=1, limit=4
  $region2: #{bert_classifier_forward.22} parent=0 // loop_pre_header
    _
  $region3: #{bert_classifier_forward.22} parent=0 // loop_header
    %s8 = sphi 0, %s12
    %p9 = scmp.ge.s32.totalorder %s8, 4
    %s18 = sphi 0, %s20
    %s21 = sphi 0, %s18
    %s22 = sphi 0, %s21
    %s38 = sphi 0, %s22
    %s44 = sphi 0, %s46
    %s47 = sphi 0, %s44
    %s48 = sphi 0, %s47
    %s64 = sphi 0, %s48
    %s70 = sphi 0, %s72
    %s73 = sphi 0, %s70
    %s74 = sphi 0, %s73
    %s90 = sphi 0, %s74
  $region4: #{bert_classifier_forward.22} parent=0 // loop_header_branch
    %11 = sbr.rel (%p9) target = $region8
  $region5: #{bert_classifier_forward.22} parent=0 // loop_body
    %s13 = ssub.s32 %s8, 1
    %s14 = ssub.s32 %s8, 2
    %s15 = sadd.s32 %s8, 1
    %s16 = ssub.s32 %s8, %s15
    %p17 = scmp.eq.s32.totalorder %s16, 0
    %s19 = sadd.s32 %s18, 1
    %s20 = scalar_select %p17, %s18, %s19
    %p23 = pneg %p17
    %p24 = scmp.eq.s32.totalorder %s8, 1
    %p25 = por %p23, %p24
    %p26 = scmp.ne.s32.totalorder %s18, %s21
    %p27 = scmp.eq.s32.totalorder %s8, 0
    %p28 = por %p26, %p27
    %p29 = scmp.ne.s32.totalorder %s18, %s21
    %p30 = scmp.eq.s32.totalorder %s13, 1
    %p31 = por %p29, %p30
    %p32 = scmp.ne.s32.totalorder %s21, %s22
    %p33 = scmp.eq.s32.totalorder %s13, 0
    %p34 = por %p32, %p33
    %p35 = scmp.ne.s32.totalorder %s21, %s22
    %p36 = scmp.eq.s32.totalorder %s14, 1
    %p37 = por %p35, %p36
    %p39 = scmp.ne.s32.totalorder %s22, %s38
    %p40 = scmp.eq.s32.totalorder %s14, 0
    %p41 = por %p39, %p40
    %s42 = ssub.s32 %s8, %s15
    %p43 = scmp.eq.s32.totalorder %s42, 0
    %s45 = sadd.s32 %s44, 1
    %s46 = scalar_select %p43, %s44, %s45
    %p49 = pneg %p43
    %p50 = scmp.eq.s32.totalorder %s8, 1
    %p51 = por %p49, %p50
    %p52 = scmp.ne.s32.totalorder %s44, %s47
    %p53 = scmp.eq.s32.totalorder %s8, 0
    %p54 = por %p52, %p53
    %p55 = scmp.ne.s32.totalorder %s44, %s47
    %p56 = scmp.eq.s32.totalorder %s13, 1
    %p57 = por %p55, %p56
    %p58 = scmp.ne.s32.totalorder %s47, %s48
    %p59 = scmp.eq.s32.totalorder %s13, 0
    %p60 = por %p58, %p59
    %p61 = scmp.ne.s32.totalorder %s47, %s48
    %p62 = scmp.eq.s32.totalorder %s14, 1
    %p63 = por %p61, %p62
    %p65 = scmp.ne.s32.totalorder %s48, %s64
    %p66 = scmp.eq.s32.totalorder %s14, 0
    %p67 = por %p65, %p66
    %s68 = ssub.s32 %s8, %s15
    %p69 = scmp.eq.s32.totalorder %s68, 0
    %s71 = sadd.s32 %s70, 1
    %s72 = scalar_select %p69, %s70, %s71
    %p75 = pneg %p69
    %p76 = scmp.eq.s32.totalorder %s8, 1
    %p77 = por %p75, %p76
    %p78 = scmp.ne.s32.totalorder %s70, %s73
    %p79 = scmp.eq.s32.totalorder %s8, 0
    %p80 = por %p78, %p79
    %p81 = scmp.ne.s32.totalorder %s70, %s73
    %p82 = scmp.eq.s32.totalorder %s13, 1
    %p83 = por %p81, %p82
    %p84 = scmp.ne.s32.totalorder %s73, %s74
    %p85 = scmp.eq.s32.totalorder %s13, 0
    %p86 = por %p84, %p85
    %p87 = scmp.ne.s32.totalorder %s73, %s74
    %p88 = scmp.eq.s32.totalorder %s14, 1
    %p89 = por %p87, %p88
    %p91 = scmp.ne.s32.totalorder %s74, %s90
    %p92 = scmp.eq.s32.totalorder %s14, 0
    %p93 = por %p91, %p92
    %p94 = scmp.le.s32.totalorder 1, %s8
    %p95 = scmp.lt.s32.totalorder %s8, 3
    %p96 = pnand %p94, %p95
    %p97 = pneg %p96
    // Predicated region
    $region9: #{bert_classifier_forward.22} parent=5 // pred_check
      _
    $region10: #{bert_classifier_forward.22} parent=5 // pred_check_branch
      %99 = sbr.rel (%p96) target = $region12
    $region11: #{bert_classifier_forward.22} parent=5 // pred_region
      %s100 = ssub.s32 %s8, 1
    $region12: #{bert_classifier_forward.22} parent=5 // pred_fallthru
      _
    %p101 = scmp.lt.s32.totalorder %s8, 2
    // Predicated region
    $region13: #{bert_classifier_forward.22} parent=5 // pred_check
      %p102 = pneg %p101
    $region14: #{bert_classifier_forward.22} parent=5 // pred_check_branch
      %104 = sbr.rel (%p102) target = $region16
    $region15: #{bert_classifier_forward.22} parent=5 // pred_region
      // Predicated region
      $region17: #{bert_classifier_forward.22} parent=15 // pred_check
        %p105 = pneg %p28
      $region18: #{bert_classifier_forward.22} parent=15 // pred_check_branch
        %107 = sbr.rel (%p105) target = $region20
      $region19: #{bert_classifier_forward.22} parent=15 // pred_region
        %p108 = scmp.lt.s32.totalorder %s8, 1
        %s109 = scalar_select %p108, %s8, 1
        %s110 = smul.addr %s109, 4
        %s111 = scalar_lea.vmem %s0, %s110
      $region20: #{bert_classifier_forward.22} parent=15 // pred_fallthru
        _
      // Predicated region
      $region21: #{bert_classifier_forward.22} parent=15 // pred_check
        %p112 = pneg %p54
      $region22: #{bert_classifier_forward.22} parent=15 // pred_check_branch
        %114 = sbr.rel (%p112) target = $region24
      $region23: #{bert_classifier_forward.22} parent=15 // pred_region
        %p115 = scmp.lt.s32.totalorder %s8, 1
        %s116 = scalar_select %p115, %s8, 1
        %s117 = scalar_lea.vmem %s1, %s116
      $region24: #{bert_classifier_forward.22} parent=15 // pred_fallthru
        _
    $region16: #{bert_classifier_forward.22} parent=5 // pred_fallthru
      _
    %p118 = scmp.le.s32.totalorder 1, %s8
    %p119 = scmp.lt.s32.totalorder %s8, 3
    %p120 = pnand %p118, %p119
    %p121 = pneg %p120
    // Predicated region
    $region25: #{bert_classifier_forward.22} parent=5 // pred_check
      _
    $region26: #{bert_classifier_forward.22} parent=5 // pred_check_branch
      %123 = sbr.rel (%p120) target = $region28
    $region27: #{bert_classifier_forward.22} parent=5 // pred_region
      %s124 = ssub.s32 %s8, 1
      %p125 = scmp.lt.s32.totalorder %s13, 1
      %s126 = scalar_select %p125, %s13, 1
      %s127 = smul.addr %s126, 4
      %s128 = scalar_lea.vmem %s0, %s127
      %p129 = pneg %p34
      %p130 = pneg %p31
      %p131 = scmp.lt.s32.totalorder %s13, 1
      %s132 = scalar_select %p131, %s13, 1
      %s133 = scalar_lea.vmem %s1, %s132
      %p134 = pneg %p60
      %p135 = pneg %p57
      %p136 = pneg %p86
      %p137 = pneg %p83
      %p138 = scmp.lt.s32.totalorder %s13, 1
      %s139 = scalar_select %p138, %s13, 1
      %s140 = smul.addr %s139, 4
      %s141 = scalar_lea.vmem %s2, %s140
      %p142 = scmp.lt.s32.totalorder %s13, 1
      %s143 = scalar_select %p142, %s13, 1
      %s144 = smul.addr %s143, 4
      %s145 = scalar_lea.vmem %s0, %s144
      %p146 = scmp.lt.s32.totalorder %s13, 1
      %s147 = scalar_select %p146, %s13, 1
      %s148 = scalar_lea.vmem %s1, %s147
      %p149 = scmp.lt.s32.totalorder %s13, 1
      %s150 = scalar_select %p149, %s13, 1
      %s151 = smul.addr %s150, 4
      %s152 = scalar_lea.vmem %s2, %s151
      %v155 = vld [vmem:[%s148] sm:$0x1]
      %v156 = vld [vmem:[%s145] sm:$0xf]
      %v157 = vmul.bf16 %v156, 1052065461
      %v159 = vlaneseq
      %v160 = vshrl.u32 %v159, 7
      %v161 = vsub.s32 0, %v160
      %v162 = vrot.slane %v155, %v161
      %v165 = vunpack.c.l.b16 %v156
      %v166 = vpack.c.b16 %v165, %v165
      %167 = vrot.lane.b32.xlu0 %v166, 96
      %v168 = vpop.permute.xlu0 %167
      %vm169 = vcmask 64512
      %v171 = vsel %vm169, %v157, 0
      %v174 = vsel %vm169, %v168, 0
      %176 = vmatprep.subr.bf16.mxu0 0
      %177 = vmatpush1.bf16.xpose.msra.mxu0 0
      %178 = vmatprep.subr.bf16.mxu0 0
      %179 = vmatpush1.bf16.xpose.msra.mxu0 0
      %180 = vmatprep.subr.bf16.mxu0 0
      %181 = vmatpush1.bf16.xpose.msra.mxu0 0
      %182 = vmatprep.subr.bf16.mxu0 0
      %183 = vmatpush1.bf16.xpose.msra.mxu0 0
      %184 = vmatprep.subr.bf16.mxu0 0
      %185 = vmatpush1.bf16.xpose.msra.mxu0 0
      %186 = vmatprep.subr.bf16.mxu0 0
      %187 = vmatpush1.bf16.xpose.msra.mxu0 0
      %188 = vmatprep.subr.bf16.mxu0 0
      %189 = vmatpush1.bf16.xpose.msra.mxu0 0
      %190 = vmatprep.subr.bf16.mxu0 0
      %191 = vmatpush1.bf16.xpose.msra.mxu0 %v174
      %192 = vmatprep.subr.bf16.mxu0 0
      %193 = vmatpush2.bf16.xpose.msra.mxu0 0
      %194 = vmatprep.subr.bf16.mxu0 0
      %195 = vmatpush2.bf16.xpose.msra.mxu0 0
      %196 = vmatprep.subr.bf16.mxu0 0
      %197 = vmatpush2.bf16.xpose.msra.mxu0 0
      %198 = vmatprep.subr.bf16.mxu0 0
      %199 = vmatpush2.bf16.xpose.msra.mxu0 0
      %200 = vmatprep.subr.bf16.mxu0 0
      %201 = vmatpush2.bf16.xpose.msra.mxu0 0
      %202 = vmatprep.subr.bf16.mxu0 0
      %203 = vmatpush2.bf16.xpose.msra.mxu0 0
      %204 = vmatprep.subr.bf16.mxu0 0
      %205 = vmatpush2.bf16.xpose.msra.mxu0 0
      %206 = vmatprep.subr.bf16.mxu0 0
      %207 = vmatpush2.bf16.xpose.msra.mxu0 0
      %208 = vmatprep.mubr.bf16.mxu0 0
      %209 = vmatmul.mubr.bf16.gmra.mxu0 %v171
      %v210 = vpop.f32.mrf.mxu0
      %v211 = vadd.f32 %v162, %v210
      %v212 = vpop.f32.mrf.mxu0
      %v213 = vpop.f32.mrf.mxu0
      %v214 = vpop.f32.mrf.mxu0
      %215 = vdwg.mxu0
      %v216 = vsel %vm169, %v211, -inf
      %217 = vmax.xlane.f32.xlu0 %v216
      %v218 = vpop.xlane.xlu0 %217
      %v219 = vsub.f32 %v211, %v218
      %v220 = vmul.f32 %v219, 1.442695
      %v221 = vpow.pop %v220
      %v222 = vsel %vm169, %v221, 0.0
      %223 = vadd.xlane.f32.xlu0 %v222
      %v224 = vpop.xlane.xlu0 %223
      %v225 = vrcp.pop %v224
      %v226 = vmul.f32 %v221, %v225
      %v227 = vpack.c.bf16 %v226, %v226
      %228 = vrot.lane.b32.xlu0 %v166, 64
      %v229 = vpop.permute.xlu0 %228
      %v231 = vsel %vm169, %v227, 0
      %vm233 = vcmask 1043456
      %v235 = vsel %vm233, %v229, 0
      %237 = vmatprep.subr.bf16.mxu0 0
      %238 = vmatpush1.bf16.msra.mxu0 0
      %239 = vmatprep.subr.bf16.mxu0 0
      %240 = vmatpush1.bf16.msra.mxu0 0
      %241 = vmatprep.subr.bf16.mxu0 0
      %242 = vmatpush1.bf16.msra.mxu0 0
      %243 = vmatprep.subr.bf16.mxu0 0
      %244 = vmatpush1.bf16.msra.mxu0 0
      %245 = vmatprep.subr.bf16.mxu0 0
      %246 = vmatpush1.bf16.msra.mxu0 0
      %247 = vmatprep.subr.bf16.mxu0 0
      %248 = vmatpush1.bf16.msra.mxu0 0
      %249 = vmatprep.subr.bf16.mxu0 0
      %250 = vmatpush1.bf16.msra.mxu0 0
      %251 = vmatprep.subr.bf16.mxu0 0
      %252 = vmatpush1.bf16.msra.mxu0 %v235
      %253 = vmatprep.subr.bf16.mxu0 0
      %254 = vmatpush2.bf16.msra.mxu0 0
      %255 = vmatprep.subr.bf16.mxu0 0
      %256 = vmatpush2.bf16.msra.mxu0 0
      %257 = vmatprep.subr.bf16.mxu0 0
      %258 = vmatpush2.bf16.msra.mxu0 0
      %259 = vmatprep.subr.bf16.mxu0 0
      %260 = vmatpush2.bf16.msra.mxu0 0
      %261 = vmatprep.subr.bf16.mxu0 0
      %262 = vmatpush2.bf16.msra.mxu0 0
      %263 = vmatprep.subr.bf16.mxu0 0
      %264 = vmatpush2.bf16.msra.mxu0 0
      %265 = vmatprep.subr.bf16.mxu0 0
      %266 = vmatpush2.bf16.msra.mxu0 0
      %267 = vmatprep.subr.bf16.mxu0 0
      %268 = vmatpush2.bf16.msra.mxu0 0
      %269 = vmatprep.mubr.bf16.mxu0 0
      %270 = vmatmul.mubr.bf16.gmra.mxu0 %v231
      %v271 = vpop.f32.mrf.mxu0
      %v272 = vadd.f32 0.0, %v271
      %v273 = vpop.f32.mrf.mxu0
      %v274 = vpop.f32.mrf.mxu0
      %v275 = vpop.f32.mrf.mxu0
      %276 = vdwg.mxu0
      %v278 = vunpack.c.l.b16 %v157
      %v279 = vpack.c.b16 %v278, %v278
      %280 = vrot.lane.b32.xlu0 %v279, 120
      %v281 = vpop.permute.xlu0 %280
      %282 = vrot.lane.b32.xlu0 %v166, 88
      %v283 = vpop.permute.xlu0 %282
      %v285 = vsel %vm169, %v281, 0
      %v288 = vsel %vm169, %v283, 0
      %290 = vmatprep.subr.bf16.mxu0 0
      %291 = vmatpush1.bf16.xpose.msra.mxu0 0
      %292 = vmatprep.subr.bf16.mxu0 0
      %293 = vmatpush1.bf16.xpose.msra.mxu0 0
      %294 = vmatprep.subr.bf16.mxu0 0
      %295 = vmatpush1.bf16.xpose.msra.mxu0 0
      %296 = vmatprep.subr.bf16.mxu0 0
      %297 = vmatpush1.bf16.xpose.msra.mxu0 0
      %298 = vmatprep.subr.bf16.mxu0 0
      %299 = vmatpush1.bf16.xpose.msra.mxu0 0
      %300 = vmatprep.subr.bf16.mxu0 0
      %301 = vmatpush1.bf16.xpose.msra.mxu0 0
      %302 = vmatprep.subr.bf16.mxu0 0
      %303 = vmatpush1.bf16.xpose.msra.mxu0 0
      %304 = vmatprep.subr.bf16.mxu0 0
      %305 = vmatpush1.bf16.xpose.msra.mxu0 %v288
      %306 = vmatprep.subr.bf16.mxu0 0
      %307 = vmatpush2.bf16.xpose.msra.mxu0 0
      %308 = vmatprep.subr.bf16.mxu0 0
      %309 = vmatpush2.bf16.xpose.msra.mxu0 0
      %310 = vmatprep.subr.bf16.mxu0 0
      %311 = vmatpush2.bf16.xpose.msra.mxu0 0
      %312 = vmatprep.subr.bf16.mxu0 0
      %313 = vmatpush2.bf16.xpose.msra.mxu0 0
      %314 = vmatprep.subr.bf16.mxu0 0
      %315 = vmatpush2.bf16.xpose.msra.mxu0 0
      %316 = vmatprep.subr.bf16.mxu0 0
      %317 = vmatpush2.bf16.xpose.msra.mxu0 0
      %318 = vmatprep.subr.bf16.mxu0 0
      %319 = vmatpush2.bf16.xpose.msra.mxu0 0
      %320 = vmatprep.subr.bf16.mxu0 0
      %321 = vmatpush2.bf16.xpose.msra.mxu0 0
      %322 = vmatprep.mubr.bf16.mxu0 0
      %323 = vmatmul.mubr.bf16.gmra.mxu0 %v285
      %v324 = vpop.f32.mrf.mxu0
      %v325 = vadd.f32 %v162, %v324
      %v326 = vpop.f32.mrf.mxu0
      %v327 = vpop.f32.mrf.mxu0
      %v328 = vpop.f32.mrf.mxu0
      %329 = vdwg.mxu0
      %v330 = vsel %vm169, %v325, -inf
      %331 = vmax.xlane.f32.xlu0 %v330
      %v332 = vpop.xlane.xlu0 %331
      %v333 = vsub.f32 %v325, %v332
      %v334 = vmul.f32 %v333, 1.442695
      %v335 = vpow.pop %v334
      %v336 = vsel %vm169, %v335, 0.0
      %337 = vadd.xlane.f32.xlu0 %v336
      %v338 = vpop.xlane.xlu0 %337
      %v339 = vrcp.pop %v338
      %v340 = vmul.f32 %v335, %v339
      %v341 = vpack.c.bf16 %v340, %v340
      %342 = vrot.lane.b32.xlu0 %v166, 56
      %v343 = vpop.permute.xlu0 %342
      %v345 = vsel %vm169, %v341, 0
      %v348 = vsel %vm233, %v343, 0
      %350 = vmatprep.subr.bf16.mxu0 0
      %351 = vmatpush1.bf16.msra.mxu0 0
      %352 = vmatprep.subr.bf16.mxu0 0
      %353 = vmatpush1.bf16.msra.mxu0 0
      %354 = vmatprep.subr.bf16.mxu0 0
      %355 = vmatpush1.bf16.msra.mxu0 0
      %356 = vmatprep.subr.bf16.mxu0 0
      %357 = vmatpush1.bf16.msra.mxu0 0
      %358 = vmatprep.subr.bf16.mxu0 0
      %359 = vmatpush1.bf16.msra.mxu0 0
      %360 = vmatprep.subr.bf16.mxu0 0
      %361 = vmatpush1.bf16.msra.mxu0 0
      %362 = vmatprep.subr.bf16.mxu0 0
      %363 = vmatpush1.bf16.msra.mxu0 0
      %364 = vmatprep.subr.bf16.mxu0 0
      %365 = vmatpush1.bf16.msra.mxu0 %v348
      %366 = vmatprep.subr.bf16.mxu0 0
      %367 = vmatpush2.bf16.msra.mxu0 0
      %368 = vmatprep.subr.bf16.mxu0 0
      %369 = vmatpush2.bf16.msra.mxu0 0
      %370 = vmatprep.subr.bf16.mxu0 0
      %371 = vmatpush2.bf16.msra.mxu0 0
      %372 = vmatprep.subr.bf16.mxu0 0
      %373 = vmatpush2.bf16.msra.mxu0 0
      %374 = vmatprep.subr.bf16.mxu0 0
      %375 = vmatpush2.bf16.msra.mxu0 0
      %376 = vmatprep.subr.bf16.mxu0 0
      %377 = vmatpush2.bf16.msra.mxu0 0
      %378 = vmatprep.subr.bf16.mxu0 0
      %379 = vmatpush2.bf16.msra.mxu0 0
      %380 = vmatprep.subr.bf16.mxu0 0
      %381 = vmatpush2.bf16.msra.mxu0 0
      %382 = vmatprep.mubr.bf16.mxu0 0
      %383 = vmatmul.mubr.bf16.gmra.mxu0 %v345
      %v384 = vpop.f32.mrf.mxu0
      %v385 = vadd.f32 0.0, %v384
      %v386 = vpop.f32.mrf.mxu0
      %v387 = vpop.f32.mrf.mxu0
      %v388 = vpop.f32.mrf.mxu0
      %389 = vdwg.mxu0
      %390 = vrot.lane.b32.xlu0 %v279, 112
      %v391 = vpop.permute.xlu0 %390
      %392 = vrot.lane.b32.xlu0 %v166, 80
      %v393 = vpop.permute.xlu0 %392
      %v395 = vsel %vm169, %v391, 0
      %v398 = vsel %vm169, %v393, 0
      %400 = vmatprep.subr.bf16.mxu0 0
      %401 = vmatpush1.bf16.xpose.msra.mxu0 0
      %402 = vmatprep.subr.bf16.mxu0 0
      %403 = vmatpush1.bf16.xpose.msra.mxu0 0
      %404 = vmatprep.subr.bf16.mxu0 0
      %405 = vmatpush1.bf16.xpose.msra.mxu0 0
      %406 = vmatprep.subr.bf16.mxu0 0
      %407 = vmatpush1.bf16.xpose.msra.mxu0 0
      %408 = vmatprep.subr.bf16.mxu0 0
      %409 = vmatpush1.bf16.xpose.msra.mxu0 0
      %410 = vmatprep.subr.bf16.mxu0 0
      %411 = vmatpush1.bf16.xpose.msra.mxu0 0
      %412 = vmatprep.subr.bf16.mxu0 0
      %413 = vmatpush1.bf16.xpose.msra.mxu0 0
      %414 = vmatprep.subr.bf16.mxu0 0
      %415 = vmatpush1.bf16.xpose.msra.mxu0 %v398
      %416 = vmatprep.subr.bf16.mxu0 0
      %417 = vmatpush2.bf16.xpose.msra.mxu0 0
      %418 = vmatprep.subr.bf16.mxu0 0
      %419 = vmatpush2.bf16.xpose.msra.mxu0 0
      %420 = vmatprep.subr.bf16.mxu0 0
      %421 = vmatpush2.bf16.xpose.msra.mxu0 0
      %422 = vmatprep.subr.bf16.mxu0 0
      %423 = vmatpush2.bf16.xpose.msra.mxu0 0
      %424 = vmatprep.subr.bf16.mxu0 0
      %425 = vmatpush2.bf16.xpose.msra.mxu0 0
      %426 = vmatprep.subr.bf16.mxu0 0
      %427 = vmatpush2.bf16.xpose.msra.mxu0 0
      %428 = vmatprep.subr.bf16.mxu0 0
      %429 = vmatpush2.bf16.xpose.msra.mxu0 0
      %430 = vmatprep.subr.bf16.mxu0 0
      %431 = vmatpush2.bf16.xpose.msra.mxu0 0
      %432 = vmatprep.mubr.bf16.mxu0 0
      %433 = vmatmul.mubr.bf16.gmra.mxu0 %v395
      %v434 = vpop.f32.mrf.mxu0
      %v435 = vadd.f32 %v162, %v434
      %v436 = vpop.f32.mrf.mxu0
      %v437 = vpop.f32.mrf.mxu0
      %v438 = vpop.f32.mrf.mxu0
      %439 = vdwg.mxu0
      %v440 = vsel %vm169, %v435, -inf
      %441 = vmax.xlane.f32.xlu0 %v440
      %v442 = vpop.xlane.xlu0 %441
      %v443 = vsub.f32 %v435, %v442
      %v444 = vmul.f32 %v443, 1.442695
      %v445 = vpow.pop %v444
      %v446 = vsel %vm169, %v445, 0.0
      %447 = vadd.xlane.f32.xlu0 %v446
      %v448 = vpop.xlane.xlu0 %447
      %v449 = vrcp.pop %v448
      %v450 = vmul.f32 %v445, %v449
      %v451 = vpack.c.bf16 %v450, %v450
      %452 = vrot.lane.b32.xlu0 %v166, 48
      %v453 = vpop.permute.xlu0 %452
      %v455 = vsel %vm169, %v451, 0
      %v458 = vsel %vm233, %v453, 0
      %460 = vmatprep.subr.bf16.mxu0 0
      %461 = vmatpush1.bf16.msra.mxu0 0
      %462 = vmatprep.subr.bf16.mxu0 0
      %463 = vmatpush1.bf16.msra.mxu0 0
      %464 = vmatprep.subr.bf16.mxu0 0
      %465 = vmatpush1.bf16.msra.mxu0 0
      %466 = vmatprep.subr.bf16.mxu0 0
      %467 = vmatpush1.bf16.msra.mxu0 0
      %468 = vmatprep.subr.bf16.mxu0 0
      %469 = vmatpush1.bf16.msra.mxu0 0
      %470 = vmatprep.subr.bf16.mxu0 0
      %471 = vmatpush1.bf16.msra.mxu0 0
      %472 = vmatprep.subr.bf16.mxu0 0
      %473 = vmatpush1.bf16.msra.mxu0 0
      %474 = vmatprep.subr.bf16.mxu0 0
      %475 = vmatpush1.bf16.msra.mxu0 %v458
      %476 = vmatprep.subr.bf16.mxu0 0
      %477 = vmatpush2.bf16.msra.mxu0 0
      %478 = vmatprep.subr.bf16.mxu0 0
      %479 = vmatpush2.bf16.msra.mxu0 0
      %480 = vmatprep.subr.bf16.mxu0 0
      %481 = vmatpush2.bf16.msra.mxu0 0
      %482 = vmatprep.subr.bf16.mxu0 0
      %483 = vmatpush2.bf16.msra.mxu0 0
      %484 = vmatprep.subr.bf16.mxu0 0
      %485 = vmatpush2.bf16.msra.mxu0 0
      %486 = vmatprep.subr.bf16.mxu0 0
      %487 = vmatpush2.bf16.msra.mxu0 0
      %488 = vmatprep.subr.bf16.mxu0 0
      %489 = vmatpush2.bf16.msra.mxu0 0
      %490 = vmatprep.subr.bf16.mxu0 0
      %491 = vmatpush2.bf16.msra.mxu0 0
      %492 = vmatprep.mubr.bf16.mxu0 0
      %493 = vmatmul.mubr.bf16.gmra.mxu0 %v455
      %v494 = vpop.f32.mrf.mxu0
      %v495 = vadd.f32 0.0, %v494
      %v496 = vpop.f32.mrf.mxu0
      %v497 = vpop.f32.mrf.mxu0
      %v498 = vpop.f32.mrf.mxu0
      %499 = vdwg.mxu0
      %500 = vrot.lane.b32.xlu0 %v279, 104
      %v501 = vpop.permute.xlu0 %500
      %502 = vrot.lane.b32.xlu0 %v166, 72
      %v503 = vpop.permute.xlu0 %502
      %v505 = vsel %vm169, %v501, 0
      %v508 = vsel %vm169, %v503, 0
      %510 = vmatprep.subr.bf16.mxu0 0
      %511 = vmatpush1.bf16.xpose.msra.mxu0 0
      %512 = vmatprep.subr.bf16.mxu0 0
      %513 = vmatpush1.bf16.xpose.msra.mxu0 0
      %514 = vmatprep.subr.bf16.mxu0 0
      %515 = vmatpush1.bf16.xpose.msra.mxu0 0
      %516 = vmatprep.subr.bf16.mxu0 0
      %517 = vmatpush1.bf16.xpose.msra.mxu0 0
      %518 = vmatprep.subr.bf16.mxu0 0
      %519 = vmatpush1.bf16.xpose.msra.mxu0 0
      %520 = vmatprep.subr.bf16.mxu0 0
      %521 = vmatpush1.bf16.xpose.msra.mxu0 0
      %522 = vmatprep.subr.bf16.mxu0 0
      %523 = vmatpush1.bf16.xpose.msra.mxu0 0
      %524 = vmatprep.subr.bf16.mxu0 0
      %525 = vmatpush1.bf16.xpose.msra.mxu0 %v508
      %526 = vmatprep.subr.bf16.mxu0 0
      %527 = vmatpush2.bf16.xpose.msra.mxu0 0
      %528 = vmatprep.subr.bf16.mxu0 0
      %529 = vmatpush2.bf16.xpose.msra.mxu0 0
      %530 = vmatprep.subr.bf16.mxu0 0
      %531 = vmatpush2.bf16.xpose.msra.mxu0 0
      %532 = vmatprep.subr.bf16.mxu0 0
      %533 = vmatpush2.bf16.xpose.msra.mxu0 0
      %534 = vmatprep.subr.bf16.mxu0 0
      %535 = vmatpush2.bf16.xpose.msra.mxu0 0
      %536 = vmatprep.subr.bf16.mxu0 0
      %537 = vmatpush2.bf16.xpose.msra.mxu0 0
      %538 = vmatprep.subr.bf16.mxu0 0
      %539 = vmatpush2.bf16.xpose.msra.mxu0 0
      %540 = vmatprep.subr.bf16.mxu0 0
      %541 = vmatpush2.bf16.xpose.msra.mxu0 0
      %542 = vmatprep.mubr.bf16.mxu0 0
      %543 = vmatmul.mubr.bf16.gmra.mxu0 %v505
      %v544 = vpop.f32.mrf.mxu0
      %v545 = vadd.f32 %v162, %v544
      %v546 = vpop.f32.mrf.mxu0
      %v547 = vpop.f32.mrf.mxu0
      %v548 = vpop.f32.mrf.mxu0
      %549 = vdwg.mxu0
      %v550 = vsel %vm169, %v545, -inf
      %551 = vmax.xlane.f32.xlu0 %v550
      %v552 = vpop.xlane.xlu0 %551
      %v553 = vsub.f32 %v545, %v552
      %v554 = vmul.f32 %v553, 1.442695
      %v555 = vpow.pop %v554
      %v556 = vsel %vm169, %v555, 0.0
      %557 = vadd.xlane.f32.xlu0 %v556
      %v558 = vpop.xlane.xlu0 %557
      %v559 = vrcp.pop %v558
      %v560 = vmul.f32 %v555, %v559
      %v561 = vpack.c.bf16 %v560, %v560
      %562 = vrot.lane.b32.xlu0 %v166, 40
      %v563 = vpop.permute.xlu0 %562
      %v565 = vsel %vm169, %v561, 0
      %v568 = vsel %vm233, %v563, 0
      %570 = vmatprep.subr.bf16.mxu0 0
      %571 = vmatpush1.bf16.msra.mxu0 0
      %572 = vmatprep.subr.bf16.mxu0 0
      %573 = vmatpush1.bf16.msra.mxu0 0
      %574 = vmatprep.subr.bf16.mxu0 0
      %575 = vmatpush1.bf16.msra.mxu0 0
      %576 = vmatprep.subr.bf16.mxu0 0
      %577 = vmatpush1.bf16.msra.mxu0 0
      %578 = vmatprep.subr.bf16.mxu0 0
      %579 = vmatpush1.bf16.msra.mxu0 0
      %580 = vmatprep.subr.bf16.mxu0 0
      %581 = vmatpush1.bf16.msra.mxu0 0
      %582 = vmatprep.subr.bf16.mxu0 0
      %583 = vmatpush1.bf16.msra.mxu0 0
      %584 = vmatprep.subr.bf16.mxu0 0
      %585 = vmatpush1.bf16.msra.mxu0 %v568
      %586 = vmatprep.subr.bf16.mxu0 0
      %587 = vmatpush2.bf16.msra.mxu0 0
      %588 = vmatprep.subr.bf16.mxu0 0
      %589 = vmatpush2.bf16.msra.mxu0 0
      %590 = vmatprep.subr.bf16.mxu0 0
      %591 = vmatpush2.bf16.msra.mxu0 0
      %592 = vmatprep.subr.bf16.mxu0 0
      %593 = vmatpush2.bf16.msra.mxu0 0
      %594 = vmatprep.subr.bf16.mxu0 0
      %595 = vmatpush2.bf16.msra.mxu0 0
      %596 = vmatprep.subr.bf16.mxu0 0
      %597 = vmatpush2.bf16.msra.mxu0 0
      %598 = vmatprep.subr.bf16.mxu0 0
      %599 = vmatpush2.bf16.msra.mxu0 0
      %600 = vmatprep.subr.bf16.mxu0 0
      %601 = vmatpush2.bf16.msra.mxu0 0
      %602 = vmatprep.mubr.bf16.mxu0 0
      %603 = vmatmul.mubr.bf16.gmra.mxu0 %v565
      %v604 = vpop.f32.mrf.mxu0
      %v605 = vadd.f32 0.0, %v604
      %v606 = vpop.f32.mrf.mxu0
      %v607 = vpop.f32.mrf.mxu0
      %v608 = vpop.f32.mrf.mxu0
      %609 = vdwg.mxu0
      %611 = vrot.lane.b32.xlu0 %v385, 8
      %v612 = vpop.permute.xlu0 %611
      %615 = vrot.lane.b32.xlu0 %v495, 16
      %v616 = vpop.permute.xlu0 %615
      %619 = vrot.lane.b32.xlu0 %v605, 24
      %v620 = vpop.permute.xlu0 %619
      %v622 = vsel %vm169, %v272, %v612
      %vm623 = vcmask 130048
      %v624 = vsel %vm623, %v622, %v616
      %vm625 = vcmask 195584
      %v626 = vsel %vm625, %v624, %v620
      %v627 = vpack.c.bf16 %v626, %v626
      %vm628 = vcmask 257024
      %629 = vst.msk [vmem:[%s152] sm:$0xf] %vm628, %v627
      %p630 = scmp.lt.s32.totalorder %s13, 1
      %s631 = scalar_select %p630, %s13, 1
      %s632 = smul.addr %s631, 4
      %s633 = scalar_lea.vmem %s2, %s632
      // Predicated region
      $region29: #{bert_classifier_forward.22} parent=27 // pred_check
        %p634 = pneg %p83
      $region30: #{bert_classifier_forward.22} parent=27 // pred_check_branch
        %636 = sbr.rel (%p634) target = $region32
      $region31: #{bert_classifier_forward.22} parent=27 // pred_region
        _
      $region32: #{bert_classifier_forward.22} parent=27 // pred_fallthru
        _
    $region28: #{bert_classifier_forward.22} parent=5 // pred_fallthru
      _
    %p637 = scmp.le.s32.totalorder 2, %s8
    // Predicated region
    $region33: #{bert_classifier_forward.22} parent=5 // pred_check
      %p638 = pneg %p637
    $region34: #{bert_classifier_forward.22} parent=5 // pred_check_branch
      %640 = sbr.rel (%p638) target = $region36
    $region35: #{bert_classifier_forward.22} parent=5 // pred_region
      %s641 = ssub.s32 %s8, 2
      // Predicated region
      $region37: #{bert_classifier_forward.22} parent=35 // pred_check
        %p642 = pneg %p89
      $region38: #{bert_classifier_forward.22} parent=35 // pred_check_branch
        %644 = sbr.rel (%p642) target = $region40
      $region39: #{bert_classifier_forward.22} parent=35 // pred_region
        %p645 = scmp.lt.s32.totalorder %s14, 1
        %s646 = scalar_select %p645, %s14, 1
        %s647 = smul.addr %s646, 4
        %s648 = scalar_lea.vmem %s2, %s647
      $region40: #{bert_classifier_forward.22} parent=35 // pred_fallthru
        _
    $region36: #{bert_classifier_forward.22} parent=5 // pred_fallthru
      _
  $region6: #{bert_classifier_forward.22} parent=0 // loop_footer
    %s12 = sadd.s32 1, %s8
  $region7: #{bert_classifier_forward.22} parent=0 // loop_footer_branch
    %7 = sbr.rel target = $region3
  $region8: #{bert_classifier_forward.22} parent=0 // loop_exit
    _

// kernel: bert_classifier_forward.24
$region0: #{bert_classifier_forward.24}
  #allocation0 [shape = 'u32[]', space=smem, size = 0x4, offset = 0x4, fixed_abs, tag = 'smem constant byte address 0x4 - core index']
  #allocation1 [shape = 'u32[144,128]{1,0:T(1,128)}', space=vmem, size = 0x12000, scoped, tag = 'internal scratch']
  #allocation2 [shape = 'f32[16,64]{1,0:T(8,128)}', space=vmem, size = 0x2000, scoped, tag = 'scratch operand']
  %s0 = inlined_call_operand.vmem [shape: bf16[16,32], index: 0, kind: input, shape index: {}]
  %s1 = inlined_call_operand.vmem [shape: bf16[32,64], index: 1, kind: input, shape index: {}]
  %s2 = inlined_call_operand.vmem [shape: f32[1,64], index: 2, kind: input, shape index: {}]
  %s3 = inlined_call_operand.vmem [shape: bf16[16,64], index: 3, kind: output, shape index: {}]
  %s4 = sld [smem:[#allocation0]]
  $region30: #{bert_classifier_forward.24} parent=0
    _
  %s6 = ssub.s32 1, %s4
  %s7 = scalar_select 0, %s6, %s4
  // Predicated region
  $region2: #{bert_classifier_forward.24} parent=0 // pred_check
    _
  $region3: #{bert_classifier_forward.24} parent=0 // pred_check_branch
    %9 = sbr.rel (0) target = $region5
  $region4: #{bert_classifier_forward.24} parent=0 // pred_region
    _
  $region5: #{bert_classifier_forward.24} parent=0 // pred_fallthru
    _
  // Predicated region
  $region6: #{bert_classifier_forward.24} parent=0 // pred_check
    _
  $region7: #{bert_classifier_forward.24} parent=0 // pred_check_branch
    %11 = sbr.rel (0) target = $region9
  $region8: #{bert_classifier_forward.24} parent=0 // pred_region
    _
  $region9: #{bert_classifier_forward.24} parent=0 // pred_fallthru
    _
  // Predicated region
  $region10: #{bert_classifier_forward.24} parent=0 // pred_check
    _
  $region11: #{bert_classifier_forward.24} parent=0 // pred_check_branch
    %13 = sbr.rel (0) target = $region13
  $region12: #{bert_classifier_forward.24} parent=0 // pred_region
    _
  $region13: #{bert_classifier_forward.24} parent=0 // pred_fallthru
    _
  %p15 = scmp.eq.s32.totalorder 0, 0
  // Predicated region
  $region14: #{bert_classifier_forward.24} parent=0 // pred_check
    %p16 = pneg %p15
  $region15: #{bert_classifier_forward.24} parent=0 // pred_check_branch
    %18 = sbr.rel (%p16) target = $region17
  $region16: #{bert_classifier_forward.24} parent=0 // pred_region
    %vm19 = vcmask 523264
    %20 = vst.msk [vmem:[#allocation2] sm:$0xff] %vm19, 0.0
    %21 = vst.msk [vmem:[#allocation2 + $0x8] sm:$0xff] %vm19, 0.0
  $region17: #{bert_classifier_forward.24} parent=0 // pred_fallthru
    _
  %v22 = vld [vmem:[#allocation2] sm:$0xff]
  %v23 = vld [vmem:[#allocation2 + $0x8] sm:$0xff]
  %v24 = vld [vmem:[%s0] sm:$0xf]
  %v25 = vld [vmem:[%s0 + $0x4] sm:$0xf]
  %v26 = vld [vmem:[%s1] sm:$0xf]
  %v27 = vld [vmem:[%s1 + $0x4] sm:$0xf]
  %v28 = vld [vmem:[%s1 + $0x8] sm:$0xf]
  %v29 = vld [vmem:[%s1 + $0xc] sm:$0xf]
  %v32 = vunpack.c.l.b16 %v24
  %v33 = vunpack.c.l.b16 %v25
  %v34 = vpack.c.b16 %v33, %v32
  %v39 = vunpack.c.l.b16 %v26
  %v40 = vunpack.c.l.b16 %v27
  %v41 = vunpack.c.l.b16 %v28
  %v42 = vunpack.c.l.b16 %v29
  %v43 = vpack.c.b16 %v40, %v39
  %v44 = vpack.c.b16 %v42, %v41
  %vm47 = vcmask 261120
  %v49 = vsel %vm47, %v34, 0
  %51 = vmatprep.subr.bf16.mxu0 0
  %52 = vmatpush1.bf16.msra.mxu0 0
  %53 = vmatprep.subr.bf16.mxu0 0
  %54 = vmatpush1.bf16.msra.mxu0 0
  %55 = vmatprep.subr.bf16.mxu0 0
  %56 = vmatpush1.bf16.msra.mxu0 0
  %57 = vmatprep.subr.bf16.mxu0 0
  %58 = vmatpush1.bf16.msra.mxu0 0
  %59 = vmatprep.subr.bf16.mxu0 0
  %60 = vmatpush1.bf16.msra.mxu0 0
  %61 = vmatprep.subr.bf16.mxu0 0
  %62 = vmatpush1.bf16.msra.mxu0 0
  %63 = vmatprep.subr.bf16.mxu0 0
  %64 = vmatpush1.bf16.msra.mxu0 %v44
  %65 = vmatprep.subr.bf16.mxu0 0
  %66 = vmatpush1.bf16.msra.mxu0 %v43
  %67 = vmatprep.subr.bf16.mxu0 0
  %68 = vmatpush2.bf16.msra.mxu0 0
  %69 = vmatprep.subr.bf16.mxu0 0
  %70 = vmatpush2.bf16.msra.mxu0 0
  %71 = vmatprep.subr.bf16.mxu0 0
  %72 = vmatpush2.bf16.msra.mxu0 0
  %73 = vmatprep.subr.bf16.mxu0 0
  %74 = vmatpush2.bf16.msra.mxu0 0
  %75 = vmatprep.subr.bf16.mxu0 0
  %76 = vmatpush2.bf16.msra.mxu0 0
  %77 = vmatprep.subr.bf16.mxu0 0
  %78 = vmatpush2.bf16.msra.mxu0 0
  %79 = vmatprep.subr.bf16.mxu0 0
  %80 = vmatpush2.bf16.msra.mxu0 0
  %81 = vmatprep.subr.bf16.mxu0 0
  %82 = vmatpush2.bf16.msra.mxu0 0
  %83 = vmatprep.mubr.bf16.mxu0 0
  %84 = vmatmul.mubr.bf16.gmra.mxu0 %v49
  %v85 = vpop.f32.mrf.mxu0
  %v86 = vadd.f32 0.0, %v85
  %v87 = vpop.f32.mrf.mxu0
  %v88 = vpop.f32.mrf.mxu0
  %v89 = vadd.f32 0.0, %v88
  %v90 = vpop.f32.mrf.mxu0
  %91 = vdwg.mxu0
  %v92 = vadd.f32 %v22, %v86
  %v93 = vadd.f32 %v23, %v89
  %vm94 = vcmask 523264
  %95 = vst.msk [vmem:[#allocation2] sm:$0xff] %vm94, %v92
  %96 = vst.msk [vmem:[#allocation2 + $0x8] sm:$0xff] %vm94, %v93
  // Predicated region
  $region18: #{bert_classifier_forward.24} parent=0 // pred_check
    %p97 = pneg %p15
  $region19: #{bert_classifier_forward.24} parent=0 // pred_check_branch
    %99 = sbr.rel (%p97) target = $region21
  $region20: #{bert_classifier_forward.24} parent=0 // pred_region
    %v100 = vld [vmem:[#allocation2] sm:$0xff]
    %v101 = vld [vmem:[#allocation2 + $0x8] sm:$0xff]
    %v102 = vld [vmem:[%s2] sm:$0x1]
    %v104 = vlaneseq
    %v105 = vshrl.u32 %v104, 7
    %v106 = vsub.s32 0, %v105
    %v107 = vrot.slane %v102, %v106
    %v109 = vadd.f32 %v100, %v107
    %v110 = vadd.f32 %v101, %v107
    %v111 = vmul.f32 %v109, %v109
    %v112 = vmul.f32 %v110, %v110
    %v113 = vmul.f32 %v109, %v111
    %v114 = vmul.f32 %v110, %v112
    %v115 = vmul.f32 %v113, 0.044715
    %v116 = vmul.f32 %v114, 0.044715
    %v117 = vadd.f32 %v109, %v115
    %v118 = vadd.f32 %v110, %v116
    %v119 = vmul.f32 %v117, 0.7978846
    %v120 = vmul.f32 %v118, 0.7978846
    %v121 = vtanh.pop %v119
    %v122 = vtanh.pop %v120
    %v123 = vadd.f32 %v121, 1.0
    %v124 = vadd.f32 %v122, 1.0
    %v125 = vmul.f32 %v123, 0.5
    %v126 = vmul.f32 %v124, 0.5
    %v127 = vmul.f32 %v109, %v125
    %v128 = vmul.f32 %v110, %v126
    %v129 = vpack.c.bf16 %v128, %v127
    %v131 = vunpack.c.l.b16 %v129
    %v132 = vunpack.c.h.b16 %v129
    %v133 = vpack.c.b16 %v131, %v131
    %v134 = vpack.c.b16 %v132, %v132
    %vm137 = vcmask 519168
    %138 = vst.msk [vmem:[%s3] sm:$0xf] %vm137, %v133
    %139 = vst.msk [vmem:[%s3 + $0x4] sm:$0xf] %vm137, %v134
  $region21: #{bert_classifier_forward.24} parent=0 // pred_fallthru
    _
  // Predicated region
  $region22: #{bert_classifier_forward.24} parent=0 // pred_check
    _
  $region23: #{bert_classifier_forward.24} parent=0 // pred_check_branch
    %141 = sbr.rel (0) target = $region25
  $region24: #{bert_classifier_forward.24} parent=0 // pred_region
    _
  $region25: #{bert_classifier_forward.24} parent=0 // pred_fallthru
    _
  // Predicated region
  $region26: #{bert_classifier_forward.24} parent=0 // pred_check
    _
  $region27: #{bert_classifier_forward.24} parent=0 // pred_check_branch
    %143 = sbr.rel (0) target = $region29
  $region28: #{bert_classifier_forward.24} parent=0 // pred_region
    _
  $region29: #{bert_classifier_forward.24} parent=0 // pred_fallthru
    _

// kernel: bert_classifier_forward.25
$region0: #{bert_classifier_forward.25}
  #allocation0 [shape = 'u32[]', space=smem, size = 0x4, offset = 0x4, fixed_abs, tag = 'smem constant byte address 0x4 - core index']
  #allocation1 [shape = 'u32[144,128]{1,0:T(1,128)}', space=vmem, size = 0x12000, scoped, tag = 'internal scratch']
  #allocation2 [shape = 'f32[16,32]{1,0:T(8,128)}', space=vmem, size = 0x2000, scoped, tag = 'scratch operand']
  %s0 = inlined_call_operand.vmem [shape: bf16[16,64], index: 0, kind: input, shape index: {}]
  %s1 = inlined_call_operand.vmem [shape: bf16[64,32], index: 1, kind: input, shape index: {}]
  %s2 = inlined_call_operand.vmem [shape: f32[1,32], index: 2, kind: input, shape index: {}]
  %s3 = inlined_call_operand.vmem [shape: bf16[16,32], index: 3, kind: input, shape index: {}]
  %s4 = inlined_call_operand.vmem [shape: f32[1,32], index: 4, kind: input, shape index: {}]
  %s5 = inlined_call_operand.vmem [shape: f32[1,32], index: 5, kind: input, shape index: {}]
  %s6 = inlined_call_operand.vmem [shape: bf16[16,32], index: 6, kind: output, shape index: {}]
  %s7 = sld [smem:[#allocation0]]
  $region42: #{bert_classifier_forward.25} parent=0
    _
  %s9 = ssub.s32 1, %s7
  %s10 = scalar_select 0, %s9, %s7
  // Predicated region
  $region2: #{bert_classifier_forward.25} parent=0 // pred_check
    _
  $region3: #{bert_classifier_forward.25} parent=0 // pred_check_branch
    %12 = sbr.rel (0) target = $region5
  $region4: #{bert_classifier_forward.25} parent=0 // pred_region
    _
  $region5: #{bert_classifier_forward.25} parent=0 // pred_fallthru
    _
  // Predicated region
  $region6: #{bert_classifier_forward.25} parent=0 // pred_check
    _
  $region7: #{bert_classifier_forward.25} parent=0 // pred_check_branch
    %14 = sbr.rel (0) target = $region9
  $region8: #{bert_classifier_forward.25} parent=0 // pred_region
    _
  $region9: #{bert_classifier_forward.25} parent=0 // pred_fallthru
    _
  // Predicated region
  $region10: #{bert_classifier_forward.25} parent=0 // pred_check
    _
  $region11: #{bert_classifier_forward.25} parent=0 // pred_check_branch
    %16 = sbr.rel (0) target = $region13
  $region12: #{bert_classifier_forward.25} parent=0 // pred_region
    _
  $region13: #{bert_classifier_forward.25} parent=0 // pred_fallthru
    _
  // Predicated region
  $region14: #{bert_classifier_forward.25} parent=0 // pred_check
    _
  $region15: #{bert_classifier_forward.25} parent=0 // pred_check_branch
    %18 = sbr.rel (0) target = $region17
  $region16: #{bert_classifier_forward.25} parent=0 // pred_region
    _
  $region17: #{bert_classifier_forward.25} parent=0 // pred_fallthru
    _
  // Predicated region
  $region18: #{bert_classifier_forward.25} parent=0 // pred_check
    _
  $region19: #{bert_classifier_forward.25} parent=0 // pred_check_branch
    %20 = sbr.rel (0) target = $region21
  $region20: #{bert_classifier_forward.25} parent=0 // pred_region
    _
  $region21: #{bert_classifier_forward.25} parent=0 // pred_fallthru
    _
  // Predicated region
  $region22: #{bert_classifier_forward.25} parent=0 // pred_check
    _
  $region23: #{bert_classifier_forward.25} parent=0 // pred_check_branch
    %22 = sbr.rel (0) target = $region25
  $region24: #{bert_classifier_forward.25} parent=0 // pred_region
    _
  $region25: #{bert_classifier_forward.25} parent=0 // pred_fallthru
    _
  %p24 = scmp.eq.s32.totalorder 0, 0
  // Predicated region
  $region26: #{bert_classifier_forward.25} parent=0 // pred_check
    %p25 = pneg %p24
  $region27: #{bert_classifier_forward.25} parent=0 // pred_check_branch
    %27 = sbr.rel (%p25) target = $region29
  $region28: #{bert_classifier_forward.25} parent=0 // pred_region
    %vm28 = vcmask 261120
    %29 = vst.msk [vmem:[#allocation2] sm:$0xff] %vm28, 0.0
    %30 = vst.msk [vmem:[#allocation2 + $0x8] sm:$0xff] %vm28, 0.0
  $region29: #{bert_classifier_forward.25} parent=0 // pred_fallthru
    _
  %v31 = vld [vmem:[#allocation2] sm:$0xff]
  %v32 = vld [vmem:[#allocation2 + $0x8] sm:$0xff]
  %v33 = vld [vmem:[%s0] sm:$0xf]
  %v34 = vld [vmem:[%s0 + $0x4] sm:$0xf]
  %v35 = vld [vmem:[%s1] sm:$0xf]
  %v36 = vld [vmem:[%s1 + $0x4] sm:$0xf]
  %v37 = vld [vmem:[%s1 + $0x8] sm:$0xf]
  %v38 = vld [vmem:[%s1 + $0xc] sm:$0xf]
  %v39 = vld [vmem:[%s1 + $0x10] sm:$0xf]
  %v40 = vld [vmem:[%s1 + $0x14] sm:$0xf]
  %v41 = vld [vmem:[%s1 + $0x18] sm:$0xf]
  %v42 = vld [vmem:[%s1 + $0x1c] sm:$0xf]
  %v45 = vunpack.c.l.b16 %v33
  %v46 = vunpack.c.l.b16 %v34
  %v47 = vpack.c.b16 %v46, %v45
  %v56 = vunpack.c.l.b16 %v35
  %v57 = vunpack.c.l.b16 %v36
  %v58 = vunpack.c.l.b16 %v37
  %v59 = vunpack.c.l.b16 %v38
  %v60 = vunpack.c.l.b16 %v39
  %v61 = vunpack.c.l.b16 %v40
  %v62 = vunpack.c.l.b16 %v41
  %v63 = vunpack.c.l.b16 %v42
  %v64 = vpack.c.b16 %v57, %v56
  %v65 = vpack.c.b16 %v59, %v58
  %v66 = vpack.c.b16 %v61, %v60
  %v67 = vpack.c.b16 %v63, %v62
  %vm72 = vcmask 523264
  %v74 = vsel %vm72, %v47, 0
  %76 = vmatprep.subr.bf16.mxu0 0
  %77 = vmatpush1.bf16.msra.mxu0 0
  %78 = vmatprep.subr.bf16.mxu0 0
  %79 = vmatpush1.bf16.msra.mxu0 0
  %80 = vmatprep.subr.bf16.mxu0 0
  %81 = vmatpush1.bf16.msra.mxu0 0
  %82 = vmatprep.subr.bf16.mxu0 0
  %83 = vmatpush1.bf16.msra.mxu0 0
  %84 = vmatprep.subr.bf16.mxu0 0
  %85 = vmatpush1.bf16.msra.mxu0 %v67
  %86 = vmatprep.subr.bf16.mxu0 0
  %87 = vmatpush1.bf16.msra.mxu0 %v66
  %88 = vmatprep.subr.bf16.mxu0 0
  %89 = vmatpush1.bf16.msra.mxu0 %v65
  %90 = vmatprep.subr.bf16.mxu0 0
  %91 = vmatpush1.bf16.msra.mxu0 %v64
  %92 = vmatprep.subr.bf16.mxu0 0
  %93 = vmatpush2.bf16.msra.mxu0 0
  %94 = vmatprep.subr.bf16.mxu0 0
  %95 = vmatpush2.bf16.msra.mxu0 0
  %96 = vmatprep.subr.bf16.mxu0 0
  %97 = vmatpush2.bf16.msra.mxu0 0
  %98 = vmatprep.subr.bf16.mxu0 0
  %99 = vmatpush2.bf16.msra.mxu0 0
  %100 = vmatprep.subr.bf16.mxu0 0
  %101 = vmatpush2.bf16.msra.mxu0 0
  %102 = vmatprep.subr.bf16.mxu0 0
  %103 = vmatpush2.bf16.msra.mxu0 0
  %104 = vmatprep.subr.bf16.mxu0 0
  %105 = vmatpush2.bf16.msra.mxu0 0
  %106 = vmatprep.subr.bf16.mxu0 0
  %107 = vmatpush2.bf16.msra.mxu0 0
  %108 = vmatprep.mubr.bf16.mxu0 0
  %109 = vmatmul.mubr.bf16.gmra.mxu0 %v74
  %v110 = vpop.f32.mrf.mxu0
  %v111 = vadd.f32 0.0, %v110
  %v112 = vpop.f32.mrf.mxu0
  %v113 = vpop.f32.mrf.mxu0
  %v114 = vadd.f32 0.0, %v113
  %v115 = vpop.f32.mrf.mxu0
  %116 = vdwg.mxu0
  %v117 = vadd.f32 %v31, %v111
  %v118 = vadd.f32 %v32, %v114
  %vm119 = vcmask 261120
  %120 = vst.msk [vmem:[#allocation2] sm:$0xff] %vm119, %v117
  %121 = vst.msk [vmem:[#allocation2 + $0x8] sm:$0xff] %vm119, %v118
  // Predicated region
  $region30: #{bert_classifier_forward.25} parent=0 // pred_check
    %p122 = pneg %p24
  $region31: #{bert_classifier_forward.25} parent=0 // pred_check_branch
    %124 = sbr.rel (%p122) target = $region33
  $region32: #{bert_classifier_forward.25} parent=0 // pred_region
    %v125 = vld [vmem:[#allocation2] sm:$0xff]
    %v126 = vld [vmem:[#allocation2 + $0x8] sm:$0xff]
    %v127 = vld [vmem:[%s2] sm:$0x1]
    %v129 = vlaneseq
    %v130 = vshrl.u32 %v129, 7
    %v131 = vsub.s32 0, %v130
    %v132 = vrot.slane %v127, %v131
    %v134 = vadd.f32 %v125, %v132
    %v135 = vadd.f32 %v126, %v132
    %v136 = vld [vmem:[%s3] sm:$0xf]
    %v137 = vld [vmem:[%s3 + $0x4] sm:$0xf]
    %v138 = vunpack.c.l.bf16 %v136
    %v139 = vunpack.c.l.bf16 %v137
    %v140 = vadd.f32 %v134, %v138
    %v141 = vadd.f32 %v135, %v139
    %v142 = vsel %vm119, %v140, 0.0
    %143 = vadd.xlane.f32.xlu0 %v142
    %v144 = vpop.xlane.xlu0 %143
    %v145 = vsel %vm119, %v141, 0.0
    %146 = vadd.xlane.f32.xlu0 %v145
    %v147 = vpop.xlane.xlu0 %146
    %v148 = vrcp.pop 32.0
    %v149 = vmul.f32 %v144, %v148
    %v150 = vmul.f32 %v147, %v148
    %v151 = vsub.f32 %v140, %v149
    %v152 = vsub.f32 %v141, %v150
    %v153 = vmul.f32 %v151, %v151
    %v154 = vmul.f32 %v152, %v152
    %v155 = vsel %vm119, %v153, 0.0
    %156 = vadd.xlane.f32.xlu0 %v155
    %v157 = vpop.xlane.xlu0 %156
    %v158 = vsel %vm119, %v154, 0.0
    %159 = vadd.xlane.f32.xlu0 %v158
    %v160 = vpop.xlane.xlu0 %159
    %v161 = vmul.f32 %v157, %v148
    %v162 = vmul.f32 %v160, %v148
    %v163 = vadd.f32 %v161, 1e-12
    %v164 = vadd.f32 %v162, 1e-12
    %v165 = vrsqrt.pop %v163
    %v166 = vrsqrt.pop %v164
    %v167 = vmul.f32 %v151, %v165
    %v168 = vmul.f32 %v152, %v166
    %v169 = vld [vmem:[%s4] sm:$0x1]
    %v171 = vlaneseq
    %v172 = vshrl.u32 %v171, 7
    %v173 = vsub.s32 0, %v172
    %v174 = vrot.slane %v169, %v173
    %v176 = vmul.f32 %v167, %v174
    %v177 = vmul.f32 %v168, %v174
    %v178 = vld [vmem:[%s5] sm:$0x1]
    %v180 = vlaneseq
    %v181 = vshrl.u32 %v180, 7
    %v182 = vsub.s32 0, %v181
    %v183 = vrot.slane %v178, %v182
    %v185 = vadd.f32 %v176, %v183
    %v186 = vadd.f32 %v177, %v183
    %v187 = vpack.c.bf16 %v186, %v185
    %v189 = vunpack.c.l.b16 %v187
    %v190 = vunpack.c.h.b16 %v187
    %v191 = vpack.c.b16 %v189, %v189
    %v192 = vpack.c.b16 %v190, %v190
    %vm195 = vcmask 257024
    %196 = vst.msk [vmem:[%s6] sm:$0xf] %vm195, %v191
    %197 = vst.msk [vmem:[%s6 + $0x4] sm:$0xf] %vm195, %v192
  $region33: #{bert_classifier_forward.25} parent=0 // pred_fallthru
    _
  // Predicated region
  $region34: #{bert_classifier_forward.25} parent=0 // pred_check
    _
  $region35: #{bert_classifier_forward.25} parent=0 // pred_check_branch
    %199 = sbr.rel (0) target = $region37
  $region36: #{bert_classifier_forward.25} parent=0 // pred_region
    _
  $region37: #{bert_classifier_forward.25} parent=0 // pred_fallthru
    _
  // Predicated region
  $region38: #{bert_classifier_forward.25} parent=0 // pred_check
    _
  $region39: #{bert_classifier_forward.25} parent=0 // pred_check_branch
    %201 = sbr.rel (0) target = $region41
  $region40: #{bert_classifier_forward.25} parent=0 // pred_region
    _
  $region41: #{bert_classifier_forward.25} parent=0 // pred_fallthru
    _

// kernel: bert_classifier_forward.35
$region0: #{bert_classifier_forward.35}
  #allocation0 [shape = 'u32[]', space=smem, size = 0x4, offset = 0x4, fixed_abs, tag = 'smem constant byte address 0x4 - core index']
  #allocation1 [shape = 'u32[144,128]{1,0:T(1,128)}', space=vmem, size = 0x12000, scoped, tag = 'internal scratch']
  #allocation2 [shape = 'f32[2,32]{1,0:T(2,128)}', space=vmem, size = 0x400, scoped, tag = 'scratch operand']
  %s0 = inlined_call_operand.vmem [shape: bf16[2,32], index: 0, kind: input, shape index: {}]
  %s1 = inlined_call_operand.vmem [shape: bf16[32,32], index: 1, kind: input, shape index: {}]
  %s2 = inlined_call_operand.vmem [shape: f32[1,32], index: 2, kind: input, shape index: {}]
  %s3 = inlined_call_operand.vmem [shape: bf16[2,32], index: 3, kind: output, shape index: {}]
  %s4 = sld [smem:[#allocation0]]
  $region30: #{bert_classifier_forward.35} parent=0
    _
  %s6 = ssub.s32 1, %s4
  %s7 = scalar_select 0, %s6, %s4
  // Predicated region
  $region2: #{bert_classifier_forward.35} parent=0 // pred_check
    _
  $region3: #{bert_classifier_forward.35} parent=0 // pred_check_branch
    %9 = sbr.rel (0) target = $region5
  $region4: #{bert_classifier_forward.35} parent=0 // pred_region
    _
  $region5: #{bert_classifier_forward.35} parent=0 // pred_fallthru
    _
  // Predicated region
  $region6: #{bert_classifier_forward.35} parent=0 // pred_check
    _
  $region7: #{bert_classifier_forward.35} parent=0 // pred_check_branch
    %11 = sbr.rel (0) target = $region9
  $region8: #{bert_classifier_forward.35} parent=0 // pred_region
    _
  $region9: #{bert_classifier_forward.35} parent=0 // pred_fallthru
    _
  // Predicated region
  $region10: #{bert_classifier_forward.35} parent=0 // pred_check
    _
  $region11: #{bert_classifier_forward.35} parent=0 // pred_check_branch
    %13 = sbr.rel (0) target = $region13
  $region12: #{bert_classifier_forward.35} parent=0 // pred_region
    _
  $region13: #{bert_classifier_forward.35} parent=0 // pred_fallthru
    _
  %p15 = scmp.eq.s32.totalorder 0, 0
  // Predicated region
  $region14: #{bert_classifier_forward.35} parent=0 // pred_check
    %p16 = pneg %p15
  $region15: #{bert_classifier_forward.35} parent=0 // pred_check_branch
    %18 = sbr.rel (%p16) target = $region17
  $region16: #{bert_classifier_forward.35} parent=0 // pred_region
    %vm19 = vcmask 254976
    %20 = vst.msk [vmem:[#allocation2] sm:$0x3] %vm19, 0.0
  $region17: #{bert_classifier_forward.35} parent=0 // pred_fallthru
    _
  %v21 = vld [vmem:[#allocation2] sm:$0x3]
  %v22 = vld [vmem:[%s0] sm:$0x1]
  %v23 = vld [vmem:[%s1] sm:$0xf]
  %v24 = vld [vmem:[%s1 + $0x4] sm:$0xf]
  %v25 = vld [vmem:[%s1 + $0x8] sm:$0xf]
  %v26 = vld [vmem:[%s1 + $0xc] sm:$0xf]
  %v31 = vunpack.c.l.b16 %v23
  %v32 = vunpack.c.l.b16 %v24
  %v33 = vunpack.c.l.b16 %v25
  %v34 = vunpack.c.l.b16 %v26
  %v35 = vpack.c.b16 %v32, %v31
  %v36 = vpack.c.b16 %v34, %v33
  %vm39 = vcmask 261120
  %v41 = vsel %vm39, %v22, 0
  %43 = vmatprep.subr.bf16.mxu0 0
  %44 = vmatpush1.bf16.msra.mxu0 0
  %45 = vmatprep.subr.bf16.mxu0 0
  %46 = vmatpush1.bf16.msra.mxu0 0
  %47 = vmatprep.subr.bf16.mxu0 0
  %48 = vmatpush1.bf16.msra.mxu0 0
  %49 = vmatprep.subr.bf16.mxu0 0
  %50 = vmatpush1.bf16.msra.mxu0 0
  %51 = vmatprep.subr.bf16.mxu0 0
  %52 = vmatpush1.bf16.msra.mxu0 0
  %53 = vmatprep.subr.bf16.mxu0 0
  %54 = vmatpush1.bf16.msra.mxu0 0
  %55 = vmatprep.subr.bf16.mxu0 0
  %56 = vmatpush1.bf16.msra.mxu0 %v36
  %57 = vmatprep.subr.bf16.mxu0 0
  %58 = vmatpush1.bf16.msra.mxu0 %v35
  %59 = vmatprep.subr.bf16.mxu0 0
  %60 = vmatpush2.bf16.msra.mxu0 0
  %61 = vmatprep.subr.bf16.mxu0 0
  %62 = vmatpush2.bf16.msra.mxu0 0
  %63 = vmatprep.subr.bf16.mxu0 0
  %64 = vmatpush2.bf16.msra.mxu0 0
  %65 = vmatprep.subr.bf16.mxu0 0
  %66 = vmatpush2.bf16.msra.mxu0 0
  %67 = vmatprep.subr.bf16.mxu0 0
  %68 = vmatpush2.bf16.msra.mxu0 0
  %69 = vmatprep.subr.bf16.mxu0 0
  %70 = vmatpush2.bf16.msra.mxu0 0
  %71 = vmatprep.subr.bf16.mxu0 0
  %72 = vmatpush2.bf16.msra.mxu0 0
  %73 = vmatprep.subr.bf16.mxu0 0
  %74 = vmatpush2.bf16.msra.mxu0 0
  %75 = vmatprep.mubr.bf16.mxu0 0
  %76 = vmatmul.mubr.bf16.gmra.mxu0 %v41
  %v77 = vpop.f32.mrf.mxu0
  %v78 = vadd.f32 0.0, %v77
  %v79 = vpop.f32.mrf.mxu0
  %v80 = vpop.f32.mrf.mxu0
  %v81 = vpop.f32.mrf.mxu0
  %82 = vdwg.mxu0
  %v83 = vadd.f32 %v21, %v78
  %vm84 = vcmask 254976
  %85 = vst.msk [vmem:[#allocation2] sm:$0x3] %vm84, %v83
  // Predicated region
  $region18: #{bert_classifier_forward.35} parent=0 // pred_check
    %p86 = pneg %p15
  $region19: #{bert_classifier_forward.35} parent=0 // pred_check_branch
    %88 = sbr.rel (%p86) target = $region21
  $region20: #{bert_classifier_forward.35} parent=0 // pred_region
    %v89 = vld [vmem:[#allocation2] sm:$0x3]
    %v90 = vld [vmem:[%s2] sm:$0x1]
    %v92 = vlaneseq
    %v93 = vshrl.u32 %v92, 7
    %v94 = vsub.s32 0, %v93
    %v95 = vrot.slane %v90, %v94
    %v97 = vadd.f32 %v89, %v95
    %v98 = vpack.c.bf16 %v97, %v97
    %vm99 = vcmask 253952
    %100 = vst.msk [vmem:[%s3] sm:$0x1] %vm99, %v98
  $region21: #{bert_classifier_forward.35} parent=0 // pred_fallthru
    _
  // Predicated region
  $region22: #{bert_classifier_forward.35} parent=0 // pred_check
    _
  $region23: #{bert_classifier_forward.35} parent=0 // pred_check_branch
    %102 = sbr.rel (0) target = $region25
  $region24: #{bert_classifier_forward.35} parent=0 // pred_region
    _
  $region25: #{bert_classifier_forward.35} parent=0 // pred_fallthru
    _
  // Predicated region
  $region26: #{bert_classifier_forward.35} parent=0 // pred_check
    _
  $region27: #{bert_classifier_forward.35} parent=0 // pred_check_branch
    %104 = sbr.rel (0) target = $region29
  $region28: #{bert_classifier_forward.35} parent=0 // pred_region
    _
  $region29: #{bert_classifier_forward.35} parent=0 // pred_fallthru
    _

// kernel: bert_classifier_forward.34
$region0: #{bert_classifier_forward.34}
  #allocation0 [shape = 'u32[]', space=smem, size = 0x4, offset = 0x4, fixed_abs, tag = 'smem constant byte address 0x4 - core index']
  #allocation1 [shape = 'u32[144,128]{1,0:T(1,128)}', space=vmem, size = 0x12000, scoped, tag = 'internal scratch']
  %s0 = inlined_call_operand.vmem [shape: bf16[16,96], index: 0, kind: input, shape index: {}]
  %s1 = inlined_call_operand.vmem [shape: bf16[2,1,32], index: 1, kind: output, shape index: {}]
  %s2 = sld [smem:[#allocation0]]
  $region37: #{bert_classifier_forward.34} parent=0
    _
  %s4 = ssub.s32 1, %s2
  %s5 = scalar_select 0, %s4, %s2
  loop: start=0, step=1, limit=4
  $region2: #{bert_classifier_forward.34} parent=0 // loop_pre_header
    _
  $region3: #{bert_classifier_forward.34} parent=0 // loop_header
    %s7 = sphi 0, %s11
    %p8 = scmp.ge.s32.totalorder %s7, 4
    %s17 = sphi 0, %s19
    %s20 = sphi 0, %s17
    %s21 = sphi 0, %s20
    %s37 = sphi 0, %s21
    %s43 = sphi 0, %s45
    %s46 = sphi 0, %s43
    %s47 = sphi 0, %s46
    %s63 = sphi 0, %s47
  $region4: #{bert_classifier_forward.34} parent=0 // loop_header_branch
    %10 = sbr.rel (%p8) target = $region8
  $region5: #{bert_classifier_forward.34} parent=0 // loop_body
    %s12 = ssub.s32 %s7, 1
    %s13 = ssub.s32 %s7, 2
    %s14 = sadd.s32 %s7, 1
    %s15 = ssub.s32 %s7, %s14
    %p16 = scmp.eq.s32.totalorder %s15, 0
    %s18 = sadd.s32 %s17, 1
    %s19 = scalar_select %p16, %s17, %s18
    %p22 = pneg %p16
    %p23 = scmp.eq.s32.totalorder %s7, 1
    %p24 = por %p22, %p23
    %p25 = scmp.ne.s32.totalorder %s17, %s20
    %p26 = scmp.eq.s32.totalorder %s7, 0
    %p27 = por %p25, %p26
    %p28 = scmp.ne.s32.totalorder %s17, %s20
    %p29 = scmp.eq.s32.totalorder %s12, 1
    %p30 = por %p28, %p29
    %p31 = scmp.ne.s32.totalorder %s20, %s21
    %p32 = scmp.eq.s32.totalorder %s12, 0
    %p33 = por %p31, %p32
    %p34 = scmp.ne.s32.totalorder %s20, %s21
    %p35 = scmp.eq.s32.totalorder %s13, 1
    %p36 = por %p34, %p35
    %p38 = scmp.ne.s32.totalorder %s21, %s37
    %p39 = scmp.eq.s32.totalorder %s13, 0
    %p40 = por %p38, %p39
    %s41 = ssub.s32 %s7, %s14
    %p42 = scmp.eq.s32.totalorder %s41, 0
    %s44 = sadd.s32 %s43, 1
    %s45 = scalar_select %p42, %s43, %s44
    %p48 = pneg %p42
    %p49 = scmp.eq.s32.totalorder %s7, 1
    %p50 = por %p48, %p49
    %p51 = scmp.ne.s32.totalorder %s43, %s46
    %p52 = scmp.eq.s32.totalorder %s7, 0
    %p53 = por %p51, %p52
    %p54 = scmp.ne.s32.totalorder %s43, %s46
    %p55 = scmp.eq.s32.totalorder %s12, 1
    %p56 = por %p54, %p55
    %p57 = scmp.ne.s32.totalorder %s46, %s47
    %p58 = scmp.eq.s32.totalorder %s12, 0
    %p59 = por %p57, %p58
    %p60 = scmp.ne.s32.totalorder %s46, %s47
    %p61 = scmp.eq.s32.totalorder %s13, 1
    %p62 = por %p60, %p61
    %p64 = scmp.ne.s32.totalorder %s47, %s63
    %p65 = scmp.eq.s32.totalorder %s13, 0
    %p66 = por %p64, %p65
    %p67 = scmp.le.s32.totalorder 1, %s7
    %p68 = scmp.lt.s32.totalorder %s7, 3
    %p69 = pnand %p67, %p68
    %p70 = pneg %p69
    // Predicated region
    $region9: #{bert_classifier_forward.34} parent=5 // pred_check
      _
    $region10: #{bert_classifier_forward.34} parent=5 // pred_check_branch
      %72 = sbr.rel (%p69) target = $region12
    $region11: #{bert_classifier_forward.34} parent=5 // pred_region
      %s73 = ssub.s32 %s7, 1
    $region12: #{bert_classifier_forward.34} parent=5 // pred_fallthru
      _
    %p74 = scmp.lt.s32.totalorder %s7, 2
    // Predicated region
    $region13: #{bert_classifier_forward.34} parent=5 // pred_check
      %p75 = pneg %p74
    $region14: #{bert_classifier_forward.34} parent=5 // pred_check_branch
      %77 = sbr.rel (%p75) target = $region16
    $region15: #{bert_classifier_forward.34} parent=5 // pred_region
      // Predicated region
      $region17: #{bert_classifier_forward.34} parent=15 // pred_check
        %p78 = pneg %p27
      $region18: #{bert_classifier_forward.34} parent=15 // pred_check_branch
        %80 = sbr.rel (%p78) target = $region20
      $region19: #{bert_classifier_forward.34} parent=15 // pred_region
        %p81 = scmp.lt.s32.totalorder %s7, 1
        %s82 = scalar_select %p81, %s7, 1
        %s83 = smul.addr %s82, 4
        %s84 = scalar_lea.vmem %s0, %s83
      $region20: #{bert_classifier_forward.34} parent=15 // pred_fallthru
        _
    $region16: #{bert_classifier_forward.34} parent=5 // pred_fallthru
      _
    %p85 = scmp.le.s32.totalorder 1, %s7
    %p86 = scmp.lt.s32.totalorder %s7, 3
    %p87 = pnand %p85, %p86
    %p88 = pneg %p87
    // Predicated region
    $region21: #{bert_classifier_forward.34} parent=5 // pred_check
      _
    $region22: #{bert_classifier_forward.34} parent=5 // pred_check_branch
      %90 = sbr.rel (%p87) target = $region24
    $region23: #{bert_classifier_forward.34} parent=5 // pred_region
      %s91 = ssub.s32 %s7, 1
      %p92 = scmp.lt.s32.totalorder %s12, 1
      %s93 = scalar_select %p92, %s12, 1
      %s94 = smul.addr %s93, 4
      %s95 = scalar_lea.vmem %s0, %s94
      %p96 = pneg %p33
      %p97 = pneg %p30
      %p98 = pneg %p59
      %p99 = pneg %p56
      %p100 = scmp.lt.s32.totalorder %s12, 1
      %s101 = scalar_select %p100, %s12, 1
      %s102 = scalar_lea.vmem %s1, %s101
      %p103 = scmp.lt.s32.totalorder %s12, 1
      %s104 = scalar_select %p103, %s12, 1
      %s105 = smul.addr %s104, 4
      %s106 = scalar_lea.vmem %s0, %s105
      %p107 = scmp.lt.s32.totalorder %s12, 1
      %s108 = scalar_select %p107, %s12, 1
      %s109 = scalar_lea.vmem %s1, %s108
      %v112 = vld [vmem:[%s106] sm:$0xf]
      %v113 = vmul.bf16 %v112, 1056980736
      %v115 = vunpack.c.l.b16 %v112
      %v116 = vpack.c.b16 %v115, %v115
      %117 = vrot.lane.b32.xlu0 %v116, 96
      %v118 = vpop.permute.xlu0 %117
      %vm119 = vcmask 31744
      %v121 = vsel %vm119, %v113, 0
      %v124 = vsel %vm119, %v118, 0
      %126 = vmatprep.subr.bf16.mxu0 0
      %127 = vmatpush1.bf16.xpose.msra.mxu0 0
      %128 = vmatprep.subr.bf16.mxu0 0
      %129 = vmatpush1.bf16.xpose.msra.mxu0 0
      %130 = vmatprep.subr.bf16.mxu0 0
      %131 = vmatpush1.bf16.xpose.msra.mxu0 0
      %132 = vmatprep.subr.bf16.mxu0 0
      %133 = vmatpush1.bf16.xpose.msra.mxu0 0
      %134 = vmatprep.subr.bf16.mxu0 0
      %135 = vmatpush1.bf16.xpose.msra.mxu0 0
      %136 = vmatprep.subr.bf16.mxu0 0
      %137 = vmatpush1.bf16.xpose.msra.mxu0 0
      %138 = vmatprep.subr.bf16.mxu0 0
      %139 = vmatpush1.bf16.xpose.msra.mxu0 0
      %140 = vmatprep.subr.bf16.mxu0 0
      %141 = vmatpush1.bf16.xpose.msra.mxu0 %v124
      %142 = vmatprep.subr.bf16.mxu0 0
      %143 = vmatpush2.bf16.xpose.msra.mxu0 0
      %144 = vmatprep.subr.bf16.mxu0 0
      %145 = vmatpush2.bf16.xpose.msra.mxu0 0
      %146 = vmatprep.subr.bf16.mxu0 0
      %147 = vmatpush2.bf16.xpose.msra.mxu0 0
      %148 = vmatprep.subr.bf16.mxu0 0
      %149 = vmatpush2.bf16.xpose.msra.mxu0 0
      %150 = vmatprep.subr.bf16.mxu0 0
      %151 = vmatpush2.bf16.xpose.msra.mxu0 0
      %152 = vmatprep.subr.bf16.mxu0 0
      %153 = vmatpush2.bf16.xpose.msra.mxu0 0
      %154 = vmatprep.subr.bf16.mxu0 0
      %155 = vmatpush2.bf16.xpose.msra.mxu0 0
      %156 = vmatprep.subr.bf16.mxu0 0
      %157 = vmatpush2.bf16.xpose.msra.mxu0 0
      %158 = vmatprep.mubr.bf16.mxu0 0
      %159 = vmatmul.mubr.bf16.gmra.mxu0 %v121
      %v160 = vpop.f32.mrf.mxu0
      %v161 = vadd.f32 0.0, %v160
      %v162 = vpop.f32.mrf.mxu0
      %v163 = vpop.f32.mrf.mxu0
      %v164 = vpop.f32.mrf.mxu0
      %165 = vdwg.mxu0
      %vm166 = vcmask 64512
      %v167 = vsel %vm166, %v161, -inf
      %168 = vmax.xlane.f32.xlu0 %v167
      %v169 = vpop.xlane.xlu0 %168
      %v170 = vsub.f32 %v161, %v169
      %v171 = vmul.f32 %v170, 1.442695
      %v172 = vpow.pop %v171
      %v173 = vsel %vm166, %v172, 0.0
      %174 = vadd.xlane.f32.xlu0 %v173
      %v175 = vpop.xlane.xlu0 %174
      %v176 = vrcp.pop %v175
      %v177 = vmul.f32 %v172, %v176
      %v178 = vpack.c.bf16 %v177, %v177
      %179 = vrot.lane.b32.xlu0 %v116, 64
      %v180 = vpop.permute.xlu0 %179
      %v182 = vsel %vm166, %v178, 0
      %vm184 = vcmask 1043456
      %v186 = vsel %vm184, %v180, 0
      %188 = vmatprep.subr.bf16.mxu0 0
      %189 = vmatpush1.bf16.msra.mxu0 0
      %190 = vmatprep.subr.bf16.mxu0 0
      %191 = vmatpush1.bf16.msra.mxu0 0
      %192 = vmatprep.subr.bf16.mxu0 0
      %193 = vmatpush1.bf16.msra.mxu0 0
      %194 = vmatprep.subr.bf16.mxu0 0
      %195 = vmatpush1.bf16.msra.mxu0 0
      %196 = vmatprep.subr.bf16.mxu0 0
      %197 = vmatpush1.bf16.msra.mxu0 0
      %198 = vmatprep.subr.bf16.mxu0 0
      %199 = vmatpush1.bf16.msra.mxu0 0
      %200 = vmatprep.subr.bf16.mxu0 0
      %201 = vmatpush1.bf16.msra.mxu0 0
      %202 = vmatprep.subr.bf16.mxu0 0
      %203 = vmatpush1.bf16.msra.mxu0 %v186
      %204 = vmatprep.subr.bf16.mxu0 0
      %205 = vmatpush2.bf16.msra.mxu0 0
      %206 = vmatprep.subr.bf16.mxu0 0
      %207 = vmatpush2.bf16.msra.mxu0 0
      %208 = vmatprep.subr.bf16.mxu0 0
      %209 = vmatpush2.bf16.msra.mxu0 0
      %210 = vmatprep.subr.bf16.mxu0 0
      %211 = vmatpush2.bf16.msra.mxu0 0
      %212 = vmatprep.subr.bf16.mxu0 0
      %213 = vmatpush2.bf16.msra.mxu0 0
      %214 = vmatprep.subr.bf16.mxu0 0
      %215 = vmatpush2.bf16.msra.mxu0 0
      %216 = vmatprep.subr.bf16.mxu0 0
      %217 = vmatpush2.bf16.msra.mxu0 0
      %218 = vmatprep.subr.bf16.mxu0 0
      %219 = vmatpush2.bf16.msra.mxu0 0
      %220 = vmatprep.mubr.bf16.mxu0 0
      %221 = vmatmul.mubr.bf16.gmra.mxu0 %v182
      %v222 = vpop.f32.mrf.mxu0
      %v223 = vadd.f32 0.0, %v222
      %v224 = vpop.f32.mrf.mxu0
      %v225 = vpop.f32.mrf.mxu0
      %v226 = vpop.f32.mrf.mxu0
      %227 = vdwg.mxu0
      %v229 = vunpack.c.l.b16 %v113
      %v230 = vpack.c.b16 %v229, %v229
      %231 = vrot.lane.b32.xlu0 %v230, 124
      %v232 = vpop.permute.xlu0 %231
      %233 = vrot.lane.b32.xlu0 %v116, 92
      %v234 = vpop.permute.xlu0 %233
      %v236 = vsel %vm119, %v232, 0
      %v239 = vsel %vm119, %v234, 0
      %241 = vmatprep.subr.bf16.mxu0 0
      %242 = vmatpush1.bf16.xpose.msra.mxu0 0
      %243 = vmatprep.subr.bf16.mxu0 0
      %244 = vmatpush1.bf16.xpose.msra.mxu0 0
      %245 = vmatprep.subr.bf16.mxu0 0
      %246 = vmatpush1.bf16.xpose.msra.mxu0 0
      %247 = vmatprep.subr.bf16.mxu0 0
      %248 = vmatpush1.bf16.xpose.msra.mxu0 0
      %249 = vmatprep.subr.bf16.mxu0 0
      %250 = vmatpush1.bf16.xpose.msra.mxu0 0
      %251 = vmatprep.subr.bf16.mxu0 0
      %252 = vmatpush1.bf16.xpose.msra.mxu0 0
      %253 = vmatprep.subr.bf16.mxu0 0
      %254 = vmatpush1.bf16.xpose.msra.mxu0 0
      %255 = vmatprep.subr.bf16.mxu0 0
      %256 = vmatpush1.bf16.xpose.msra.mxu0 %v239
      %257 = vmatprep.subr.bf16.mxu0 0
      %258 = vmatpush2.bf16.xpose.msra.mxu0 0
      %259 = vmatprep.subr.bf16.mxu0 0
      %260 = vmatpush2.bf16.xpose.msra.mxu0 0
      %261 = vmatprep.subr.bf16.mxu0 0
      %262 = vmatpush2.bf16.xpose.msra.mxu0 0
      %263 = vmatprep.subr.bf16.mxu0 0
      %264 = vmatpush2.bf16.xpose.msra.mxu0 0
      %265 = vmatprep.subr.bf16.mxu0 0
      %266 = vmatpush2.bf16.xpose.msra.mxu0 0
      %267 = vmatprep.subr.bf16.mxu0 0
      %268 = vmatpush2.bf16.xpose.msra.mxu0 0
      %269 = vmatprep.subr.bf16.mxu0 0
      %270 = vmatpush2.bf16.xpose.msra.mxu0 0
      %271 = vmatprep.subr.bf16.mxu0 0
      %272 = vmatpush2.bf16.xpose.msra.mxu0 0
      %273 = vmatprep.mubr.bf16.mxu0 0
      %274 = vmatmul.mubr.bf16.gmra.mxu0 %v236
      %v275 = vpop.f32.mrf.mxu0
      %v276 = vadd.f32 0.0, %v275
      %v277 = vpop.f32.mrf.mxu0
      %v278 = vpop.f32.mrf.mxu0
      %v279 = vpop.f32.mrf.mxu0
      %280 = vdwg.mxu0
      %v281 = vsel %vm166, %v276, -inf
      %282 = vmax.xlane.f32.xlu0 %v281
      %v283 = vpop.xlane.xlu0 %282
      %v284 = vsub.f32 %v276, %v283
      %v285 = vmul.f32 %v284, 1.442695
      %v286 = vpow.pop %v285
      %v287 = vsel %vm166, %v286, 0.0
      %288 = vadd.xlane.f32.xlu0 %v287
      %v289 = vpop.xlane.xlu0 %288
      %v290 = vrcp.pop %v289
      %v291 = vmul.f32 %v286, %v290
      %v292 = vpack.c.bf16 %v291, %v291
      %293 = vrot.lane.b32.xlu0 %v116, 60
      %v294 = vpop.permute.xlu0 %293
      %v296 = vsel %vm166, %v292, 0
      %v299 = vsel %vm184, %v294, 0
      %301 = vmatprep.subr.bf16.mxu0 0
      %302 = vmatpush1.bf16.msra.mxu0 0
      %303 = vmatprep.subr.bf16.mxu0 0
      %304 = vmatpush1.bf16.msra.mxu0 0
      %305 = vmatprep.subr.bf16.mxu0 0
      %306 = vmatpush1.bf16.msra.mxu0 0
      %307 = vmatprep.subr.bf16.mxu0 0
      %308 = vmatpush1.bf16.msra.mxu0 0
      %309 = vmatprep.subr.bf16.mxu0 0
      %310 = vmatpush1.bf16.msra.mxu0 0
      %311 = vmatprep.subr.bf16.mxu0 0
      %312 = vmatpush1.bf16.msra.mxu0 0
      %313 = vmatprep.subr.bf16.mxu0 0
      %314 = vmatpush1.bf16.msra.mxu0 0
      %315 = vmatprep.subr.bf16.mxu0 0
      %316 = vmatpush1.bf16.msra.mxu0 %v299
      %317 = vmatprep.subr.bf16.mxu0 0
      %318 = vmatpush2.bf16.msra.mxu0 0
      %319 = vmatprep.subr.bf16.mxu0 0
      %320 = vmatpush2.bf16.msra.mxu0 0
      %321 = vmatprep.subr.bf16.mxu0 0
      %322 = vmatpush2.bf16.msra.mxu0 0
      %323 = vmatprep.subr.bf16.mxu0 0
      %324 = vmatpush2.bf16.msra.mxu0 0
      %325 = vmatprep.subr.bf16.mxu0 0
      %326 = vmatpush2.bf16.msra.mxu0 0
      %327 = vmatprep.subr.bf16.mxu0 0
      %328 = vmatpush2.bf16.msra.mxu0 0
      %329 = vmatprep.subr.bf16.mxu0 0
      %330 = vmatpush2.bf16.msra.mxu0 0
      %331 = vmatprep.subr.bf16.mxu0 0
      %332 = vmatpush2.bf16.msra.mxu0 0
      %333 = vmatprep.mubr.bf16.mxu0 0
      %334 = vmatmul.mubr.bf16.gmra.mxu0 %v296
      %v335 = vpop.f32.mrf.mxu0
      %v336 = vadd.f32 0.0, %v335
      %v337 = vpop.f32.mrf.mxu0
      %v338 = vpop.f32.mrf.mxu0
      %v339 = vpop.f32.mrf.mxu0
      %340 = vdwg.mxu0
      %341 = vrot.lane.b32.xlu0 %v230, 120
      %v342 = vpop.permute.xlu0 %341
      %343 = vrot.lane.b32.xlu0 %v116, 88
      %v344 = vpop.permute.xlu0 %343
      %v346 = vsel %vm119, %v342, 0
      %v349 = vsel %vm119, %v344, 0
      %351 = vmatprep.subr.bf16.mxu0 0
      %352 = vmatpush1.bf16.xpose.msra.mxu0 0
      %353 = vmatprep.subr.bf16.mxu0 0
      %354 = vmatpush1.bf16.xpose.msra.mxu0 0
      %355 = vmatprep.subr.bf16.mxu0 0
      %356 = vmatpush1.bf16.xpose.msra.mxu0 0
      %357 = vmatprep.subr.bf16.mxu0 0
      %358 = vmatpush1.bf16.xpose.msra.mxu0 0
      %359 = vmatprep.subr.bf16.mxu0 0
      %360 = vmatpush1.bf16.xpose.msra.mxu0 0
      %361 = vmatprep.subr.bf16.mxu0 0
      %362 = vmatpush1.bf16.xpose.msra.mxu0 0
      %363 = vmatprep.subr.bf16.mxu0 0
      %364 = vmatpush1.bf16.xpose.msra.mxu0 0
      %365 = vmatprep.subr.bf16.mxu0 0
      %366 = vmatpush1.bf16.xpose.msra.mxu0 %v349
      %367 = vmatprep.subr.bf16.mxu0 0
      %368 = vmatpush2.bf16.xpose.msra.mxu0 0
      %369 = vmatprep.subr.bf16.mxu0 0
      %370 = vmatpush2.bf16.xpose.msra.mxu0 0
      %371 = vmatprep.subr.bf16.mxu0 0
      %372 = vmatpush2.bf16.xpose.msra.mxu0 0
      %373 = vmatprep.subr.bf16.mxu0 0
      %374 = vmatpush2.bf16.xpose.msra.mxu0 0
      %375 = vmatprep.subr.bf16.mxu0 0
      %376 = vmatpush2.bf16.xpose.msra.mxu0 0
      %377 = vmatprep.subr.bf16.mxu0 0
      %378 = vmatpush2.bf16.xpose.msra.mxu0 0
      %379 = vmatprep.subr.bf16.mxu0 0
      %380 = vmatpush2.bf16.xpose.msra.mxu0 0
      %381 = vmatprep.subr.bf16.mxu0 0
      %382 = vmatpush2.bf16.xpose.msra.mxu0 0
      %383 = vmatprep.mubr.bf16.mxu0 0
      %384 = vmatmul.mubr.bf16.gmra.mxu0 %v346
      %v385 = vpop.f32.mrf.mxu0
      %v386 = vadd.f32 0.0, %v385
      %v387 = vpop.f32.mrf.mxu0
      %v388 = vpop.f32.mrf.mxu0
      %v389 = vpop.f32.mrf.mxu0
      %390 = vdwg.mxu0
      %v391 = vsel %vm166, %v386, -inf
      %392 = vmax.xlane.f32.xlu0 %v391
      %v393 = vpop.xlane.xlu0 %392
      %v394 = vsub.f32 %v386, %v393
      %v395 = vmul.f32 %v394, 1.442695
      %v396 = vpow.pop %v395
      %v397 = vsel %vm166, %v396, 0.0
      %398 = vadd.xlane.f32.xlu0 %v397
      %v399 = vpop.xlane.xlu0 %398
      %v400 = vrcp.pop %v399
      %v401 = vmul.f32 %v396, %v400
      %v402 = vpack.c.bf16 %v401, %v401
      %403 = vrot.lane.b32.xlu0 %v116, 56
      %v404 = vpop.permute.xlu0 %403
      %v406 = vsel %vm166, %v402, 0
      %v409 = vsel %vm184, %v404, 0
      %411 = vmatprep.subr.bf16.mxu0 0
      %412 = vmatpush1.bf16.msra.mxu0 0
      %413 = vmatprep.subr.bf16.mxu0 0
      %414 = vmatpush1.bf16.msra.mxu0 0
      %415 = vmatprep.subr.bf16.mxu0 0
      %416 = vmatpush1.bf16.msra.mxu0 0
      %417 = vmatprep.subr.bf16.mxu0 0
      %418 = vmatpush1.bf16.msra.mxu0 0
      %419 = vmatprep.subr.bf16.mxu0 0
      %420 = vmatpush1.bf16.msra.mxu0 0
      %421 = vmatprep.subr.bf16.mxu0 0
      %422 = vmatpush1.bf16.msra.mxu0 0
      %423 = vmatprep.subr.bf16.mxu0 0
      %424 = vmatpush1.bf16.msra.mxu0 0
      %425 = vmatprep.subr.bf16.mxu0 0
      %426 = vmatpush1.bf16.msra.mxu0 %v409
      %427 = vmatprep.subr.bf16.mxu0 0
      %428 = vmatpush2.bf16.msra.mxu0 0
      %429 = vmatprep.subr.bf16.mxu0 0
      %430 = vmatpush2.bf16.msra.mxu0 0
      %431 = vmatprep.subr.bf16.mxu0 0
      %432 = vmatpush2.bf16.msra.mxu0 0
      %433 = vmatprep.subr.bf16.mxu0 0
      %434 = vmatpush2.bf16.msra.mxu0 0
      %435 = vmatprep.subr.bf16.mxu0 0
      %436 = vmatpush2.bf16.msra.mxu0 0
      %437 = vmatprep.subr.bf16.mxu0 0
      %438 = vmatpush2.bf16.msra.mxu0 0
      %439 = vmatprep.subr.bf16.mxu0 0
      %440 = vmatpush2.bf16.msra.mxu0 0
      %441 = vmatprep.subr.bf16.mxu0 0
      %442 = vmatpush2.bf16.msra.mxu0 0
      %443 = vmatprep.mubr.bf16.mxu0 0
      %444 = vmatmul.mubr.bf16.gmra.mxu0 %v406
      %v445 = vpop.f32.mrf.mxu0
      %v446 = vadd.f32 0.0, %v445
      %v447 = vpop.f32.mrf.mxu0
      %v448 = vpop.f32.mrf.mxu0
      %v449 = vpop.f32.mrf.mxu0
      %450 = vdwg.mxu0
      %451 = vrot.lane.b32.xlu0 %v230, 116
      %v452 = vpop.permute.xlu0 %451
      %453 = vrot.lane.b32.xlu0 %v116, 84
      %v454 = vpop.permute.xlu0 %453
      %v456 = vsel %vm119, %v452, 0
      %v459 = vsel %vm119, %v454, 0
      %461 = vmatprep.subr.bf16.mxu0 0
      %462 = vmatpush1.bf16.xpose.msra.mxu0 0
      %463 = vmatprep.subr.bf16.mxu0 0
      %464 = vmatpush1.bf16.xpose.msra.mxu0 0
      %465 = vmatprep.subr.bf16.mxu0 0
      %466 = vmatpush1.bf16.xpose.msra.mxu0 0
      %467 = vmatprep.subr.bf16.mxu0 0
      %468 = vmatpush1.bf16.xpose.msra.mxu0 0
      %469 = vmatprep.subr.bf16.mxu0 0
      %470 = vmatpush1.bf16.xpose.msra.mxu0 0
      %471 = vmatprep.subr.bf16.mxu0 0
      %472 = vmatpush1.bf16.xpose.msra.mxu0 0
      %473 = vmatprep.subr.bf16.mxu0 0
      %474 = vmatpush1.bf16.xpose.msra.mxu0 0
      %475 = vmatprep.subr.bf16.mxu0 0
      %476 = vmatpush1.bf16.xpose.msra.mxu0 %v459
      %477 = vmatprep.subr.bf16.mxu0 0
      %478 = vmatpush2.bf16.xpose.msra.mxu0 0
      %479 = vmatprep.subr.bf16.mxu0 0
      %480 = vmatpush2.bf16.xpose.msra.mxu0 0
      %481 = vmatprep.subr.bf16.mxu0 0
      %482 = vmatpush2.bf16.xpose.msra.mxu0 0
      %483 = vmatprep.subr.bf16.mxu0 0
      %484 = vmatpush2.bf16.xpose.msra.mxu0 0
      %485 = vmatprep.subr.bf16.mxu0 0
      %486 = vmatpush2.bf16.xpose.msra.mxu0 0
      %487 = vmatprep.subr.bf16.mxu0 0
      %488 = vmatpush2.bf16.xpose.msra.mxu0 0
      %489 = vmatprep.subr.bf16.mxu0 0
      %490 = vmatpush2.bf16.xpose.msra.mxu0 0
      %491 = vmatprep.subr.bf16.mxu0 0
      %492 = vmatpush2.bf16.xpose.msra.mxu0 0
      %493 = vmatprep.mubr.bf16.mxu0 0
      %494 = vmatmul.mubr.bf16.gmra.mxu0 %v456
      %v495 = vpop.f32.mrf.mxu0
      %v496 = vadd.f32 0.0, %v495
      %v497 = vpop.f32.mrf.mxu0
      %v498 = vpop.f32.mrf.mxu0
      %v499 = vpop.f32.mrf.mxu0
      %500 = vdwg.mxu0
      %v501 = vsel %vm166, %v496, -inf
      %502 = vmax.xlane.f32.xlu0 %v501
      %v503 = vpop.xlane.xlu0 %502
      %v504 = vsub.f32 %v496, %v503
      %v505 = vmul.f32 %v504, 1.442695
      %v506 = vpow.pop %v505
      %v507 = vsel %vm166, %v506, 0.0
      %508 = vadd.xlane.f32.xlu0 %v507
      %v509 = vpop.xlane.xlu0 %508
      %v510 = vrcp.pop %v509
      %v511 = vmul.f32 %v506, %v510
      %v512 = vpack.c.bf16 %v511, %v511
      %513 = vrot.lane.b32.xlu0 %v116, 52
      %v514 = vpop.permute.xlu0 %513
      %v516 = vsel %vm166, %v512, 0
      %v519 = vsel %vm184, %v514, 0
      %521 = vmatprep.subr.bf16.mxu0 0
      %522 = vmatpush1.bf16.msra.mxu0 0
      %523 = vmatprep.subr.bf16.mxu0 0
      %524 = vmatpush1.bf16.msra.mxu0 0
      %525 = vmatprep.subr.bf16.mxu0 0
      %526 = vmatpush1.bf16.msra.mxu0 0
      %527 = vmatprep.subr.bf16.mxu0 0
      %528 = vmatpush1.bf16.msra.mxu0 0
      %529 = vmatprep.subr.bf16.mxu0 0
      %530 = vmatpush1.bf16.msra.mxu0 0
      %531 = vmatprep.subr.bf16.mxu0 0
      %532 = vmatpush1.bf16.msra.mxu0 0
      %533 = vmatprep.subr.bf16.mxu0 0
      %534 = vmatpush1.bf16.msra.mxu0 0
      %535 = vmatprep.subr.bf16.mxu0 0
      %536 = vmatpush1.bf16.msra.mxu0 %v519
      %537 = vmatprep.subr.bf16.mxu0 0
      %538 = vmatpush2.bf16.msra.mxu0 0
      %539 = vmatprep.subr.bf16.mxu0 0
      %540 = vmatpush2.bf16.msra.mxu0 0
      %541 = vmatprep.subr.bf16.mxu0 0
      %542 = vmatpush2.bf16.msra.mxu0 0
      %543 = vmatprep.subr.bf16.mxu0 0
      %544 = vmatpush2.bf16.msra.mxu0 0
      %545 = vmatprep.subr.bf16.mxu0 0
      %546 = vmatpush2.bf16.msra.mxu0 0
      %547 = vmatprep.subr.bf16.mxu0 0
      %548 = vmatpush2.bf16.msra.mxu0 0
      %549 = vmatprep.subr.bf16.mxu0 0
      %550 = vmatpush2.bf16.msra.mxu0 0
      %551 = vmatprep.subr.bf16.mxu0 0
      %552 = vmatpush2.bf16.msra.mxu0 0
      %553 = vmatprep.mubr.bf16.mxu0 0
      %554 = vmatmul.mubr.bf16.gmra.mxu0 %v516
      %v555 = vpop.f32.mrf.mxu0
      %v556 = vadd.f32 0.0, %v555
      %v557 = vpop.f32.mrf.mxu0
      %v558 = vpop.f32.mrf.mxu0
      %v559 = vpop.f32.mrf.mxu0
      %560 = vdwg.mxu0
      %561 = vrot.lane.b32.xlu0 %v230, 112
      %v562 = vpop.permute.xlu0 %561
      %563 = vrot.lane.b32.xlu0 %v116, 80
      %v564 = vpop.permute.xlu0 %563
      %v566 = vsel %vm119, %v562, 0
      %v569 = vsel %vm119, %v564, 0
      %571 = vmatprep.subr.bf16.mxu0 0
      %572 = vmatpush1.bf16.xpose.msra.mxu0 0
      %573 = vmatprep.subr.bf16.mxu0 0
      %574 = vmatpush1.bf16.xpose.msra.mxu0 0
      %575 = vmatprep.subr.bf16.mxu0 0
      %576 = vmatpush1.bf16.xpose.msra.mxu0 0
      %577 = vmatprep.subr.bf16.mxu0 0
      %578 = vmatpush1.bf16.xpose.msra.mxu0 0
      %579 = vmatprep.subr.bf16.mxu0 0
      %580 = vmatpush1.bf16.xpose.msra.mxu0 0
      %581 = vmatprep.subr.bf16.mxu0 0
      %582 = vmatpush1.bf16.xpose.msra.mxu0 0
      %583 = vmatprep.subr.bf16.mxu0 0
      %584 = vmatpush1.bf16.xpose.msra.mxu0 0
      %585 = vmatprep.subr.bf16.mxu0 0
      %586 = vmatpush1.bf16.xpose.msra.mxu0 %v569
      %587 = vmatprep.subr.bf16.mxu0 0
      %588 = vmatpush2.bf16.xpose.msra.mxu0 0
      %589 = vmatprep.subr.bf16.mxu0 0
      %590 = vmatpush2.bf16.xpose.msra.mxu0 0
      %591 = vmatprep.subr.bf16.mxu0 0
      %592 = vmatpush2.bf16.xpose.msra.mxu0 0
      %593 = vmatprep.subr.bf16.mxu0 0
      %594 = vmatpush2.bf16.xpose.msra.mxu0 0
      %595 = vmatprep.subr.bf16.mxu0 0
      %596 = vmatpush2.bf16.xpose.msra.mxu0 0
      %597 = vmatprep.subr.bf16.mxu0 0
      %598 = vmatpush2.bf16.xpose.msra.mxu0 0
      %599 = vmatprep.subr.bf16.mxu0 0
      %600 = vmatpush2.bf16.xpose.msra.mxu0 0
      %601 = vmatprep.subr.bf16.mxu0 0
      %602 = vmatpush2.bf16.xpose.msra.mxu0 0
      %603 = vmatprep.mubr.bf16.mxu0 0
      %604 = vmatmul.mubr.bf16.gmra.mxu0 %v566
      %v605 = vpop.f32.mrf.mxu0
      %v606 = vadd.f32 0.0, %v605
      %v607 = vpop.f32.mrf.mxu0
      %v608 = vpop.f32.mrf.mxu0
      %v609 = vpop.f32.mrf.mxu0
      %610 = vdwg.mxu0
      %v611 = vsel %vm166, %v606, -inf
      %612 = vmax.xlane.f32.xlu0 %v611
      %v613 = vpop.xlane.xlu0 %612
      %v614 = vsub.f32 %v606, %v613
      %v615 = vmul.f32 %v614, 1.442695
      %v616 = vpow.pop %v615
      %v617 = vsel %vm166, %v616, 0.0
      %618 = vadd.xlane.f32.xlu0 %v617
      %v619 = vpop.xlane.xlu0 %618
      %v620 = vrcp.pop %v619
      %v621 = vmul.f32 %v616, %v620
      %v622 = vpack.c.bf16 %v621, %v621
      %623 = vrot.lane.b32.xlu0 %v116, 48
      %v624 = vpop.permute.xlu0 %623
      %v626 = vsel %vm166, %v622, 0
      %v629 = vsel %vm184, %v624, 0
      %631 = vmatprep.subr.bf16.mxu0 0
      %632 = vmatpush1.bf16.msra.mxu0 0
      %633 = vmatprep.subr.bf16.mxu0 0
      %634 = vmatpush1.bf16.msra.mxu0 0
      %635 = vmatprep.subr.bf16.mxu0 0
      %636 = vmatpush1.bf16.msra.mxu0 0
      %637 = vmatprep.subr.bf16.mxu0 0
      %638 = vmatpush1.bf16.msra.mxu0 0
      %639 = vmatprep.subr.bf16.mxu0 0
      %640 = vmatpush1.bf16.msra.mxu0 0
      %641 = vmatprep.subr.bf16.mxu0 0
      %642 = vmatpush1.bf16.msra.mxu0 0
      %643 = vmatprep.subr.bf16.mxu0 0
      %644 = vmatpush1.bf16.msra.mxu0 0
      %645 = vmatprep.subr.bf16.mxu0 0
      %646 = vmatpush1.bf16.msra.mxu0 %v629
      %647 = vmatprep.subr.bf16.mxu0 0
      %648 = vmatpush2.bf16.msra.mxu0 0
      %649 = vmatprep.subr.bf16.mxu0 0
      %650 = vmatpush2.bf16.msra.mxu0 0
      %651 = vmatprep.subr.bf16.mxu0 0
      %652 = vmatpush2.bf16.msra.mxu0 0
      %653 = vmatprep.subr.bf16.mxu0 0
      %654 = vmatpush2.bf16.msra.mxu0 0
      %655 = vmatprep.subr.bf16.mxu0 0
      %656 = vmatpush2.bf16.msra.mxu0 0
      %657 = vmatprep.subr.bf16.mxu0 0
      %658 = vmatpush2.bf16.msra.mxu0 0
      %659 = vmatprep.subr.bf16.mxu0 0
      %660 = vmatpush2.bf16.msra.mxu0 0
      %661 = vmatprep.subr.bf16.mxu0 0
      %662 = vmatpush2.bf16.msra.mxu0 0
      %663 = vmatprep.mubr.bf16.mxu0 0
      %664 = vmatmul.mubr.bf16.gmra.mxu0 %v626
      %v665 = vpop.f32.mrf.mxu0
      %v666 = vadd.f32 0.0, %v665
      %v667 = vpop.f32.mrf.mxu0
      %v668 = vpop.f32.mrf.mxu0
      %v669 = vpop.f32.mrf.mxu0
      %670 = vdwg.mxu0
      %671 = vrot.lane.b32.xlu0 %v230, 108
      %v672 = vpop.permute.xlu0 %671
      %673 = vrot.lane.b32.xlu0 %v116, 76
      %v674 = vpop.permute.xlu0 %673
      %v676 = vsel %vm119, %v672, 0
      %v679 = vsel %vm119, %v674, 0
      %681 = vmatprep.subr.bf16.mxu0 0
      %682 = vmatpush1.bf16.xpose.msra.mxu0 0
      %683 = vmatprep.subr.bf16.mxu0 0
      %684 = vmatpush1.bf16.xpose.msra.mxu0 0
      %685 = vmatprep.subr.bf16.mxu0 0
      %686 = vmatpush1.bf16.xpose.msra.mxu0 0
      %687 = vmatprep.subr.bf16.mxu0 0
      %688 = vmatpush1.bf16.xpose.msra.mxu0 0
      %689 = vmatprep.subr.bf16.mxu0 0
      %690 = vmatpush1.bf16.xpose.msra.mxu0 0
      %691 = vmatprep.subr.bf16.mxu0 0
      %692 = vmatpush1.bf16.xpose.msra.mxu0 0
      %693 = vmatprep.subr.bf16.mxu0 0
      %694 = vmatpush1.bf16.xpose.msra.mxu0 0
      %695 = vmatprep.subr.bf16.mxu0 0
      %696 = vmatpush1.bf16.xpose.msra.mxu0 %v679
      %697 = vmatprep.subr.bf16.mxu0 0
      %698 = vmatpush2.bf16.xpose.msra.mxu0 0
      %699 = vmatprep.subr.bf16.mxu0 0
      %700 = vmatpush2.bf16.xpose.msra.mxu0 0
      %701 = vmatprep.subr.bf16.mxu0 0
      %702 = vmatpush2.bf16.xpose.msra.mxu0 0
      %703 = vmatprep.subr.bf16.mxu0 0
      %704 = vmatpush2.bf16.xpose.msra.mxu0 0
      %705 = vmatprep.subr.bf16.mxu0 0
      %706 = vmatpush2.bf16.xpose.msra.mxu0 0
      %707 = vmatprep.subr.bf16.mxu0 0
      %708 = vmatpush2.bf16.xpose.msra.mxu0 0
      %709 = vmatprep.subr.bf16.mxu0 0
      %710 = vmatpush2.bf16.xpose.msra.mxu0 0
      %711 = vmatprep.subr.bf16.mxu0 0
      %712 = vmatpush2.bf16.xpose.msra.mxu0 0
      %713 = vmatprep.mubr.bf16.mxu0 0
      %714 = vmatmul.mubr.bf16.gmra.mxu0 %v676
      %v715 = vpop.f32.mrf.mxu0
      %v716 = vadd.f32 0.0, %v715
      %v717 = vpop.f32.mrf.mxu0
      %v718 = vpop.f32.mrf.mxu0
      %v719 = vpop.f32.mrf.mxu0
      %720 = vdwg.mxu0
      %v721 = vsel %vm166, %v716, -inf
      %722 = vmax.xlane.f32.xlu0 %v721
      %v723 = vpop.xlane.xlu0 %722
      %v724 = vsub.f32 %v716, %v723
      %v725 = vmul.f32 %v724, 1.442695
      %v726 = vpow.pop %v725
      %v727 = vsel %vm166, %v726, 0.0
      %728 = vadd.xlane.f32.xlu0 %v727
      %v729 = vpop.xlane.xlu0 %728
      %v730 = vrcp.pop %v729
      %v731 = vmul.f32 %v726, %v730
      %v732 = vpack.c.bf16 %v731, %v731
      %733 = vrot.lane.b32.xlu0 %v116, 44
      %v734 = vpop.permute.xlu0 %733
      %v736 = vsel %vm166, %v732, 0
      %v739 = vsel %vm184, %v734, 0
      %741 = vmatprep.subr.bf16.mxu0 0
      %742 = vmatpush1.bf16.msra.mxu0 0
      %743 = vmatprep.subr.bf16.mxu0 0
      %744 = vmatpush1.bf16.msra.mxu0 0
      %745 = vmatprep.subr.bf16.mxu0 0
      %746 = vmatpush1.bf16.msra.mxu0 0
      %747 = vmatprep.subr.bf16.mxu0 0
      %748 = vmatpush1.bf16.msra.mxu0 0
      %749 = vmatprep.subr.bf16.mxu0 0
      %750 = vmatpush1.bf16.msra.mxu0 0
      %751 = vmatprep.subr.bf16.mxu0 0
      %752 = vmatpush1.bf16.msra.mxu0 0
      %753 = vmatprep.subr.bf16.mxu0 0
      %754 = vmatpush1.bf16.msra.mxu0 0
      %755 = vmatprep.subr.bf16.mxu0 0
      %756 = vmatpush1.bf16.msra.mxu0 %v739
      %757 = vmatprep.subr.bf16.mxu0 0
      %758 = vmatpush2.bf16.msra.mxu0 0
      %759 = vmatprep.subr.bf16.mxu0 0
      %760 = vmatpush2.bf16.msra.mxu0 0
      %761 = vmatprep.subr.bf16.mxu0 0
      %762 = vmatpush2.bf16.msra.mxu0 0
      %763 = vmatprep.subr.bf16.mxu0 0
      %764 = vmatpush2.bf16.msra.mxu0 0
      %765 = vmatprep.subr.bf16.mxu0 0
      %766 = vmatpush2.bf16.msra.mxu0 0
      %767 = vmatprep.subr.bf16.mxu0 0
      %768 = vmatpush2.bf16.msra.mxu0 0
      %769 = vmatprep.subr.bf16.mxu0 0
      %770 = vmatpush2.bf16.msra.mxu0 0
      %771 = vmatprep.subr.bf16.mxu0 0
      %772 = vmatpush2.bf16.msra.mxu0 0
      %773 = vmatprep.mubr.bf16.mxu0 0
      %774 = vmatmul.mubr.bf16.gmra.mxu0 %v736
      %v775 = vpop.f32.mrf.mxu0
      %v776 = vadd.f32 0.0, %v775
      %v777 = vpop.f32.mrf.mxu0
      %v778 = vpop.f32.mrf.mxu0
      %v779 = vpop.f32.mrf.mxu0
      %780 = vdwg.mxu0
      %781 = vrot.lane.b32.xlu0 %v230, 104
      %v782 = vpop.permute.xlu0 %781
      %783 = vrot.lane.b32.xlu0 %v116, 72
      %v784 = vpop.permute.xlu0 %783
      %v786 = vsel %vm119, %v782, 0
      %v789 = vsel %vm119, %v784, 0
      %791 = vmatprep.subr.bf16.mxu0 0
      %792 = vmatpush1.bf16.xpose.msra.mxu0 0
      %793 = vmatprep.subr.bf16.mxu0 0
      %794 = vmatpush1.bf16.xpose.msra.mxu0 0
      %795 = vmatprep.subr.bf16.mxu0 0
      %796 = vmatpush1.bf16.xpose.msra.mxu0 0
      %797 = vmatprep.subr.bf16.mxu0 0
      %798 = vmatpush1.bf16.xpose.msra.mxu0 0
      %799 = vmatprep.subr.bf16.mxu0 0
      %800 = vmatpush1.bf16.xpose.msra.mxu0 0
      %801 = vmatprep.subr.bf16.mxu0 0
      %802 = vmatpush1.bf16.xpose.msra.mxu0 0
      %803 = vmatprep.subr.bf16.mxu0 0
      %804 = vmatpush1.bf16.xpose.msra.mxu0 0
      %805 = vmatprep.subr.bf16.mxu0 0
      %806 = vmatpush1.bf16.xpose.msra.mxu0 %v789
      %807 = vmatprep.subr.bf16.mxu0 0
      %808 = vmatpush2.bf16.xpose.msra.mxu0 0
      %809 = vmatprep.subr.bf16.mxu0 0
      %810 = vmatpush2.bf16.xpose.msra.mxu0 0
      %811 = vmatprep.subr.bf16.mxu0 0
      %812 = vmatpush2.bf16.xpose.msra.mxu0 0
      %813 = vmatprep.subr.bf16.mxu0 0
      %814 = vmatpush2.bf16.xpose.msra.mxu0 0
      %815 = vmatprep.subr.bf16.mxu0 0
      %816 = vmatpush2.bf16.xpose.msra.mxu0 0
      %817 = vmatprep.subr.bf16.mxu0 0
      %818 = vmatpush2.bf16.xpose.msra.mxu0 0
      %819 = vmatprep.subr.bf16.mxu0 0
      %820 = vmatpush2.bf16.xpose.msra.mxu0 0
      %821 = vmatprep.subr.bf16.mxu0 0
      %822 = vmatpush2.bf16.xpose.msra.mxu0 0
      %823 = vmatprep.mubr.bf16.mxu0 0
      %824 = vmatmul.mubr.bf16.gmra.mxu0 %v786
      %v825 = vpop.f32.mrf.mxu0
      %v826 = vadd.f32 0.0, %v825
      %v827 = vpop.f32.mrf.mxu0
      %v828 = vpop.f32.mrf.mxu0
      %v829 = vpop.f32.mrf.mxu0
      %830 = vdwg.mxu0
      %v831 = vsel %vm166, %v826, -inf
      %832 = vmax.xlane.f32.xlu0 %v831
      %v833 = vpop.xlane.xlu0 %832
      %v834 = vsub.f32 %v826, %v833
      %v835 = vmul.f32 %v834, 1.442695
      %v836 = vpow.pop %v835
      %v837 = vsel %vm166, %v836, 0.0
      %838 = vadd.xlane.f32.xlu0 %v837
      %v839 = vpop.xlane.xlu0 %838
      %v840 = vrcp.pop %v839
      %v841 = vmul.f32 %v836, %v840
      %v842 = vpack.c.bf16 %v841, %v841
      %843 = vrot.lane.b32.xlu0 %v116, 40
      %v844 = vpop.permute.xlu0 %843
      %v846 = vsel %vm166, %v842, 0
      %v849 = vsel %vm184, %v844, 0
      %851 = vmatprep.subr.bf16.mxu0 0
      %852 = vmatpush1.bf16.msra.mxu0 0
      %853 = vmatprep.subr.bf16.mxu0 0
      %854 = vmatpush1.bf16.msra.mxu0 0
      %855 = vmatprep.subr.bf16.mxu0 0
      %856 = vmatpush1.bf16.msra.mxu0 0
      %857 = vmatprep.subr.bf16.mxu0 0
      %858 = vmatpush1.bf16.msra.mxu0 0
      %859 = vmatprep.subr.bf16.mxu0 0
      %860 = vmatpush1.bf16.msra.mxu0 0
      %861 = vmatprep.subr.bf16.mxu0 0
      %862 = vmatpush1.bf16.msra.mxu0 0
      %863 = vmatprep.subr.bf16.mxu0 0
      %864 = vmatpush1.bf16.msra.mxu0 0
      %865 = vmatprep.subr.bf16.mxu0 0
      %866 = vmatpush1.bf16.msra.mxu0 %v849
      %867 = vmatprep.subr.bf16.mxu0 0
      %868 = vmatpush2.bf16.msra.mxu0 0
      %869 = vmatprep.subr.bf16.mxu0 0
      %870 = vmatpush2.bf16.msra.mxu0 0
      %871 = vmatprep.subr.bf16.mxu0 0
      %872 = vmatpush2.bf16.msra.mxu0 0
      %873 = vmatprep.subr.bf16.mxu0 0
      %874 = vmatpush2.bf16.msra.mxu0 0
      %875 = vmatprep.subr.bf16.mxu0 0
      %876 = vmatpush2.bf16.msra.mxu0 0
      %877 = vmatprep.subr.bf16.mxu0 0
      %878 = vmatpush2.bf16.msra.mxu0 0
      %879 = vmatprep.subr.bf16.mxu0 0
      %880 = vmatpush2.bf16.msra.mxu0 0
      %881 = vmatprep.subr.bf16.mxu0 0
      %882 = vmatpush2.bf16.msra.mxu0 0
      %883 = vmatprep.mubr.bf16.mxu0 0
      %884 = vmatmul.mubr.bf16.gmra.mxu0 %v846
      %v885 = vpop.f32.mrf.mxu0
      %v886 = vadd.f32 0.0, %v885
      %v887 = vpop.f32.mrf.mxu0
      %v888 = vpop.f32.mrf.mxu0
      %v889 = vpop.f32.mrf.mxu0
      %890 = vdwg.mxu0
      %891 = vrot.lane.b32.xlu0 %v230, 100
      %v892 = vpop.permute.xlu0 %891
      %893 = vrot.lane.b32.xlu0 %v116, 68
      %v894 = vpop.permute.xlu0 %893
      %v896 = vsel %vm119, %v892, 0
      %v899 = vsel %vm119, %v894, 0
      %901 = vmatprep.subr.bf16.mxu0 0
      %902 = vmatpush1.bf16.xpose.msra.mxu0 0
      %903 = vmatprep.subr.bf16.mxu0 0
      %904 = vmatpush1.bf16.xpose.msra.mxu0 0
      %905 = vmatprep.subr.bf16.mxu0 0
      %906 = vmatpush1.bf16.xpose.msra.mxu0 0
      %907 = vmatprep.subr.bf16.mxu0 0
      %908 = vmatpush1.bf16.xpose.msra.mxu0 0
      %909 = vmatprep.subr.bf16.mxu0 0
      %910 = vmatpush1.bf16.xpose.msra.mxu0 0
      %911 = vmatprep.subr.bf16.mxu0 0
      %912 = vmatpush1.bf16.xpose.msra.mxu0 0
      %913 = vmatprep.subr.bf16.mxu0 0
      %914 = vmatpush1.bf16.xpose.msra.mxu0 0
      %915 = vmatprep.subr.bf16.mxu0 0
      %916 = vmatpush1.bf16.xpose.msra.mxu0 %v899
      %917 = vmatprep.subr.bf16.mxu0 0
      %918 = vmatpush2.bf16.xpose.msra.mxu0 0
      %919 = vmatprep.subr.bf16.mxu0 0
      %920 = vmatpush2.bf16.xpose.msra.mxu0 0
      %921 = vmatprep.subr.bf16.mxu0 0
      %922 = vmatpush2.bf16.xpose.msra.mxu0 0
      %923 = vmatprep.subr.bf16.mxu0 0
      %924 = vmatpush2.bf16.xpose.msra.mxu0 0
      %925 = vmatprep.subr.bf16.mxu0 0
      %926 = vmatpush2.bf16.xpose.msra.mxu0 0
      %927 = vmatprep.subr.bf16.mxu0 0
      %928 = vmatpush2.bf16.xpose.msra.mxu0 0
      %929 = vmatprep.subr.bf16.mxu0 0
      %930 = vmatpush2.bf16.xpose.msra.mxu0 0
      %931 = vmatprep.subr.bf16.mxu0 0
      %932 = vmatpush2.bf16.xpose.msra.mxu0 0
      %933 = vmatprep.mubr.bf16.mxu0 0
      %934 = vmatmul.mubr.bf16.gmra.mxu0 %v896
      %v935 = vpop.f32.mrf.mxu0
      %v936 = vadd.f32 0.0, %v935
      %v937 = vpop.f32.mrf.mxu0
      %v938 = vpop.f32.mrf.mxu0
      %v939 = vpop.f32.mrf.mxu0
      %940 = vdwg.mxu0
      %v941 = vsel %vm166, %v936, -inf
      %942 = vmax.xlane.f32.xlu0 %v941
      %v943 = vpop.xlane.xlu0 %942
      %v944 = vsub.f32 %v936, %v943
      %v945 = vmul.f32 %v944, 1.442695
      %v946 = vpow.pop %v945
      %v947 = vsel %vm166, %v946, 0.0
      %948 = vadd.xlane.f32.xlu0 %v947
      %v949 = vpop.xlane.xlu0 %948
      %v950 = vrcp.pop %v949
      %v951 = vmul.f32 %v946, %v950
      %v952 = vpack.c.bf16 %v951, %v951
      %953 = vrot.lane.b32.xlu0 %v116, 36
      %v954 = vpop.permute.xlu0 %953
      %v956 = vsel %vm166, %v952, 0
      %v959 = vsel %vm184, %v954, 0
      %961 = vmatprep.subr.bf16.mxu0 0
      %962 = vmatpush1.bf16.msra.mxu0 0
      %963 = vmatprep.subr.bf16.mxu0 0
      %964 = vmatpush1.bf16.msra.mxu0 0
      %965 = vmatprep.subr.bf16.mxu0 0
      %966 = vmatpush1.bf16.msra.mxu0 0
      %967 = vmatprep.subr.bf16.mxu0 0
      %968 = vmatpush1.bf16.msra.mxu0 0
      %969 = vmatprep.subr.bf16.mxu0 0
      %970 = vmatpush1.bf16.msra.mxu0 0
      %971 = vmatprep.subr.bf16.mxu0 0
      %972 = vmatpush1.bf16.msra.mxu0 0
      %973 = vmatprep.subr.bf16.mxu0 0
      %974 = vmatpush1.bf16.msra.mxu0 0
      %975 = vmatprep.subr.bf16.mxu0 0
      %976 = vmatpush1.bf16.msra.mxu0 %v959
      %977 = vmatprep.subr.bf16.mxu0 0
      %978 = vmatpush2.bf16.msra.mxu0 0
      %979 = vmatprep.subr.bf16.mxu0 0
      %980 = vmatpush2.bf16.msra.mxu0 0
      %981 = vmatprep.subr.bf16.mxu0 0
      %982 = vmatpush2.bf16.msra.mxu0 0
      %983 = vmatprep.subr.bf16.mxu0 0
      %984 = vmatpush2.bf16.msra.mxu0 0
      %985 = vmatprep.subr.bf16.mxu0 0
      %986 = vmatpush2.bf16.msra.mxu0 0
      %987 = vmatprep.subr.bf16.mxu0 0
      %988 = vmatpush2.bf16.msra.mxu0 0
      %989 = vmatprep.subr.bf16.mxu0 0
      %990 = vmatpush2.bf16.msra.mxu0 0
      %991 = vmatprep.subr.bf16.mxu0 0
      %992 = vmatpush2.bf16.msra.mxu0 0
      %993 = vmatprep.mubr.bf16.mxu0 0
      %994 = vmatmul.mubr.bf16.gmra.mxu0 %v956
      %v995 = vpop.f32.mrf.mxu0
      %v996 = vadd.f32 0.0, %v995
      %v997 = vpop.f32.mrf.mxu0
      %v998 = vpop.f32.mrf.mxu0
      %v999 = vpop.f32.mrf.mxu0
      %1000 = vdwg.mxu0
      %1002 = vrot.lane.b32.xlu0 %v336, 4
      %v1003 = vpop.permute.xlu0 %1002
      %1006 = vrot.lane.b32.xlu0 %v446, 8
      %v1007 = vpop.permute.xlu0 %1006
      %1010 = vrot.lane.b32.xlu0 %v556, 12
      %v1011 = vpop.permute.xlu0 %1010
      %1014 = vrot.lane.b32.xlu0 %v666, 16
      %v1015 = vpop.permute.xlu0 %1014
      %1018 = vrot.lane.b32.xlu0 %v776, 20
      %v1019 = vpop.permute.xlu0 %1018
      %1022 = vrot.lane.b32.xlu0 %v886, 24
      %v1023 = vpop.permute.xlu0 %1022
      %1026 = vrot.lane.b32.xlu0 %v996, 28
      %v1027 = vpop.permute.xlu0 %1026
      %v1029 = vsel %vm119, %v223, %v1003
      %v1030 = vsel %vm166, %v1029, %v1007
      %vm1031 = vcmask 97280
      %v1032 = vsel %vm1031, %v1030, %v1011
      %vm1033 = vcmask 130048
      %v1034 = vsel %vm1033, %v1032, %v1015
      %vm1035 = vcmask 162816
      %v1036 = vsel %vm1035, %v1034, %v1019
      %vm1037 = vcmask 195584
      %v1038 = vsel %vm1037, %v1036, %v1023
      %vm1039 = vcmask 228352
      %v1040 = vsel %vm1039, %v1038, %v1027
      %vm1041 = vcmask 261120
      %v1042 = vsel %vm1041, %v1040, 0.0
      %v1043 = vrot.slane %v1042, 4
      %v1044 = vadd.f32 %v1042, %v1043
      %v1045 = vrot.slane %v1044, 2
      %v1046 = vadd.f32 %v1044, %v1045
      %v1047 = vrot.slane %v1046, 1
      %v1048 = vadd.f32 %v1046, %v1047
      %v1049 = vmul.f32 %v1048, 0.125
      %v1050 = vpack.c.bf16 %v1049, %v1049
      %vm1051 = vcmask 253952
      %vm1052 = vsmask.f32 256
      %vm1053 = vmand %vm1051, %vm1052
      %v1054 = vld [vmem:[%s109] sm:$0x1]
      %v1055 = vsel %vm1053, %v1050, %v1054
      %1056 = vst [vmem:[%s109] sm:$0x1] %v1055
      %p1057 = scmp.lt.s32.totalorder %s12, 1
      %s1058 = scalar_select %p1057, %s12, 1
      %s1059 = scalar_lea.vmem %s1, %s1058
      // Predicated region
      $region25: #{bert_classifier_forward.34} parent=23 // pred_check
        %p1060 = pneg %p56
      $region26: #{bert_classifier_forward.34} parent=23 // pred_check_branch
        %1062 = sbr.rel (%p1060) target = $region28
      $region27: #{bert_classifier_forward.34} parent=23 // pred_region
        _
      $region28: #{bert_classifier_forward.34} parent=23 // pred_fallthru
        _
    $region24: #{bert_classifier_forward.34} parent=5 // pred_fallthru
      _
    %p1063 = scmp.le.s32.totalorder 2, %s7
    // Predicated region
    $region29: #{bert_classifier_forward.34} parent=5 // pred_check
      %p1064 = pneg %p1063
    $region30: #{bert_classifier_forward.34} parent=5 // pred_check_branch
      %1066 = sbr.rel (%p1064) target = $region32
    $region31: #{bert_classifier_forward.34} parent=5 // pred_region
      %s1067 = ssub.s32 %s7, 2
      // Predicated region
      $region33: #{bert_classifier_forward.34} parent=31 // pred_check
        %p1068 = pneg %p62
      $region34: #{bert_classifier_forward.34} parent=31 // pred_check_branch
        %1070 = sbr.rel (%p1068) target = $region36
      $region35: #{bert_classifier_forward.34} parent=31 // pred_region
        %p1071 = scmp.lt.s32.totalorder %s13, 1
        %s1072 = scalar_select %p1071, %s13, 1
        %s1073 = scalar_lea.vmem %s1, %s1072
      $region36: #{bert_classifier_forward.34} parent=31 // pred_fallthru
        _
    $region32: #{bert_classifier_forward.34} parent=5 // pred_fallthru
      _
  $region6: #{bert_classifier_forward.34} parent=0 // loop_footer
    %s11 = sadd.s32 1, %s7
  $region7: #{bert_classifier_forward.34} parent=0 // loop_footer_branch
    %6 = sbr.rel target = $region3
  $region8: #{bert_classifier_forward.34} parent=0 // loop_exit
    _

// kernel: bert_classifier_forward.31
$region0: #{bert_classifier_forward.31}
  #allocation0 [shape = 'u32[]', space=smem, size = 0x4, offset = 0x4, fixed_abs, tag = 'smem constant byte address 0x4 - core index']
  #allocation1 [shape = 'u32[144,128]{1,0:T(1,128)}', space=vmem, size = 0x12000, scoped, tag = 'internal scratch']
  #allocation2 [shape = 'f32[2,32]{1,0:T(2,128)}', space=vmem, size = 0x400, scoped, tag = 'scratch operand']
  %s0 = inlined_call_operand.vmem [shape: bf16[2,32], index: 0, kind: input, shape index: {}]
  %s1 = inlined_call_operand.vmem [shape: bf16[32,32], index: 1, kind: input, shape index: {}]
  %s2 = inlined_call_operand.vmem [shape: f32[1,32], index: 2, kind: input, shape index: {}]
  %s3 = inlined_call_operand.vmem [shape: bf16[2,32], index: 3, kind: output, shape index: {}]
  %s4 = sld [smem:[#allocation0]]
  $region30: #{bert_classifier_forward.31} parent=0
    _
  %s6 = ssub.s32 1, %s4
  %s7 = scalar_select 0, %s6, %s4
  // Predicated region
  $region2: #{bert_classifier_forward.31} parent=0 // pred_check
    _
  $region3: #{bert_classifier_forward.31} parent=0 // pred_check_branch
    %9 = sbr.rel (0) target = $region5
  $region4: #{bert_classifier_forward.31} parent=0 // pred_region
    _
  $region5: #{bert_classifier_forward.31} parent=0 // pred_fallthru
    _
  // Predicated region
  $region6: #{bert_classifier_forward.31} parent=0 // pred_check
    _
  $region7: #{bert_classifier_forward.31} parent=0 // pred_check_branch
    %11 = sbr.rel (0) target = $region9
  $region8: #{bert_classifier_forward.31} parent=0 // pred_region
    _
  $region9: #{bert_classifier_forward.31} parent=0 // pred_fallthru
    _
  // Predicated region
  $region10: #{bert_classifier_forward.31} parent=0 // pred_check
    _
  $region11: #{bert_classifier_forward.31} parent=0 // pred_check_branch
    %13 = sbr.rel (0) target = $region13
  $region12: #{bert_classifier_forward.31} parent=0 // pred_region
    _
  $region13: #{bert_classifier_forward.31} parent=0 // pred_fallthru
    _
  %p15 = scmp.eq.s32.totalorder 0, 0
  // Predicated region
  $region14: #{bert_classifier_forward.31} parent=0 // pred_check
    %p16 = pneg %p15
  $region15: #{bert_classifier_forward.31} parent=0 // pred_check_branch
    %18 = sbr.rel (%p16) target = $region17
  $region16: #{bert_classifier_forward.31} parent=0 // pred_region
    %vm19 = vcmask 254976
    %20 = vst.msk [vmem:[#allocation2] sm:$0x3] %vm19, 0.0
  $region17: #{bert_classifier_forward.31} parent=0 // pred_fallthru
    _
  %v21 = vld [vmem:[#allocation2] sm:$0x3]
  %v22 = vld [vmem:[%s0] sm:$0x1]
  %v23 = vld [vmem:[%s1] sm:$0xf]
  %v24 = vld [vmem:[%s1 + $0x4] sm:$0xf]
  %v25 = vld [vmem:[%s1 + $0x8] sm:$0xf]
  %v26 = vld [vmem:[%s1 + $0xc] sm:$0xf]
  %v31 = vunpack.c.l.b16 %v23
  %v32 = vunpack.c.l.b16 %v24
  %v33 = vunpack.c.l.b16 %v25
  %v34 = vunpack.c.l.b16 %v26
  %v35 = vpack.c.b16 %v32, %v31
  %v36 = vpack.c.b16 %v34, %v33
  %vm39 = vcmask 261120
  %v41 = vsel %vm39, %v22, 0
  %43 = vmatprep.subr.bf16.mxu0 0
  %44 = vmatpush1.bf16.msra.mxu0 0
  %45 = vmatprep.subr.bf16.mxu0 0
  %46 = vmatpush1.bf16.msra.mxu0 0
  %47 = vmatprep.subr.bf16.mxu0 0
  %48 = vmatpush1.bf16.msra.mxu0 0
  %49 = vmatprep.subr.bf16.mxu0 0
  %50 = vmatpush1.bf16.msra.mxu0 0
  %51 = vmatprep.subr.bf16.mxu0 0
  %52 = vmatpush1.bf16.msra.mxu0 0
  %53 = vmatprep.subr.bf16.mxu0 0
  %54 = vmatpush1.bf16.msra.mxu0 0
  %55 = vmatprep.subr.bf16.mxu0 0
  %56 = vmatpush1.bf16.msra.mxu0 %v36
  %57 = vmatprep.subr.bf16.mxu0 0
  %58 = vmatpush1.bf16.msra.mxu0 %v35
  %59 = vmatprep.subr.bf16.mxu0 0
  %60 = vmatpush2.bf16.msra.mxu0 0
  %61 = vmatprep.subr.bf16.mxu0 0
  %62 = vmatpush2.bf16.msra.mxu0 0
  %63 = vmatprep.subr.bf16.mxu0 0
  %64 = vmatpush2.bf16.msra.mxu0 0
  %65 = vmatprep.subr.bf16.mxu0 0
  %66 = vmatpush2.bf16.msra.mxu0 0
  %67 = vmatprep.subr.bf16.mxu0 0
  %68 = vmatpush2.bf16.msra.mxu0 0
  %69 = vmatprep.subr.bf16.mxu0 0
  %70 = vmatpush2.bf16.msra.mxu0 0
  %71 = vmatprep.subr.bf16.mxu0 0
  %72 = vmatpush2.bf16.msra.mxu0 0
  %73 = vmatprep.subr.bf16.mxu0 0
  %74 = vmatpush2.bf16.msra.mxu0 0
  %75 = vmatprep.mubr.bf16.mxu0 0
  %76 = vmatmul.mubr.bf16.gmra.mxu0 %v41
  %v77 = vpop.f32.mrf.mxu0
  %v78 = vadd.f32 0.0, %v77
  %v79 = vpop.f32.mrf.mxu0
  %v80 = vpop.f32.mrf.mxu0
  %v81 = vpop.f32.mrf.mxu0
  %82 = vdwg.mxu0
  %v83 = vadd.f32 %v21, %v78
  %vm84 = vcmask 254976
  %85 = vst.msk [vmem:[#allocation2] sm:$0x3] %vm84, %v83
  // Predicated region
  $region18: #{bert_classifier_forward.31} parent=0 // pred_check
    %p86 = pneg %p15
  $region19: #{bert_classifier_forward.31} parent=0 // pred_check_branch
    %88 = sbr.rel (%p86) target = $region21
  $region20: #{bert_classifier_forward.31} parent=0 // pred_region
    %v89 = vld [vmem:[#allocation2] sm:$0x3]
    %v90 = vld [vmem:[%s2] sm:$0x1]
    %v92 = vlaneseq
    %v93 = vshrl.u32 %v92, 7
    %v94 = vsub.s32 0, %v93
    %v95 = vrot.slane %v90, %v94
    %v97 = vadd.f32 %v89, %v95
    %v98 = vtanh.pop %v97
    %v99 = vpack.c.bf16 %v98, %v98
    %vm100 = vcmask 253952
    %101 = vst.msk [vmem:[%s3] sm:$0x1] %vm100, %v99
  $region21: #{bert_classifier_forward.31} parent=0 // pred_fallthru
    _
  // Predicated region
  $region22: #{bert_classifier_forward.31} parent=0 // pred_check
    _
  $region23: #{bert_classifier_forward.31} parent=0 // pred_check_branch
    %103 = sbr.rel (0) target = $region25
  $region24: #{bert_classifier_forward.31} parent=0 // pred_region
    _
  $region25: #{bert_classifier_forward.31} parent=0 // pred_fallthru
    _
  // Predicated region
  $region26: #{bert_classifier_forward.31} parent=0 // pred_check
    _
  $region27: #{bert_classifier_forward.31} parent=0 // pred_check_branch
    %105 = sbr.rel (0) target = $region29
  $region28: #{bert_classifier_forward.31} parent=0 // pred_region
    _
  $region29: #{bert_classifier_forward.31} parent=0 // pred_fallthru
    _

// kernel: bert_classifier_forward.32
$region0: #{bert_classifier_forward.32}
  #allocation0 [shape = 'u32[]', space=smem, size = 0x4, offset = 0x4, fixed_abs, tag = 'smem constant byte address 0x4 - core index']
  #allocation1 [shape = 'u32[144,128]{1,0:T(1,128)}', space=vmem, size = 0x12000, scoped, tag = 'internal scratch']
  %s0 = inlined_call_operand.vmem [shape: s32[2,1,8], index: 0, kind: input, shape index: {}]
  %s1 = inlined_call_operand.vmem [shape: bf16[16,32], index: 1, kind: input, shape index: {}]
  %s2 = inlined_call_operand.vmem [shape: bf16[2,1,32], index: 2, kind: output, shape index: {}]
  %s3 = sld [smem:[#allocation0]]
  $region41: #{bert_classifier_forward.32} parent=0
    _
  %s5 = ssub.s32 1, %s3
  %s6 = scalar_select 0, %s5, %s3
  loop: start=0, step=1, limit=4
  $region2: #{bert_classifier_forward.32} parent=0 // loop_pre_header
    _
  $region3: #{bert_classifier_forward.32} parent=0 // loop_header
    %s8 = sphi 0, %s12
    %p9 = scmp.ge.s32.totalorder %s8, 4
    %s18 = sphi 0, %s20
    %s21 = sphi 0, %s18
    %s22 = sphi 0, %s21
    %s38 = sphi 0, %s22
    %s44 = sphi 0, %s46
    %s47 = sphi 0, %s44
    %s48 = sphi 0, %s47
    %s64 = sphi 0, %s48
    %s70 = sphi 0, %s72
    %s73 = sphi 0, %s70
    %s74 = sphi 0, %s73
    %s90 = sphi 0, %s74
  $region4: #{bert_classifier_forward.32} parent=0 // loop_header_branch
    %11 = sbr.rel (%p9) target = $region8
  $region5: #{bert_classifier_forward.32} parent=0 // loop_body
    %s13 = ssub.s32 %s8, 1
    %s14 = ssub.s32 %s8, 2
    %s15 = sadd.s32 %s8, 1
    %s16 = ssub.s32 %s8, %s15
    %p17 = scmp.eq.s32.totalorder %s16, 0
    %s19 = sadd.s32 %s18, 1
    %s20 = scalar_select %p17, %s18, %s19
    %p23 = pneg %p17
    %p24 = scmp.eq.s32.totalorder %s8, 1
    %p25 = por %p23, %p24
    %p26 = scmp.ne.s32.totalorder %s18, %s21
    %p27 = scmp.eq.s32.totalorder %s8, 0
    %p28 = por %p26, %p27
    %p29 = scmp.ne.s32.totalorder %s18, %s21
    %p30 = scmp.eq.s32.totalorder %s13, 1
    %p31 = por %p29, %p30
    %p32 = scmp.ne.s32.totalorder %s21, %s22
    %p33 = scmp.eq.s32.totalorder %s13, 0
    %p34 = por %p32, %p33
    %p35 = scmp.ne.s32.totalorder %s21, %s22
    %p36 = scmp.eq.s32.totalorder %s14, 1
    %p37 = por %p35, %p36
    %p39 = scmp.ne.s32.totalorder %s22, %s38
    %p40 = scmp.eq.s32.totalorder %s14, 0
    %p41 = por %p39, %p40
    %s42 = ssub.s32 %s8, %s15
    %p43 = scmp.eq.s32.totalorder %s42, 0
    %s45 = sadd.s32 %s44, 1
    %s46 = scalar_select %p43, %s44, %s45
    %p49 = pneg %p43
    %p50 = scmp.eq.s32.totalorder %s8, 1
    %p51 = por %p49, %p50
    %p52 = scmp.ne.s32.totalorder %s44, %s47
    %p53 = scmp.eq.s32.totalorder %s8, 0
    %p54 = por %p52, %p53
    %p55 = scmp.ne.s32.totalorder %s44, %s47
    %p56 = scmp.eq.s32.totalorder %s13, 1
    %p57 = por %p55, %p56
    %p58 = scmp.ne.s32.totalorder %s47, %s48
    %p59 = scmp.eq.s32.totalorder %s13, 0
    %p60 = por %p58, %p59
    %p61 = scmp.ne.s32.totalorder %s47, %s48
    %p62 = scmp.eq.s32.totalorder %s14, 1
    %p63 = por %p61, %p62
    %p65 = scmp.ne.s32.totalorder %s48, %s64
    %p66 = scmp.eq.s32.totalorder %s14, 0
    %p67 = por %p65, %p66
    %s68 = ssub.s32 %s8, %s15
    %p69 = scmp.eq.s32.totalorder %s68, 0
    %s71 = sadd.s32 %s70, 1
    %s72 = scalar_select %p69, %s70, %s71
    %p75 = pneg %p69
    %p76 = scmp.eq.s32.totalorder %s8, 1
    %p77 = por %p75, %p76
    %p78 = scmp.ne.s32.totalorder %s70, %s73
    %p79 = scmp.eq.s32.totalorder %s8, 0
    %p80 = por %p78, %p79
    %p81 = scmp.ne.s32.totalorder %s70, %s73
    %p82 = scmp.eq.s32.totalorder %s13, 1
    %p83 = por %p81, %p82
    %p84 = scmp.ne.s32.totalorder %s73, %s74
    %p85 = scmp.eq.s32.totalorder %s13, 0
    %p86 = por %p84, %p85
    %p87 = scmp.ne.s32.totalorder %s73, %s74
    %p88 = scmp.eq.s32.totalorder %s14, 1
    %p89 = por %p87, %p88
    %p91 = scmp.ne.s32.totalorder %s74, %s90
    %p92 = scmp.eq.s32.totalorder %s14, 0
    %p93 = por %p91, %p92
    %p94 = scmp.le.s32.totalorder 1, %s8
    %p95 = scmp.lt.s32.totalorder %s8, 3
    %p96 = pnand %p94, %p95
    %p97 = pneg %p96
    // Predicated region
    $region9: #{bert_classifier_forward.32} parent=5 // pred_check
      _
    $region10: #{bert_classifier_forward.32} parent=5 // pred_check_branch
      %99 = sbr.rel (%p96) target = $region12
    $region11: #{bert_classifier_forward.32} parent=5 // pred_region
      %s100 = ssub.s32 %s8, 1
    $region12: #{bert_classifier_forward.32} parent=5 // pred_fallthru
      _
    %p101 = scmp.lt.s32.totalorder %s8, 2
    // Predicated region
    $region13: #{bert_classifier_forward.32} parent=5 // pred_check
      %p102 = pneg %p101
    $region14: #{bert_classifier_forward.32} parent=5 // pred_check_branch
      %104 = sbr.rel (%p102) target = $region16
    $region15: #{bert_classifier_forward.32} parent=5 // pred_region
      // Predicated region
      $region17: #{bert_classifier_forward.32} parent=15 // pred_check
        %p105 = pneg %p28
      $region18: #{bert_classifier_forward.32} parent=15 // pred_check_branch
        %107 = sbr.rel (%p105) target = $region20
      $region19: #{bert_classifier_forward.32} parent=15 // pred_region
        %p108 = scmp.lt.s32.totalorder %s8, 1
        %s109 = scalar_select %p108, %s8, 1
        %s110 = scalar_lea.vmem %s0, %s109
      $region20: #{bert_classifier_forward.32} parent=15 // pred_fallthru
        _
      // Predicated region
      $region21: #{bert_classifier_forward.32} parent=15 // pred_check
        %p111 = pneg %p54
      $region22: #{bert_classifier_forward.32} parent=15 // pred_check_branch
        %113 = sbr.rel (%p111) target = $region24
      $region23: #{bert_classifier_forward.32} parent=15 // pred_region
        %p114 = scmp.lt.s32.totalorder %s8, 1
        %s115 = scalar_select %p114, %s8, 1
        %s116 = smul.addr %s115, 4
        %s117 = scalar_lea.vmem %s1, %s116
      $region24: #{bert_classifier_forward.32} parent=15 // pred_fallthru
        _
    $region16: #{bert_classifier_forward.32} parent=5 // pred_fallthru
      _
    %p118 = scmp.le.s32.totalorder 1, %s8
    %p119 = scmp.lt.s32.totalorder %s8, 3
    %p120 = pnand %p118, %p119
    %p121 = pneg %p120
    // Predicated region
    $region25: #{bert_classifier_forward.32} parent=5 // pred_check
      _
    $region26: #{bert_classifier_forward.32} parent=5 // pred_check_branch
      %123 = sbr.rel (%p120) target = $region28
    $region27: #{bert_classifier_forward.32} parent=5 // pred_region
      %s124 = ssub.s32 %s8, 1
      %p125 = scmp.lt.s32.totalorder %s13, 1
      %s126 = scalar_select %p125, %s13, 1
      %s127 = scalar_lea.vmem %s0, %s126
      %p128 = pneg %p34
      %p129 = pneg %p31
      %p130 = scmp.lt.s32.totalorder %s13, 1
      %s131 = scalar_select %p130, %s13, 1
      %s132 = smul.addr %s131, 4
      %s133 = scalar_lea.vmem %s1, %s132
      %p134 = pneg %p60
      %p135 = pneg %p57
      %p136 = pneg %p86
      %p137 = pneg %p83
      %p138 = scmp.lt.s32.totalorder %s13, 1
      %s139 = scalar_select %p138, %s13, 1
      %s140 = scalar_lea.vmem %s2, %s139
      %p141 = scmp.lt.s32.totalorder %s13, 1
      %s142 = scalar_select %p141, %s13, 1
      %s143 = scalar_lea.vmem %s0, %s142
      %p144 = scmp.lt.s32.totalorder %s13, 1
      %s145 = scalar_select %p144, %s13, 1
      %s146 = smul.addr %s145, 4
      %s147 = scalar_lea.vmem %s1, %s146
      %p148 = scmp.lt.s32.totalorder %s13, 1
      %s149 = scalar_select %p148, %s13, 1
      %s150 = scalar_lea.vmem %s2, %s149
      %v151 = vld [vmem:[%s143] sm:$0x1]
      %v152 = vld [vmem:[%s147] sm:$0xf]
      %v153 = vunpack.c.l.bf16 %v152
      %v154 = vlaneseq
      %v155 = vand.u32 %v154, 127
      %vm156 = vcmp.eq.s32.totalorder %v151, 102
      %v157 = vsel %vm156, 1, 0
      %vm158 = vcmask 57344
      %v159 = vsel %vm158, %v157, 0
      %v160 = vand.u32 %v159, 65535
      %v161 = vshrl.u32 %v159, 16
      %v162 = vcvt.s32.f32 %v160
      %v163 = vcvt.s32.f32 %v161
      %164 = vadd.xlane.f32.xlu0 %v162
      %v165 = vpop.xlane.xlu0 %164
      %166 = vadd.xlane.f32.xlu0 %v163
      %v167 = vpop.xlane.xlu0 %166
      %v168 = vcvt.f32.s32 %v165
      %v169 = vcvt.f32.s32 %v167
      %v170 = vshll.u32 %v169, 16
      %v171 = vadd.s32 %v170, %v168
      %v172 = vrot.slane %v171, 4
      %v173 = vadd.s32 %v171, %v172
      %v174 = vrot.slane %v173, 2
      %v175 = vadd.s32 %v173, %v174
      %v176 = vrot.slane %v175, 1
      %v177 = vadd.s32 %v175, %v176
      %s178 = vtos %v177
      %v179 = vsel %vm156, %v155, 8
      %v180 = vsel %vm158, %v179, 2147483647
      %v181 = vand.u32 %v180, 65535
      %v182 = vshra.s32 %v180, 16
      %v183 = vcvt.s32.f32 %v181
      %v184 = vcvt.s32.f32 %v182
      %185 = vmin.xlane.f32.xlu0 %v184
      %v186 = vpop.xlane.xlu0 %185
      %vm187 = vcmp.eq.f32.partialorder %v184, %v186
      %v188 = vsel %vm187, %v183, inf
      %189 = vmin.xlane.f32.xlu0 %v188
      %v190 = vpop.xlane.xlu0 %189
      %v191 = vcvt.f32.s32 %v190
      %v192 = vcvt.f32.s32 %v186
      %v193 = vshll.u32 %v192, 16
      %v194 = vadd.s32 %v193, %v191
      %v195 = vrot.slane %v194, 4
      %vm196 = vcmp.lt.s32.totalorder %v194, %v195
      %v197 = vsel %vm196, %v194, %v195
      %v198 = vrot.slane %v197, 2
      %vm199 = vcmp.lt.s32.totalorder %v197, %v198
      %v200 = vsel %vm199, %v197, %v198
      %v201 = vrot.slane %v200, 1
      %vm202 = vcmp.lt.s32.totalorder %v200, %v201
      %v203 = vsel %vm202, %v200, %v201
      %s204 = vtos %v203
      %v205 = vstv %s204
      %vm206 = vcmp.gt.s32.totalorder %v155, %v205
      %vm207 = vmand %vm156, %vm206
      %v208 = vsel %vm207, %v155, 8
      %v209 = vsel %vm158, %v208, 2147483647
      %v210 = vand.u32 %v209, 65535
      %v211 = vshra.s32 %v209, 16
      %v212 = vcvt.s32.f32 %v210
      %v213 = vcvt.s32.f32 %v211
      %214 = vmin.xlane.f32.xlu0 %v213
      %v215 = vpop.xlane.xlu0 %214
      %vm216 = vcmp.eq.f32.partialorder %v213, %v215
      %v217 = vsel %vm216, %v212, inf
      %218 = vmin.xlane.f32.xlu0 %v217
      %v219 = vpop.xlane.xlu0 %218
      %v220 = vcvt.f32.s32 %v219
      %v221 = vcvt.f32.s32 %v215
      %v222 = vshll.u32 %v221, 16
      %v223 = vadd.s32 %v222, %v220
      %v224 = vrot.slane %v223, 4
      %vm225 = vcmp.lt.s32.totalorder %v223, %v224
      %v226 = vsel %vm225, %v223, %v224
      %v227 = vrot.slane %v226, 2
      %vm228 = vcmp.lt.s32.totalorder %v226, %v227
      %v229 = vsel %vm228, %v226, %v227
      %v230 = vrot.slane %v229, 1
      %vm231 = vcmp.lt.s32.totalorder %v229, %v230
      %v232 = vsel %vm231, %v229, %v230
      %s233 = vtos %v232
      %vm234 = vcmp.ge.s32.totalorder %v155, 1
      %vm235 = vcmp.lt.s32.totalorder %v155, %v205
      %vm236 = vmand %vm234, %vm235
      %v237 = vsel %vm236, 1, 0
      %v238 = vcvt.s32.f32 %v237
      %s239 = sadd.s32 %s204, 1
      %v240 = vstv %s239
      %vm241 = vcmp.ge.s32.totalorder %v155, %v240
      %v242 = vstv %s233
      %vm243 = vcmp.lt.s32.totalorder %v155, %v242
      %vm244 = vmand %vm241, %vm243
      %v245 = vsel %vm244, 1, 0
      %v246 = vcvt.s32.f32 %v245
      %v247 = vsel %vm158, %v238, 0.0
      %248 = vadd.xlane.f32.xlu0 %v247
      %v249 = vpop.xlane.xlu0 %248
      %v250 = vrot.slane %v249, 4
      %v251 = vadd.f32 %v249, %v250
      %v252 = vrot.slane %v251, 2
      %v253 = vadd.f32 %v251, %v252
      %v254 = vrot.slane %v253, 1
      %v255 = vadd.f32 %v253, %v254
      %s256 = vtos %v255
      %s257 = smax.f32 %s256, 1.0
      %v258 = vsel %vm158, %v246, 0.0
      %259 = vadd.xlane.f32.xlu0 %v258
      %v260 = vpop.xlane.xlu0 %259
      %v261 = vrot.slane %v260, 4
      %v262 = vadd.f32 %v260, %v261
      %v263 = vrot.slane %v262, 2
      %v264 = vadd.f32 %v262, %v263
      %v265 = vrot.slane %v264, 1
      %v266 = vadd.f32 %v264, %v265
      %s267 = vtos %v266
      %s268 = smax.f32 %s267, 1.0
      %vm269 = vcmask 64512
      %v271 = vsel %vm269, %v238, 0
      %273 = vmatprep.subr.mxu0 0.0
      %274 = vmatpush1.msra.mxu0 0.0
      %275 = vmatprep.subr.mxu0 0.0
      %276 = vmatpush1.msra.mxu0 0.0
      %277 = vmatprep.subr.mxu0 0.0
      %278 = vmatpush1.msra.mxu0 0.0
      %279 = vmatprep.subr.mxu0 0.0
      %280 = vmatpush1.msra.mxu0 0.0
      %281 = vmatprep.subr.mxu0 0.0
      %282 = vmatpush1.msra.mxu0 0.0
      %283 = vmatprep.subr.mxu0 0.0
      %284 = vmatpush1.msra.mxu0 0.0
      %285 = vmatprep.subr.mxu0 0.0
      %286 = vmatpush1.msra.mxu0 0.0
      %287 = vmatprep.subr.mxu0 0.0
      %288 = vmatpush1.msra.mxu0 0.0
      %289 = vmatprep.subr.mxu0 0.0
      %290 = vmatpush1.msra.mxu0 0.0
      %291 = vmatprep.subr.mxu0 0.0
      %292 = vmatpush1.msra.mxu0 0.0
      %293 = vmatprep.subr.mxu0 0.0
      %294 = vmatpush1.msra.mxu0 0.0
      %295 = vmatprep.subr.mxu0 0.0
      %296 = vmatpush1.msra.mxu0 0.0
      %297 = vmatprep.subr.mxu0 0.0
      %298 = vmatpush1.msra.mxu0 0.0
      %299 = vmatprep.subr.mxu0 0.0
      %300 = vmatpush1.msra.mxu0 0.0
      %301 = vmatprep.subr.mxu0 0.0
      %302 = vmatpush1.msra.mxu0 0.0
      %303 = vmatprep.subr.mxu0 0.0
      %304 = vmatpush1.msra.mxu0 %v153
      %305 = vmatprep.subr.mxu0 0.0
      %306 = vmatpush2.msra.mxu0 0.0
      %307 = vmatprep.subr.mxu0 0.0
      %308 = vmatpush2.msra.mxu0 0.0
      %309 = vmatprep.subr.mxu0 0.0
      %310 = vmatpush2.msra.mxu0 0.0
      %311 = vmatprep.subr.mxu0 0.0
      %312 = vmatpush2.msra.mxu0 0.0
      %313 = vmatprep.subr.mxu0 0.0
      %314 = vmatpush2.msra.mxu0 0.0
      %315 = vmatprep.subr.mxu0 0.0
      %316 = vmatpush2.msra.mxu0 0.0
      %317 = vmatprep.subr.mxu0 0.0
      %318 = vmatpush2.msra.mxu0 0.0
      %319 = vmatprep.subr.mxu0 0.0
      %320 = vmatpush2.msra.mxu0 0.0
      %321 = vmatprep.subr.mxu0 0.0
      %322 = vmatpush2.msra.mxu0 0.0
      %323 = vmatprep.subr.mxu0 0.0
      %324 = vmatpush2.msra.mxu0 0.0
      %325 = vmatprep.subr.mxu0 0.0
      %326 = vmatpush2.msra.mxu0 0.0
      %327 = vmatprep.subr.mxu0 0.0
      %328 = vmatpush2.msra.mxu0 0.0
      %329 = vmatprep.subr.mxu0 0.0
      %330 = vmatpush2.msra.mxu0 0.0
      %331 = vmatprep.subr.mxu0 0.0
      %332 = vmatpush2.msra.mxu0 0.0
      %333 = vmatprep.subr.mxu0 0.0
      %334 = vmatpush2.msra.mxu0 0.0
      %335 = vmatprep.subr.mxu0 0.0
      %336 = vmatpush2.msra.mxu0 0.0
      %337 = vmatprep.mubr.f32.mxu0 0.0
      %338 = vmatmul.mubr.f32.gmra.mxu0 %v271
      %v339 = vpop.f32.mrf.mxu0
      %v340 = vadd.f32 0.0, %v339
      %v341 = vpop.f32.mrf.mxu0
      %342 = vdwg.mxu0
      %v343 = vstv %s257
      %v344 = vrcp.pop %v343
      %v345 = vmul.f32 %v340, %v344
      %v347 = vsel %vm269, %v246, 0
      %349 = vmatprep.subr.mxu0 0.0
      %350 = vmatpush1.msra.mxu0 0.0
      %351 = vmatprep.subr.mxu0 0.0
      %352 = vmatpush1.msra.mxu0 0.0
      %353 = vmatprep.subr.mxu0 0.0
      %354 = vmatpush1.msra.mxu0 0.0
      %355 = vmatprep.subr.mxu0 0.0
      %356 = vmatpush1.msra.mxu0 0.0
      %357 = vmatprep.subr.mxu0 0.0
      %358 = vmatpush1.msra.mxu0 0.0
      %359 = vmatprep.subr.mxu0 0.0
      %360 = vmatpush1.msra.mxu0 0.0
      %361 = vmatprep.subr.mxu0 0.0
      %362 = vmatpush1.msra.mxu0 0.0
      %363 = vmatprep.subr.mxu0 0.0
      %364 = vmatpush1.msra.mxu0 0.0
      %365 = vmatprep.subr.mxu0 0.0
      %366 = vmatpush1.msra.mxu0 0.0
      %367 = vmatprep.subr.mxu0 0.0
      %368 = vmatpush1.msra.mxu0 0.0
      %369 = vmatprep.subr.mxu0 0.0
      %370 = vmatpush1.msra.mxu0 0.0
      %371 = vmatprep.subr.mxu0 0.0
      %372 = vmatpush1.msra.mxu0 0.0
      %373 = vmatprep.subr.mxu0 0.0
      %374 = vmatpush1.msra.mxu0 0.0
      %375 = vmatprep.subr.mxu0 0.0
      %376 = vmatpush1.msra.mxu0 0.0
      %377 = vmatprep.subr.mxu0 0.0
      %378 = vmatpush1.msra.mxu0 0.0
      %379 = vmatprep.subr.mxu0 0.0
      %380 = vmatpush1.msra.mxu0 %v153
      %381 = vmatprep.subr.mxu0 0.0
      %382 = vmatpush2.msra.mxu0 0.0
      %383 = vmatprep.subr.mxu0 0.0
      %384 = vmatpush2.msra.mxu0 0.0
      %385 = vmatprep.subr.mxu0 0.0
      %386 = vmatpush2.msra.mxu0 0.0
      %387 = vmatprep.subr.mxu0 0.0
      %388 = vmatpush2.msra.mxu0 0.0
      %389 = vmatprep.subr.mxu0 0.0
      %390 = vmatpush2.msra.mxu0 0.0
      %391 = vmatprep.subr.mxu0 0.0
      %392 = vmatpush2.msra.mxu0 0.0
      %393 = vmatprep.subr.mxu0 0.0
      %394 = vmatpush2.msra.mxu0 0.0
      %395 = vmatprep.subr.mxu0 0.0
      %396 = vmatpush2.msra.mxu0 0.0
      %397 = vmatprep.subr.mxu0 0.0
      %398 = vmatpush2.msra.mxu0 0.0
      %399 = vmatprep.subr.mxu0 0.0
      %400 = vmatpush2.msra.mxu0 0.0
      %401 = vmatprep.subr.mxu0 0.0
      %402 = vmatpush2.msra.mxu0 0.0
      %403 = vmatprep.subr.mxu0 0.0
      %404 = vmatpush2.msra.mxu0 0.0
      %405 = vmatprep.subr.mxu0 0.0
      %406 = vmatpush2.msra.mxu0 0.0
      %407 = vmatprep.subr.mxu0 0.0
      %408 = vmatpush2.msra.mxu0 0.0
      %409 = vmatprep.subr.mxu0 0.0
      %410 = vmatpush2.msra.mxu0 0.0
      %411 = vmatprep.subr.mxu0 0.0
      %412 = vmatpush2.msra.mxu0 0.0
      %413 = vmatprep.mubr.f32.mxu0 0.0
      %414 = vmatmul.mubr.f32.gmra.mxu0 %v347
      %v415 = vpop.f32.mrf.mxu0
      %v416 = vadd.f32 0.0, %v415
      %v417 = vpop.f32.mrf.mxu0
      %418 = vdwg.mxu0
      %v419 = vstv %s268
      %v420 = vrcp.pop %v419
      %v421 = vmul.f32 %v416, %v420
      %v422 = vsub.f32 %v345, %v421
      %v423 = vand.u32 2147483647, %v422
      %p424 = scmp.ge.s32.totalorder %s178, 2
      %s425 = scalar_select %p424, 1, 0
      %v426 = vstv %s425
      %vm427 = vcmp.eq.s32.totalorder %v426, 1
      %v428 = vsel %vm427, %v423, 0.0
      %v429 = vpack.c.bf16 %v428, %v428
      %vm430 = vcmask 253952
      %vm431 = vsmask.f32 256
      %vm432 = vmand %vm430, %vm431
      %v433 = vld [vmem:[%s150] sm:$0x1]
      %v434 = vsel %vm432, %v429, %v433
      %435 = vst [vmem:[%s150] sm:$0x1] %v434
      %p436 = scmp.lt.s32.totalorder %s13, 1
      %s437 = scalar_select %p436, %s13, 1
      %s438 = scalar_lea.vmem %s2, %s437
      // Predicated region
      $region29: #{bert_classifier_forward.32} parent=27 // pred_check
        %p439 = pneg %p83
      $region30: #{bert_classifier_forward.32} parent=27 // pred_check_branch
        %441 = sbr.rel (%p439) target = $region32
      $region31: #{bert_classifier_forward.32} parent=27 // pred_region
        _
      $region32: #{bert_classifier_forward.32} parent=27 // pred_fallthru
        _
    $region28: #{bert_classifier_forward.32} parent=5 // pred_fallthru
      _
    %p442 = scmp.le.s32.totalorder 2, %s8
    // Predicated region
    $region33: #{bert_classifier_forward.32} parent=5 // pred_check
      %p443 = pneg %p442
    $region34: #{bert_classifier_forward.32} parent=5 // pred_check_branch
      %445 = sbr.rel (%p443) target = $region36
    $region35: #{bert_classifier_forward.32} parent=5 // pred_region
      %s446 = ssub.s32 %s8, 2
      // Predicated region
      $region37: #{bert_classifier_forward.32} parent=35 // pred_check
        %p447 = pneg %p89
      $region38: #{bert_classifier_forward.32} parent=35 // pred_check_branch
        %449 = sbr.rel (%p447) target = $region40
      $region39: #{bert_classifier_forward.32} parent=35 // pred_region
        %p450 = scmp.lt.s32.totalorder %s14, 1
        %s451 = scalar_select %p450, %s14, 1
        %s452 = scalar_lea.vmem %s2, %s451
      $region40: #{bert_classifier_forward.32} parent=35 // pred_fallthru
        _
    $region36: #{bert_classifier_forward.32} parent=5 // pred_fallthru
      _
  $region6: #{bert_classifier_forward.32} parent=0 // loop_footer
    %s12 = sadd.s32 1, %s8
  $region7: #{bert_classifier_forward.32} parent=0 // loop_footer_branch
    %7 = sbr.rel target = $region3
  $region8: #{bert_classifier_forward.32} parent=0 // loop_exit
    _

// kernel: bert_classifier_forward.39
$region0: #{bert_classifier_forward.39}
  #allocation0 [shape = 'u32[]', space=smem, size = 0x4, offset = 0x4, fixed_abs, tag = 'smem constant byte address 0x4 - core index']
  #allocation1 [shape = 'u32[144,128]{1,0:T(1,128)}', space=vmem, size = 0x12000, scoped, tag = 'internal scratch']
  %s0 = inlined_call_operand.vmem [shape: bf16[2,128], index: 0, kind: input, shape index: {}]
  %s1 = inlined_call_operand.vmem [shape: bf16[128,32], index: 1, kind: input, shape index: {}]
  %s2 = inlined_call_operand.vmem [shape: f32[1,32], index: 2, kind: input, shape index: {}]
  %s3 = inlined_call_operand.vmem [shape: bf16[32,128], index: 3, kind: input, shape index: {}]
  %s4 = inlined_call_operand.vmem [shape: f32[1,128], index: 4, kind: input, shape index: {}]
  %s5 = inlined_call_operand.vmem [shape: bf16[128,128], index: 5, kind: input, shape index: {}]
  %s6 = inlined_call_operand.vmem [shape: f32[1,128], index: 6, kind: input, shape index: {}]
  %s7 = inlined_call_operand.vmem [shape: bf16[128,128], index: 7, kind: input, shape index: {}]
  %s8 = inlined_call_operand.vmem [shape: f32[1,128], index: 8, kind: input, shape index: {}]
  %s9 = inlined_call_operand.hbm [shape: f32[2,128], index: 9, kind: output, shape index: {}]
  %s10 = sld [smem:[#allocation0]]
  $region46: #{bert_classifier_forward.39} parent=0
    _
  %s12 = ssub.s32 1, %s10
  %s13 = scalar_select 0, %s12, %s10
  $region1: #{bert_classifier_forward.39} parent=0
    #allocation2 [shape = 'u8[1024]{0}', space=vmem, size = 0x400, scoped, tag = 'output window, operand 0, single buffered']
    #allocation3 [shape = 's32[1]{0}', space=sflag, size = 0x4, scoped, tag = 'scoped memory for bert_classifier_forward.39']
    %14 = vsyncpa [#allocation3], 0
    // Predicated region
    $region2: #{bert_classifier_forward.39} parent=1 // pred_check
      _
    $region3: #{bert_classifier_forward.39} parent=1 // pred_check_branch
      %16 = sbr.rel (0) target = $region5
    $region4: #{bert_classifier_forward.39} parent=1 // pred_region
      _
    $region5: #{bert_classifier_forward.39} parent=1 // pred_fallthru
      _
    // Predicated region
    $region6: #{bert_classifier_forward.39} parent=1 // pred_check
      _
    $region7: #{bert_classifier_forward.39} parent=1 // pred_check_branch
      %18 = sbr.rel (0) target = $region9
    $region8: #{bert_classifier_forward.39} parent=1 // pred_region
      _
    $region9: #{bert_classifier_forward.39} parent=1 // pred_fallthru
      _
    // Predicated region
    $region10: #{bert_classifier_forward.39} parent=1 // pred_check
      _
    $region11: #{bert_classifier_forward.39} parent=1 // pred_check_branch
      %20 = sbr.rel (0) target = $region13
    $region12: #{bert_classifier_forward.39} parent=1 // pred_region
      _
    $region13: #{bert_classifier_forward.39} parent=1 // pred_fallthru
      _
    // Predicated region
    $region14: #{bert_classifier_forward.39} parent=1 // pred_check
      _
    $region15: #{bert_classifier_forward.39} parent=1 // pred_check_branch
      %22 = sbr.rel (0) target = $region17
    $region16: #{bert_classifier_forward.39} parent=1 // pred_region
      _
    $region17: #{bert_classifier_forward.39} parent=1 // pred_fallthru
      _
    // Predicated region
    $region18: #{bert_classifier_forward.39} parent=1 // pred_check
      _
    $region19: #{bert_classifier_forward.39} parent=1 // pred_check_branch
      %24 = sbr.rel (0) target = $region21
    $region20: #{bert_classifier_forward.39} parent=1 // pred_region
      _
    $region21: #{bert_classifier_forward.39} parent=1 // pred_fallthru
      _
    // Predicated region
    $region22: #{bert_classifier_forward.39} parent=1 // pred_check
      _
    $region23: #{bert_classifier_forward.39} parent=1 // pred_check_branch
      %26 = sbr.rel (0) target = $region25
    $region24: #{bert_classifier_forward.39} parent=1 // pred_region
      _
    $region25: #{bert_classifier_forward.39} parent=1 // pred_fallthru
      _
    // Predicated region
    $region26: #{bert_classifier_forward.39} parent=1 // pred_check
      _
    $region27: #{bert_classifier_forward.39} parent=1 // pred_check_branch
      %28 = sbr.rel (0) target = $region29
    $region28: #{bert_classifier_forward.39} parent=1 // pred_region
      _
    $region29: #{bert_classifier_forward.39} parent=1 // pred_fallthru
      _
    // Predicated region
    $region30: #{bert_classifier_forward.39} parent=1 // pred_check
      _
    $region31: #{bert_classifier_forward.39} parent=1 // pred_check_branch
      %30 = sbr.rel (0) target = $region33
    $region32: #{bert_classifier_forward.39} parent=1 // pred_region
      _
    $region33: #{bert_classifier_forward.39} parent=1 // pred_fallthru
      _
    // Predicated region
    $region34: #{bert_classifier_forward.39} parent=1 // pred_check
      _
    $region35: #{bert_classifier_forward.39} parent=1 // pred_check_branch
      %32 = sbr.rel (0) target = $region37
    $region36: #{bert_classifier_forward.39} parent=1 // pred_region
      _
    $region37: #{bert_classifier_forward.39} parent=1 // pred_fallthru
      _
    %v34 = vld [vmem:[%s0] sm:$0x1]
    %v35 = vld [vmem:[%s1] sm:$0xf]
    %v36 = vld [vmem:[%s1 + $0x4] sm:$0xf]
    %v37 = vld [vmem:[%s1 + $0x8] sm:$0xf]
    %v38 = vld [vmem:[%s1 + $0xc] sm:$0xf]
    %v39 = vld [vmem:[%s1 + $0x10] sm:$0xf]
    %v40 = vld [vmem:[%s1 + $0x14] sm:$0xf]
    %v41 = vld [vmem:[%s1 + $0x18] sm:$0xf]
    %v42 = vld [vmem:[%s1 + $0x1c] sm:$0xf]
    %v43 = vld [vmem:[%s1 + $0x20] sm:$0xf]
    %v44 = vld [vmem:[%s1 + $0x24] sm:$0xf]
    %v45 = vld [vmem:[%s1 + $0x28] sm:$0xf]
    %v46 = vld [vmem:[%s1 + $0x2c] sm:$0xf]
    %v47 = vld [vmem:[%s1 + $0x30] sm:$0xf]
    %v48 = vld [vmem:[%s1 + $0x34] sm:$0xf]
    %v49 = vld [vmem:[%s1 + $0x38] sm:$0xf]
    %v50 = vld [vmem:[%s1 + $0x3c] sm:$0xf]
    %v51 = vld [vmem:[%s2] sm:$0x1]
    %v53 = vlaneseq
    %v54 = vshrl.u32 %v53, 7
    %v55 = vsub.s32 0, %v54
    %v56 = vrot.slane %v51, %v55
    %v74 = vunpack.c.l.b16 %v35
    %v75 = vunpack.c.l.b16 %v36
    %v76 = vunpack.c.l.b16 %v37
    %v77 = vunpack.c.l.b16 %v38
    %v78 = vunpack.c.l.b16 %v39
    %v79 = vunpack.c.l.b16 %v40
    %v80 = vunpack.c.l.b16 %v41
    %v81 = vunpack.c.l.b16 %v42
    %v82 = vunpack.c.l.b16 %v43
    %v83 = vunpack.c.l.b16 %v44
    %v84 = vunpack.c.l.b16 %v45
    %v85 = vunpack.c.l.b16 %v46
    %v86 = vunpack.c.l.b16 %v47
    %v87 = vunpack.c.l.b16 %v48
    %v88 = vunpack.c.l.b16 %v49
    %v89 = vunpack.c.l.b16 %v50
    %v90 = vpack.c.b16 %v75, %v74
    %v91 = vpack.c.b16 %v77, %v76
    %v92 = vpack.c.b16 %v79, %v78
    %v93 = vpack.c.b16 %v81, %v80
    %v94 = vpack.c.b16 %v83, %v82
    %v95 = vpack.c.b16 %v85, %v84
    %v96 = vpack.c.b16 %v87, %v86
    %v97 = vpack.c.b16 %v89, %v88
    %106 = vmatprep.subr.bf16.mxu0 0
    %107 = vmatpush1.bf16.msra.mxu0 %v97
    %108 = vmatprep.subr.bf16.mxu0 0
    %109 = vmatpush1.bf16.msra.mxu0 %v96
    %110 = vmatprep.subr.bf16.mxu0 0
    %111 = vmatpush1.bf16.msra.mxu0 %v95
    %112 = vmatprep.subr.bf16.mxu0 0
    %113 = vmatpush1.bf16.msra.mxu0 %v94
    %114 = vmatprep.subr.bf16.mxu0 0
    %115 = vmatpush1.bf16.msra.mxu0 %v93
    %116 = vmatprep.subr.bf16.mxu0 0
    %117 = vmatpush1.bf16.msra.mxu0 %v92
    %118 = vmatprep.subr.bf16.mxu0 0
    %119 = vmatpush1.bf16.msra.mxu0 %v91
    %120 = vmatprep.subr.bf16.mxu0 0
    %121 = vmatpush1.bf16.msra.mxu0 %v90
    %122 = vmatprep.subr.bf16.mxu0 0
    %123 = vmatpush2.bf16.msra.mxu0 0
    %124 = vmatprep.subr.bf16.mxu0 0
    %125 = vmatpush2.bf16.msra.mxu0 0
    %126 = vmatprep.subr.bf16.mxu0 0
    %127 = vmatpush2.bf16.msra.mxu0 0
    %128 = vmatprep.subr.bf16.mxu0 0
    %129 = vmatpush2.bf16.msra.mxu0 0
    %130 = vmatprep.subr.bf16.mxu0 0
    %131 = vmatpush2.bf16.msra.mxu0 0
    %132 = vmatprep.subr.bf16.mxu0 0
    %133 = vmatpush2.bf16.msra.mxu0 0
    %134 = vmatprep.subr.bf16.mxu0 0
    %135 = vmatpush2.bf16.msra.mxu0 0
    %136 = vmatprep.subr.bf16.mxu0 0
    %137 = vmatpush2.bf16.msra.mxu0 0
    %138 = vmatprep.mubr.bf16.mxu0 0
    %139 = vmatmul.mubr.bf16.gmra.mxu0 %v34
    %v140 = vpop.f32.mrf.mxu0
    %v141 = vadd.f32 %v56, %v140
    %v142 = vpop.f32.mrf.mxu0
    %v143 = vpop.f32.mrf.mxu0
    %v144 = vpop.f32.mrf.mxu0
    %145 = vdwg.mxu0
    %v146 = vmax.f32 %v141, 0.0
    %v147 = vtanh.pop %v146
    %v148 = vld [vmem:[%s3] sm:$0xf]
    %v149 = vld [vmem:[%s3 + $0x4] sm:$0xf]
    %v150 = vld [vmem:[%s3 + $0x8] sm:$0xf]
    %v151 = vld [vmem:[%s3 + $0xc] sm:$0xf]
    %v152 = vpack.c.bf16 %v147, %v147
    %v153 = vld [vmem:[%s4] sm:$0x1]
    %v155 = vlaneseq
    %v156 = vshrl.u32 %v155, 7
    %v157 = vsub.s32 0, %v156
    %v158 = vrot.slane %v153, %v157
    %v164 = vunpack.c.l.b16 %v148
    %v165 = vunpack.c.l.b16 %v149
    %v166 = vunpack.c.l.b16 %v150
    %v167 = vunpack.c.l.b16 %v151
    %v168 = vpack.c.b16 %v165, %v164
    %v169 = vpack.c.b16 %v167, %v166
    %vm172 = vcmask 261120
    %v174 = vsel %vm172, %v152, 0
    %176 = vmatprep.subr.bf16.mxu0 0
    %177 = vmatpush1.bf16.msra.mxu0 0
    %178 = vmatprep.subr.bf16.mxu0 0
    %179 = vmatpush1.bf16.msra.mxu0 0
    %180 = vmatprep.subr.bf16.mxu0 0
    %181 = vmatpush1.bf16.msra.mxu0 0
    %182 = vmatprep.subr.bf16.mxu0 0
    %183 = vmatpush1.bf16.msra.mxu0 0
    %184 = vmatprep.subr.bf16.mxu0 0
    %185 = vmatpush1.bf16.msra.mxu0 0
    %186 = vmatprep.subr.bf16.mxu0 0
    %187 = vmatpush1.bf16.msra.mxu0 0
    %188 = vmatprep.subr.bf16.mxu0 0
    %189 = vmatpush1.bf16.msra.mxu0 %v169
    %190 = vmatprep.subr.bf16.mxu0 0
    %191 = vmatpush1.bf16.msra.mxu0 %v168
    %192 = vmatprep.subr.bf16.mxu0 0
    %193 = vmatpush2.bf16.msra.mxu0 0
    %194 = vmatprep.subr.bf16.mxu0 0
    %195 = vmatpush2.bf16.msra.mxu0 0
    %196 = vmatprep.subr.bf16.mxu0 0
    %197 = vmatpush2.bf16.msra.mxu0 0
    %198 = vmatprep.subr.bf16.mxu0 0
    %199 = vmatpush2.bf16.msra.mxu0 0
    %200 = vmatprep.subr.bf16.mxu0 0
    %201 = vmatpush2.bf16.msra.mxu0 0
    %202 = vmatprep.subr.bf16.mxu0 0
    %203 = vmatpush2.bf16.msra.mxu0 0
    %204 = vmatprep.subr.bf16.mxu0 0
    %205 = vmatpush2.bf16.msra.mxu0 0
    %206 = vmatprep.subr.bf16.mxu0 0
    %207 = vmatpush2.bf16.msra.mxu0 0
    %208 = vmatprep.mubr.bf16.mxu0 0
    %209 = vmatmul.mubr.bf16.gmra.mxu0 %v174
    %v210 = vpop.f32.mrf.mxu0
    %v211 = vadd.f32 %v158, %v210
    %v212 = vpop.f32.mrf.mxu0
    %v213 = vpop.f32.mrf.mxu0
    %v214 = vpop.f32.mrf.mxu0
    %215 = vdwg.mxu0
    %v216 = vmax.f32 %v211, 0.0
    %v217 = vld [vmem:[%s5] sm:$0xf]
    %v218 = vld [vmem:[%s5 + $0x4] sm:$0xf]
    %v219 = vld [vmem:[%s5 + $0x8] sm:$0xf]
    %v220 = vld [vmem:[%s5 + $0xc] sm:$0xf]
    %v221 = vld [vmem:[%s5 + $0x10] sm:$0xf]
    %v222 = vld [vmem:[%s5 + $0x14] sm:$0xf]
    %v223 = vld [vmem:[%s5 + $0x18] sm:$0xf]
    %v224 = vld [vmem:[%s5 + $0x1c] sm:$0xf]
    %v225 = vld [vmem:[%s5 + $0x20] sm:$0xf]
    %v226 = vld [vmem:[%s5 + $0x24] sm:$0xf]
    %v227 = vld [vmem:[%s5 + $0x28] sm:$0xf]
    %v228 = vld [vmem:[%s5 + $0x2c] sm:$0xf]
    %v229 = vld [vmem:[%s5 + $0x30] sm:$0xf]
    %v230 = vld [vmem:[%s5 + $0x34] sm:$0xf]
    %v231 = vld [vmem:[%s5 + $0x38] sm:$0xf]
    %v232 = vld [vmem:[%s5 + $0x3c] sm:$0xf]
    %v233 = vpack.c.bf16 %v216, %v216
    %v234 = vld [vmem:[%s6] sm:$0x1]
    %v236 = vlaneseq
    %v237 = vshrl.u32 %v236, 7
    %v238 = vsub.s32 0, %v237
    %v239 = vrot.slane %v234, %v238
    %v257 = vunpack.c.l.b16 %v217
    %v258 = vunpack.c.l.b16 %v218
    %v259 = vunpack.c.l.b16 %v219
    %v260 = vunpack.c.l.b16 %v220
    %v261 = vunpack.c.l.b16 %v221
    %v262 = vunpack.c.l.b16 %v222
    %v263 = vunpack.c.l.b16 %v223
    %v264 = vunpack.c.l.b16 %v224
    %v265 = vunpack.c.l.b16 %v225
    %v266 = vunpack.c.l.b16 %v226
    %v267 = vunpack.c.l.b16 %v227
    %v268 = vunpack.c.l.b16 %v228
    %v269 = vunpack.c.l.b16 %v229
    %v270 = vunpack.c.l.b16 %v230
    %v271 = vunpack.c.l.b16 %v231
    %v272 = vunpack.c.l.b16 %v232
    %v273 = vpack.c.b16 %v258, %v257
    %v274 = vpack.c.b16 %v260, %v259
    %v275 = vpack.c.b16 %v262, %v261
    %v276 = vpack.c.b16 %v264, %v263
    %v277 = vpack.c.b16 %v266, %v265
    %v278 = vpack.c.b16 %v268, %v267
    %v279 = vpack.c.b16 %v270, %v269
    %v280 = vpack.c.b16 %v272, %v271
    %289 = vmatprep.subr.bf16.mxu0 0
    %290 = vmatpush1.bf16.msra.mxu0 %v280
    %291 = vmatprep.subr.bf16.mxu0 0
    %292 = vmatpush1.bf16.msra.mxu0 %v279
    %293 = vmatprep.subr.bf16.mxu0 0
    %294 = vmatpush1.bf16.msra.mxu0 %v278
    %295 = vmatprep.subr.bf16.mxu0 0
    %296 = vmatpush1.bf16.msra.mxu0 %v277
    %297 = vmatprep.subr.bf16.mxu0 0
    %298 = vmatpush1.bf16.msra.mxu0 %v276
    %299 = vmatprep.subr.bf16.mxu0 0
    %300 = vmatpush1.bf16.msra.mxu0 %v275
    %301 = vmatprep.subr.bf16.mxu0 0
    %302 = vmatpush1.bf16.msra.mxu0 %v274
    %303 = vmatprep.subr.bf16.mxu0 0
    %304 = vmatpush1.bf16.msra.mxu0 %v273
    %305 = vmatprep.subr.bf16.mxu0 0
    %306 = vmatpush2.bf16.msra.mxu0 0
    %307 = vmatprep.subr.bf16.mxu0 0
    %308 = vmatpush2.bf16.msra.mxu0 0
    %309 = vmatprep.subr.bf16.mxu0 0
    %310 = vmatpush2.bf16.msra.mxu0 0
    %311 = vmatprep.subr.bf16.mxu0 0
    %312 = vmatpush2.bf16.msra.mxu0 0
    %313 = vmatprep.subr.bf16.mxu0 0
    %314 = vmatpush2.bf16.msra.mxu0 0
    %315 = vmatprep.subr.bf16.mxu0 0
    %316 = vmatpush2.bf16.msra.mxu0 0
    %317 = vmatprep.subr.bf16.mxu0 0
    %318 = vmatpush2.bf16.msra.mxu0 0
    %319 = vmatprep.subr.bf16.mxu0 0
    %320 = vmatpush2.bf16.msra.mxu0 0
    %321 = vmatprep.mubr.bf16.mxu0 0
    %322 = vmatmul.mubr.bf16.gmra.mxu0 %v233
    %v323 = vpop.f32.mrf.mxu0
    %v324 = vadd.f32 %v239, %v323
    %v325 = vpop.f32.mrf.mxu0
    %v326 = vpop.f32.mrf.mxu0
    %v327 = vpop.f32.mrf.mxu0
    %328 = vdwg.mxu0
    %v329 = vmax.f32 %v324, 0.0
    %v330 = vld [vmem:[%s7] sm:$0xf]
    %v331 = vld [vmem:[%s7 + $0x4] sm:$0xf]
    %v332 = vld [vmem:[%s7 + $0x8] sm:$0xf]
    %v333 = vld [vmem:[%s7 + $0xc] sm:$0xf]
    %v334 = vld [vmem:[%s7 + $0x10] sm:$0xf]
    %v335 = vld [vmem:[%s7 + $0x14] sm:$0xf]
    %v336 = vld [vmem:[%s7 + $0x18] sm:$0xf]
    %v337 = vld [vmem:[%s7 + $0x1c] sm:$0xf]
    %v338 = vld [vmem:[%s7 + $0x20] sm:$0xf]
    %v339 = vld [vmem:[%s7 + $0x24] sm:$0xf]
    %v340 = vld [vmem:[%s7 + $0x28] sm:$0xf]
    %v341 = vld [vmem:[%s7 + $0x2c] sm:$0xf]
    %v342 = vld [vmem:[%s7 + $0x30] sm:$0xf]
    %v343 = vld [vmem:[%s7 + $0x34] sm:$0xf]
    %v344 = vld [vmem:[%s7 + $0x38] sm:$0xf]
    %v345 = vld [vmem:[%s7 + $0x3c] sm:$0xf]
    %v346 = vpack.c.bf16 %v329, %v329
    %v347 = vld [vmem:[%s8] sm:$0x1]
    %v349 = vlaneseq
    %v350 = vshrl.u32 %v349, 7
    %v351 = vsub.s32 0, %v350
    %v352 = vrot.slane %v347, %v351
    %v370 = vunpack.c.l.b16 %v330
    %v371 = vunpack.c.l.b16 %v331
    %v372 = vunpack.c.l.b16 %v332
    %v373 = vunpack.c.l.b16 %v333
    %v374 = vunpack.c.l.b16 %v334
    %v375 = vunpack.c.l.b16 %v335
    %v376 = vunpack.c.l.b16 %v336
    %v377 = vunpack.c.l.b16 %v337
    %v378 = vunpack.c.l.b16 %v338
    %v379 = vunpack.c.l.b16 %v339
    %v380 = vunpack.c.l.b16 %v340
    %v381 = vunpack.c.l.b16 %v341
    %v382 = vunpack.c.l.b16 %v342
    %v383 = vunpack.c.l.b16 %v343
    %v384 = vunpack.c.l.b16 %v344
    %v385 = vunpack.c.l.b16 %v345
    %v386 = vpack.c.b16 %v371, %v370
    %v387 = vpack.c.b16 %v373, %v372
    %v388 = vpack.c.b16 %v375, %v374
    %v389 = vpack.c.b16 %v377, %v376
    %v390 = vpack.c.b16 %v379, %v378
    %v391 = vpack.c.b16 %v381, %v380
    %v392 = vpack.c.b16 %v383, %v382
    %v393 = vpack.c.b16 %v385, %v384
    %402 = vmatprep.subr.bf16.mxu0 0
    %403 = vmatpush1.bf16.msra.mxu0 %v393
    %404 = vmatprep.subr.bf16.mxu0 0
    %405 = vmatpush1.bf16.msra.mxu0 %v392
    %406 = vmatprep.subr.bf16.mxu0 0
    %407 = vmatpush1.bf16.msra.mxu0 %v391
    %408 = vmatprep.subr.bf16.mxu0 0
    %409 = vmatpush1.bf16.msra.mxu0 %v390
    %410 = vmatprep.subr.bf16.mxu0 0
    %411 = vmatpush1.bf16.msra.mxu0 %v389
    %412 = vmatprep.subr.bf16.mxu0 0
    %413 = vmatpush1.bf16.msra.mxu0 %v388
    %414 = vmatprep.subr.bf16.mxu0 0
    %415 = vmatpush1.bf16.msra.mxu0 %v387
    %416 = vmatprep.subr.bf16.mxu0 0
    %417 = vmatpush1.bf16.msra.mxu0 %v386
    %418 = vmatprep.subr.bf16.mxu0 0
    %419 = vmatpush2.bf16.msra.mxu0 0
    %420 = vmatprep.subr.bf16.mxu0 0
    %421 = vmatpush2.bf16.msra.mxu0 0
    %422 = vmatprep.subr.bf16.mxu0 0
    %423 = vmatpush2.bf16.msra.mxu0 0
    %424 = vmatprep.subr.bf16.mxu0 0
    %425 = vmatpush2.bf16.msra.mxu0 0
    %426 = vmatprep.subr.bf16.mxu0 0
    %427 = vmatpush2.bf16.msra.mxu0 0
    %428 = vmatprep.subr.bf16.mxu0 0
    %429 = vmatpush2.bf16.msra.mxu0 0
    %430 = vmatprep.subr.bf16.mxu0 0
    %431 = vmatpush2.bf16.msra.mxu0 0
    %432 = vmatprep.subr.bf16.mxu0 0
    %433 = vmatpush2.bf16.msra.mxu0 0
    %434 = vmatprep.mubr.bf16.mxu0 0
    %435 = vmatmul.mubr.bf16.gmra.mxu0 %v346
    %v436 = vpop.f32.mrf.mxu0
    %v437 = vadd.f32 %v352, %v436
    %v438 = vpop.f32.mrf.mxu0
    %v439 = vpop.f32.mrf.mxu0
    %v440 = vpop.f32.mrf.mxu0
    %441 = vdwg.mxu0
    %442 = vst [vmem:[#allocation2] sm:$0x3] %v437
    // Predicated region
    $region38: #{bert_classifier_forward.39} parent=1 // pred_check
      _
    $region39: #{bert_classifier_forward.39} parent=1 // pred_check_branch
      %444 = sbr.rel (0) target = $region41
    $region40: #{bert_classifier_forward.39} parent=1 // pred_region
      %s446 = ssub.s32 32, 32
      %447 = vsyncadd [#allocation3], %s446
      %s449 = sshll.u32 [#allocation2], 4
      %s450 = int_to_ptr.vmem [resolvable:$true] %s449
      %452 = dma.vmem_to_hbm [thread:$0]  %s450, 32, %s9, [#allocation3]
    $region41: #{bert_classifier_forward.39} parent=1 // pred_fallthru
      _
    // Predicated region
    $region42: #{bert_classifier_forward.39} parent=1 // pred_check
      _
    $region43: #{bert_classifier_forward.39} parent=1 // pred_check_branch
      %454 = sbr.rel (0) target = $region45
    $region44: #{bert_classifier_forward.39} parent=1 // pred_region
      %455 = dma.done [#allocation3], 32
    $region45: #{bert_classifier_forward.39} parent=1 // pred_fallthru
      _
    %456 = vsyncpa [#allocation3], 1

</llo_original>
